<compile_context>
chip_gen: v7x
topology: tpu7x:2x2x1
jax: 0.10.0
libtpu: 0.0.40
codegen_flags: <defaults>
</compile_context>

<pallas_src>
import functools

import jax
import jax.numpy as jnp
from jax.experimental import pallas as pl
from jax.experimental.pallas import tpu as pltpu

EPS = 1e-5            # BatchNorm2d default eps
LANE = 128            # TPU lane width -> channel padding target

# MXU operand dtype: bf16 gives 2-4x matmul throughput (largest win on v5e)
# and halves weight DMA; accumulation stays f32.
_MXU_DTYPE = jnp.bfloat16
# Halo scratch kept f32: the tap slices start at sublane offsets 0/1/2, and the
# f32 strided-slice + reshape path is the proven-good lowering; taps are cast
# to bf16 right before the dot so the MXU still runs bf16.
_SCRATCH_DTYPE = jnp.float32

# 32 MiB is safe on every generation (v7x scoped budget).  On v5e/v6e raise to
# 64-96 MiB and grow per-step blocks (multiple samples / bigger row strips).
_COMPILER_PARAMS = pltpu.CompilerParams(
    dimension_semantics=("parallel",),          # batch axis -> both TCs on v7x
    vmem_limit_bytes=32 * 1024 * 1024,
)


# ---------------------------------------------------------------------------
# In-kernel helpers
# ---------------------------------------------------------------------------
def _zero_halo_border(pad_ref, H, W):
    """Zero only the 1-px halo border (top/bottom rows + left/right columns).
    Columns beyond W+1 (sublane padding) are never read, so they stay stale.
    Done every grid step (NOT gated on program_id) so megacore splits are safe."""
    Wp, C = pad_ref.shape[1], pad_ref.shape[2]
    zrow = jnp.zeros((1, Wp, C), pad_ref.dtype)
    zcol = jnp.zeros((H + 2, 1, C), pad_ref.dtype)
    pad_ref[0:1, :, :] = zrow
    pad_ref[H + 1:H + 2, :, :] = zrow
    pad_ref[:, 0:1, :] = zcol
    pad_ref[:, W + 1:W + 2, :] = zcol


def _halo_conv_dot(pad_ref, w_ref, H, W):
    """pad_ref: (H+2, Wp, C) halo-padded plane; w_ref: (9*C, Cout) packed bf16.
    Accumulates 9 lane-aligned MXU dots (f32 accumulation) instead of
    materializing an (H*W, 9*C) im2col patch."""
    C = pad_ref.shape[-1]
    acc = None
    for kh in range(3):
        for kw in range(3):
            k = kh * 3 + kw
            tap = pad_ref[kh:kh + H, kw:kw + W, :].reshape(H * W, C)
            d = jnp.dot(tap.astype(_MXU_DTYPE), w_ref[k * C:(k + 1) * C, :],
                        preferred_element_type=jnp.float32)
            acc = d if acc is None else acc + d
    return acc


def _write_conv_and_stats(acc, conv_ref, stats_ref):
    """acc: (H*W, Cout) f32.  Store raw conv output + per-sample sum / sumsq
    (f32), so BN never re-reads the conv output from HBM."""
    conv_ref[0] = acc
    stats_ref[0, 0:1, :] = jnp.sum(acc, axis=0, keepdims=True)
    stats_ref[0, 1:2, :] = jnp.sum(acc * acc, axis=0, keepdims=True)


# ---------------------------------------------------------------------------
# Kernel 1a: compact-K conv1 (single K=128 im2col matmul) + BN partial stats
#            (used when 9*Cin <= 128; patch is built lane-dense in the wrapper)
# ---------------------------------------------------------------------------
def _matmul_stats_kernel(p_ref, w_ref, conv_ref, stats_ref):
    acc = jnp.dot(p_ref[0], w_ref[...], preferred_element_type=jnp.float32)
    _write_conv_and_stats(acc, conv_ref, stats_ref)


# ---------------------------------------------------------------------------
# Kernel 1b: general conv1 (halo scratch + 9 accumulated dots) + BN stats
# ---------------------------------------------------------------------------
def _conv_stats_kernel(x_ref, w_ref, conv_ref, stats_ref, pad_ref, *, H, W):
    _zero_halo_border(pad_ref, H, W)
    pad_ref[1:H + 1, 1:W + 1, :] = x_ref[0].astype(pad_ref.dtype)
    acc = _halo_conv_dot(pad_ref, w_ref, H, W)
    _write_conv_and_stats(acc, conv_ref, stats_ref)


# ---------------------------------------------------------------------------
# Kernel 2: fused BN1 affine + ReLU + Dropout2d (folded into per-(N,C)
#           scale/shift) + conv2 (9 accumulated dots) + BN2 partial stats
# ---------------------------------------------------------------------------
def _bn_act_conv_stats_kernel(a_ref, sc_ref, sh_ref, w_ref,
                              conv_ref, stats_ref, pad_ref, *, H, W):
    C = a_ref.shape[-1]
    # one fused multiply-add + ReLU pass; dropout factor is already in sc/sh
    y = jnp.maximum(a_ref[0] * sc_ref[0] + sh_ref[0], 0.0)       # (H*W, C)
    _zero_halo_border(pad_ref, H, W)
    pad_ref[1:H + 1, 1:W + 1, :] = y.reshape(H, W, C).astype(pad_ref.dtype)
    acc = _halo_conv_dot(pad_ref, w_ref, H, W)
    _write_conv_and_stats(acc, conv_ref, stats_ref)


# ---------------------------------------------------------------------------
# pallas_call wrappers (grid over batch, BlockSpec double-buffered DMA)
# ---------------------------------------------------------------------------
def _round_up(x, m):
    return (x + m - 1) // m * m


def _matmul_stats_layer(patch, w2d):
    N, rows, k1 = patch.shape
    cpo = w2d.shape[-1]
    return pl.pallas_call(
        _matmul_stats_kernel,
        grid=(N,),
        in_specs=[
            pl.BlockSpec((1, rows, k1), lambda n: (n, 0, 0)),
            # v7x: could add pipeline_mode=pl.Buffered(1) (constant block index)
            # to drop the second weight buffer.
            pl.BlockSpec((k1, cpo), lambda n: (0, 0)),
        ],
        out_specs=(
            pl.BlockSpec((1, rows, cpo), lambda n: (n, 0, 0)),
            pl.BlockSpec((1, 2, cpo), lambda n: (n, 0, 0)),
        ),
        # v5e: storing the conv intermediate as bf16 would halve HBM traffic.
        out_shape=(
            jax.ShapeDtypeStruct((N, rows, cpo), jnp.float32),
            jax.ShapeDtypeStruct((N, 2, cpo), jnp.float32),
        ),
        compiler_params=_COMPILER_PARAMS,
    )(patch, w2d)


def _conv_layer(x_padc, w2d, H, W):
    N, _, _, cpi = x_padc.shape
    cpo = w2d.shape[-1]
    wp = _round_up(W + 2, 8)                         # 8-aligned sublane dim
    kern = functools.partial(_conv_stats_kernel, H=H, W=W)
    return pl.pallas_call(
        kern,
        grid=(N,),
        in_specs=[
            pl.BlockSpec((1, H, W, cpi), lambda n: (n, 0, 0, 0)),
            pl.BlockSpec((9 * cpi, cpo), lambda n: (0, 0)),
        ],
        out_specs=(
            pl.BlockSpec((1, H * W, cpo), lambda n: (n, 0, 0)),
            pl.BlockSpec((1, 2, cpo), lambda n: (n, 0, 0)),
        ),
        out_shape=(
            jax.ShapeDtypeStruct((N, H * W, cpo), jnp.float32),
            jax.ShapeDtypeStruct((N, 2, cpo), jnp.float32),
        ),
        scratch_shapes=[pltpu.VMEM((H + 2, wp, cpi), _SCRATCH_DTYPE)],
        compiler_params=_COMPILER_PARAMS,
    )(x_padc, w2d)


def _bn_act_conv_layer(a_flat, eff_scale, eff_shift, w2d, H, W):
    N, rows, cpi = a_flat.shape
    cpo = w2d.shape[-1]
    wp = _round_up(W + 2, 8)                         # 8-aligned sublane dim
    kern = functools.partial(_bn_act_conv_stats_kernel, H=H, W=W)
    return pl.pallas_call(
        kern,
        grid=(N,),
        in_specs=[
            pl.BlockSpec((1, rows, cpi), lambda n: (n, 0, 0)),
            pl.BlockSpec((1, 1, cpi), lambda n: (n, 0, 0)),
            pl.BlockSpec((1, 1, cpi), lambda n: (n, 0, 0)),
            # v7x: could add pipeline_mode=pl.Buffered(1) here as well.
            pl.BlockSpec((9 * cpi, cpo), lambda n: (0, 0)),
        ],
        out_specs=(
            pl.BlockSpec((1, rows, cpo), lambda n: (n, 0, 0)),
            pl.BlockSpec((1, 2, cpo), lambda n: (n, 0, 0)),
        ),
        out_shape=(
            jax.ShapeDtypeStruct((N, rows, cpo), jnp.float32),
            jax.ShapeDtypeStruct((N, 2, cpo), jnp.float32),
        ),
        scratch_shapes=[pltpu.VMEM((H + 2, wp, cpi), _SCRATCH_DTYPE)],
        compiler_params=_COMPILER_PARAMS,
    )(a_flat, eff_scale, eff_shift, w2d)


# ---------------------------------------------------------------------------
# Glue: padding, BN scale/shift from (sum, sumsq), spectral norm, params
# ---------------------------------------------------------------------------
def _pad_last(x, target):
    c = x.shape[-1]
    if c == target:
        return x
    pad = [(0, 0)] * (x.ndim - 1) + [(0, target - c)]
    return jnp.pad(x, pad)


def _bn_scale_shift(stats, gamma, beta, count):
    """stats: (N, 2, Cpad) per-sample (sum, sumsq) in f32.  Returns fused
    per-channel scale/shift so BN is a single multiply-add downstream (biased
    variance, as PyTorch uses for normalization).  E[x^2]-E[x]^2 is fine here
    because the sums are f32 and the activations are O(1)."""
    s = jnp.sum(stats[:, 0, :], axis=0)
    ss = jnp.sum(stats[:, 1, :], axis=0)
    mean = s / count
    var = jnp.maximum(ss / count - mean * mean, 0.0)
    scale = gamma * jax.lax.rsqrt(var + EPS)
    shift = beta - mean * scale
    return scale, shift


def _spectral_normalize(w_oihw, iters=30):
    # PyTorch does one power iteration per forward with persistent u, v; a
    # converged power iteration at init gives the same sigma in the limit.
    m = w_oihw.reshape(w_oihw.shape[0], -1)
    v = jnp.ones((m.shape[1],), jnp.float32)
    v = v / jnp.linalg.norm(v)
    u = m @ v
    for _ in range(iters):
        u = m @ v
        u = u / (jnp.linalg.norm(u) + 1e-12)
        v = m.T @ u
        v = v / (jnp.linalg.norm(v) + 1e-12)
    sigma = u @ (m @ v)
    return w_oihw / sigma


def init_params(key, in_channels, out_channels):
    """Returns (kernel_params, reference_params).  Kernel weights are bf16,
    lane-padded and im2col-packed; conv biases are only kept for the reference
    (they are exactly cancelled by batch-stat BatchNorm)."""
    ks = jax.random.split(key, 8)
    w1 = _spectral_normalize(
        0.1 * jax.random.normal(ks[0], (out_channels, in_channels, 3, 3), jnp.float32))
    w2 = _spectral_normalize(
        0.1 * jax.random.normal(ks[1], (out_channels, out_channels, 3, 3), jnp.float32))
    b1 = 0.05 * jax.random.normal(ks[2], (out_channels,), jnp.float32)
    b2 = 0.05 * jax.random.normal(ks[3], (out_channels,), jnp.float32)
    g1 = 1.0 + 0.1 * jax.random.normal(ks[4], (out_channels,), jnp.float32)
    g2 = 1.0 + 0.1 * jax.random.normal(ks[5], (out_channels,), jnp.float32)
    be1 = 0.1 * jax.random.normal(ks[6], (out_channels,), jnp.float32)
    be2 = 0.1 * jax.random.normal(ks[7], (out_channels,), jnp.float32)

    cpi = _round_up(in_channels, LANE)
    cpo = _round_up(out_channels, LANE)

    def pack_lane(w_oihw, ci_pad, co_pad):
        # general packing: K = 9 * ci_pad, row index = (kh*3+kw)*ci_pad + ci
        w = jnp.transpose(w_oihw, (2, 3, 1, 0))                  # HWIO
        w = jnp.pad(w, ((0, 0), (0, 0),
                        (0, ci_pad - w.shape[2]), (0, co_pad - w.shape[3])))
        return w.reshape(9 * ci_pad, co_pad).astype(_MXU_DTYPE)

    def pack_compact(w_oihw, co_pad):
        # compact packing: K = round_up(9*Cin, 128), row index = (kh*3+kw)*Cin + ci
        ci, co = w_oihw.shape[1], w_oihw.shape[0]
        w = jnp.transpose(w_oihw, (2, 3, 1, 0)).reshape(9 * ci, co)
        k1 = _round_up(9 * ci, LANE)
        w = jnp.pad(w, ((0, k1 - 9 * ci), (0, co_pad - co)))
        return w.astype(_MXU_DTYPE)

    if 9 * in_channels <= LANE:
        w1_packed = pack_compact(w1, cpo)
    else:
        w1_packed = pack_lane(w1, cpi, cpo)

    kparams = dict(
        w1=w1_packed, w2=pack_lane(w2, cpo, cpo),
        gamma1=_pad_last(g1, cpo), beta1=_pad_last(be1, cpo),
        gamma2=_pad_last(g2, cpo), beta2=_pad_last(be2, cpo),
    )
    rparams = dict(
        w1=jnp.transpose(w1, (2, 3, 1, 0)), b1=b1,
        w2=jnp.transpose(w2, (2, 3, 1, 0)), b2=b2,
        g1=g1, beta1=be1, g2=g2, beta2=be2,
    )
    return kparams, rparams


# ---------------------------------------------------------------------------
# Full VGGBlock forward (NCHW in / NCHW out)
# ---------------------------------------------------------------------------
@functools.partial(jax.jit, static_argnames=("cout",))
def vgg_block_forward(x_nchw, params, drop_scale, *, cout):
    w1, w2 = params["w1"], params["w2"]
    cpo = w1.shape[1]

    x = jnp.transpose(x_nchw, (0, 2, 3, 1)).astype(jnp.float32)   # NCHW -> NHWC
    N, H, W, cin = x.shape
    cnt = N * H * W

    if 9 * cin <= LANE:
        # compact-K conv1: im2col built lane-dense in XLA, single K=128 matmul.
        xp = jnp.pad(x, ((0, 0), (1, 1), (1, 1), (0, 0)))
        taps = [xp[:, kh:kh + H, kw:kw + W, :]
                for kh in range(3) for kw in range(3)]
        patch = jnp.concatenate(taps, axis=-1).reshape(N, H * W, 9 * cin)
        patch = _pad_last(patch, w1.shape[0]).astype(_MXU_DTYPE)
        conv1, stats1 = _matmul_stats_layer(patch, w1)
    else:
        cpi = w1.shape[0] // 9
        conv1, stats1 = _conv_layer(_pad_last(x, cpi), w1, H, W)

    # BN1 (batch stats) folded into per-channel scale/shift; Dropout2d's
    # per-(sample, channel) factor folded into the same scale/shift.
    scale1, shift1 = _bn_scale_shift(stats1, params["gamma1"], params["beta1"], cnt)
    drop = _pad_last(drop_scale.astype(jnp.float32), cpo)         # (N, Cpo)
    eff_scale = (scale1[None, :] * drop)[:, None, :]              # (N, 1, Cpo)
    eff_shift = (shift1[None, :] * drop)[:, None, :]

    # layer 2: fused BN1+ReLU+Dropout2d + conv2 (9 accumulated bf16 dots)
    conv2, stats2 = _bn_act_conv_layer(conv1, eff_scale, eff_shift, w2, H, W)

    # final BN2 + ReLU: plain jnp, fused by XLA into the slice/transpose
    # epilogue (no third pallas_call / extra HBM round-trip).
    scale2, shift2 = _bn_scale_shift(stats2, params["gamma2"], params["beta2"], cnt)
    y = jnp.maximum(conv2 * scale2[None, None, :] + shift2[None, None, :], 0.0)
    y = y.reshape(N, H, W, cpo)[..., :cout]
    return jnp.transpose(y, (0, 3, 1, 2))                         # NHWC -> NCHW


# ---------------------------------------------------------------------------
# Plain-JAX reference (keeps the conv bias to verify the BN cancellation)
# ---------------------------------------------------------------------------
def reference_forward(x_nchw, rparams, drop_scale):
    x = jnp.transpose(x_nchw, (0, 2, 3, 1)).astype(jnp.float32)

    def conv(x, w, b):
        y = jax.lax.conv_general_dilated(
            x, w, (1, 1), "SAME", dimension_numbers=("NHWC", "HWIO", "NHWC"))
        return y + b.reshape(1, 1, 1, -1)

    def bn(y, g, be):
        m = jnp.mean(y, axis=(0, 1, 2))
        v = jnp.mean((y - m) ** 2, axis=(0, 1, 2))
        return g * (y - m) * jax.lax.rsqrt(v + EPS) + be

    y = jnp.maximum(bn(conv(x, rparams["w1"], rparams["b1"]),
                       rparams["g1"], rparams["beta1"]), 0.0)
    y = y * drop_scale[:, None, None, :]
    y = jnp.maximum(bn(conv(y, rparams["w2"], rparams["b2"]),
                       rparams["g2"], rparams["beta2"]), 0.0)
    return jnp.transpose(y, (0, 3, 1, 2))


if __name__ == "__main__":
    key = jax.random.PRNGKey(0)
    k_x, k_p, k_d = jax.random.split(key, 3)

    N, Cin, Cout, H, W = 2, 4, 8, 16, 16
    x = jax.random.normal(k_x, (N, Cin, H, W), jnp.float32)       # NCHW like PyTorch

    kparams, rparams = init_params(k_p, Cin, Cout)

    # Dropout2d(p=0.1): per-(sample, channel) keep mask scaled by 1/(1-p),
    # drawn deterministically here (PyTorch would draw it per forward).
    p = 0.1
    keep = (jax.random.uniform(k_d, (N, Cout)) >= p).astype(jnp.float32)
    drop_scale = keep / (1.0 - p)

    out = vgg_block_forward(x, kparams, drop_scale, cout=Cout)
    out = jax.block_until_ready(out)

    ref = reference_forward(x, rparams, drop_scale)
    ref = jax.block_until_ready(ref)

    assert out.shape == (N, Cout, H, W), out.shape
    max_err = float(jnp.max(jnp.abs(out - ref)))
    # bf16 MXU operands -> tolerance loosened vs the f32 reference.
    assert jnp.allclose(out, ref, rtol=5e-2, atol=5e-2), max_err

    print("KERNEL_OK")
</pallas_src>

<mosaic_0001>
module attributes {stable_mosaic.version = 11 : i64} {
  func.func @_matmul_stats_kernel(%arg0: i32, %arg1: memref<1x256x128xbf16, #tpu.memory_space<vmem>>, %arg2: memref<128x128xbf16, #tpu.memory_space<vmem>>, %arg3: memref<1x256x128xf32, #tpu.memory_space<vmem>>, %arg4: memref<1x2x128xf32, #tpu.memory_space<vmem>>) attributes {dimension_semantics = [#tpu.dimension_semantics<parallel>], iteration_bounds = array<i64: 2>, scalar_prefetch = 0 : i64, scratch_operands = 0 : i64, tpu.core_type = #tpu.core_type<tc>, window_params = [{transform_indices = @transform_0, window_bounds = array<i64: 1, 256, 128>}, {pipeline_mode = #tpu.pipeline_mode<synchronous>, transform_indices = @transform_1, window_bounds = array<i64: 128, 128>}, {transform_indices = @transform_2, window_bounds = array<i64: 1, 256, 128>}, {transform_indices = @transform_3, window_bounds = array<i64: 1, 2, 128>}]} {
    %c0 = arith.constant 0 : index
    %c0_0 = arith.constant 0 : index
    %c0_1 = arith.constant 0 : index
    %0 = vector.load %arg1[%c0, %c0_0, %c0_1] : memref<1x256x128xbf16, #tpu.memory_space<vmem>>, vector<1x256x128xbf16>
    %1 = vector.shape_cast %0 : vector<1x256x128xbf16> to vector<256x128xbf16>
    %c0_2 = arith.constant 0 : index
    %c0_3 = arith.constant 0 : index
    %2 = vector.load %arg2[%c0_2, %c0_3] : memref<128x128xbf16, #tpu.memory_space<vmem>>, vector<128x128xbf16>
    %cst = arith.constant dense<0.000000e+00> : vector<256x128xf32>
    %3 = tpu.matmul %1, %2, %cst {dimension_numbers = #tpu.dot_dimension_numbers<[1], [0], [0], [1], [0, 0, 1, 1], [], []>} : vector<256x128xbf16>, vector<128x128xbf16>, vector<256x128xf32> -> vector<256x128xf32>
    %c0_4 = arith.constant 0 : index
    %c0_5 = arith.constant 0 : index
    %c0_6 = arith.constant 0 : index
    %4 = vector.load %arg3[%c0_4, %c0_5, %c0_6] : memref<1x256x128xf32, #tpu.memory_space<vmem>>, vector<1x256x128xf32>
    %5 = vector.shape_cast %4 : vector<1x256x128xf32> to vector<256x128xf32>
    %6 = vector.shape_cast %3 : vector<256x128xf32> to vector<1x256x128xf32>
    tpu.vector_store %arg3[%c0_4, %c0_5, %c0_6], %6 {strides = array<i32>} : memref<1x256x128xf32, #tpu.memory_space<vmem>>, vector<1x256x128xf32>,
    %cst_7 = arith.constant dense<0.000000e+00> : vector<128xf32>
    %7 = vector.multi_reduction <add>, %3, %cst_7 [0] : vector<256x128xf32> to vector<128xf32>
    %8 = vector.shape_cast %7 : vector<128xf32> to vector<1x128xf32>
    %c0_8 = arith.constant 0 : index
    %c0_9 = arith.constant 0 : index
    %c0_10 = arith.constant 0 : index
    %9 = vector.load %arg4[%c0_8, %c0_9, %c0_10] : memref<1x2x128xf32, #tpu.memory_space<vmem>>, vector<1x1x128xf32>
    %10 = vector.shape_cast %9 : vector<1x1x128xf32> to vector<1x128xf32>
    %11 = vector.shape_cast %8 : vector<1x128xf32> to vector<1x1x128xf32>
    tpu.vector_store %arg4[%c0_8, %c0_9, %c0_10], %11 {strides = array<i32>} : memref<1x2x128xf32, #tpu.memory_space<vmem>>, vector<1x1x128xf32>,
    %12 = arith.mulf %3, %3 : vector<256x128xf32>
    %cst_11 = arith.constant dense<0.000000e+00> : vector<128xf32>
    %13 = vector.multi_reduction <add>, %12, %cst_11 [0] : vector<256x128xf32> to vector<128xf32>
    %14 = vector.shape_cast %13 : vector<128xf32> to vector<1x128xf32>
    %c0_12 = arith.constant 0 : index
    %c1 = arith.constant 1 : index
    %c0_13 = arith.constant 0 : index
    %15 = vector.load %arg4[%c0_12, %c1, %c0_13] : memref<1x2x128xf32, #tpu.memory_space<vmem>>, vector<1x1x128xf32>
    %16 = vector.shape_cast %15 : vector<1x1x128xf32> to vector<1x128xf32>
    %17 = vector.shape_cast %14 : vector<1x128xf32> to vector<1x1x128xf32>
    tpu.vector_store %arg4[%c0_12, %c1, %c0_13], %17 {strides = array<i32>} : memref<1x2x128xf32, #tpu.memory_space<vmem>>, vector<1x1x128xf32>,
    return
  }
  func.func @transform_0(%arg0: i32) -> (i32, i32, i32) {
    %c0_i32 = arith.constant 0 : i32
    %c0_i32_0 = arith.constant 0 : i32
    %c0_i32_1 = arith.constant 0 : i32
    return %arg0, %c0_i32, %c0_i32_0 : i32, i32, i32
  }
  func.func @transform_1(%arg0: i32) -> (i32, i32) {
    %c0_i32 = arith.constant 0 : i32
    %c0_i32_0 = arith.constant 0 : i32
    %c0_i32_1 = arith.constant 0 : i32
    return %c0_i32, %c0_i32_0 : i32, i32
  }
  func.func @transform_2(%arg0: i32) -> (i32, i32, i32) {
    %c0_i32 = arith.constant 0 : i32
    %c0_i32_0 = arith.constant 0 : i32
    %c0_i32_1 = arith.constant 0 : i32
    return %arg0, %c0_i32, %c0_i32_0 : i32, i32, i32
  }
  func.func @transform_3(%arg0: i32) -> (i32, i32, i32) {
    %c0_i32 = arith.constant 0 : i32
    %c0_i32_0 = arith.constant 0 : i32
    %c0_i32_1 = arith.constant 0 : i32
    return %arg0, %c0_i32, %c0_i32_0 : i32, i32, i32
  }
}

module attributes {stable_mosaic.version = 11 : i64} {
  func.func @_bn_act_conv_stats_kernel(%arg0: i32, %arg1: memref<1x256x128xf32, #tpu.memory_space<vmem>>, %arg2: memref<1x1x128xf32, #tpu.memory_space<vmem>>, %arg3: memref<1x1x128xf32, #tpu.memory_space<vmem>>, %arg4: memref<1152x128xbf16, #tpu.memory_space<vmem>>, %arg5: memref<1x256x128xf32, #tpu.memory_space<vmem>>, %arg6: memref<1x2x128xf32, #tpu.memory_space<vmem>>, %arg7: memref<18x24x128xf32, #tpu.memory_space<vmem>>) attributes {dimension_semantics = [#tpu.dimension_semantics<parallel>], iteration_bounds = array<i64: 2>, scalar_prefetch = 0 : i64, scratch_operands = 1 : i64, tpu.core_type = #tpu.core_type<tc>, window_params = [{transform_indices = @transform_0, window_bounds = array<i64: 1, 256, 128>}, {transform_indices = @transform_1, window_bounds = array<i64: 1, 1, 128>}, {transform_indices = @transform_2, window_bounds = array<i64: 1, 1, 128>}, {pipeline_mode = #tpu.pipeline_mode<synchronous>, transform_indices = @transform_3, window_bounds = array<i64: 1152, 128>}, {transform_indices = @transform_4, window_bounds = array<i64: 1, 256, 128>}, {transform_indices = @transform_5, window_bounds = array<i64: 1, 2, 128>}]} {
    %c0 = arith.constant 0 : index
    %c0_0 = arith.constant 0 : index
    %c0_1 = arith.constant 0 : index
    %0 = vector.load %arg1[%c0, %c0_0, %c0_1] : memref<1x256x128xf32, #tpu.memory_space<vmem>>, vector<1x256x128xf32>
    %1 = vector.shape_cast %0 : vector<1x256x128xf32> to vector<256x128xf32>
    %c0_2 = arith.constant 0 : index
    %c0_3 = arith.constant 0 : index
    %c0_4 = arith.constant 0 : index
    %2 = vector.load %arg2[%c0_2, %c0_3, %c0_4] : memref<1x1x128xf32, #tpu.memory_space<vmem>>, vector<1x1x128xf32>
    %3 = vector.shape_cast %2 : vector<1x1x128xf32> to vector<1x128xf32>
    %4 = vector.broadcast %3 : vector<1x128xf32> to vector<256x128xf32>
    %5 = arith.mulf %1, %4 : vector<256x128xf32>
    %c0_5 = arith.constant 0 : index
    %c0_6 = arith.constant 0 : index
    %c0_7 = arith.constant 0 : index
    %6 = vector.load %arg3[%c0_5, %c0_6, %c0_7] : memref<1x1x128xf32, #tpu.memory_space<vmem>>, vector<1x1x128xf32>
    %7 = vector.shape_cast %6 : vector<1x1x128xf32> to vector<1x128xf32>
    %8 = vector.broadcast %7 : vector<1x128xf32> to vector<256x128xf32>
    %9 = arith.addf %5, %8 : vector<256x128xf32>
    %cst = arith.constant 0.000000e+00 : f32
    %10 = vector.broadcast %cst : f32 to vector<256x128xf32>
    %11 = arith.maximumf %9, %10 : vector<256x128xf32>
    %cst_8 = arith.constant 0.000000e+00 : f32
    %12 = vector.broadcast %cst_8 : f32 to vector<1x24x128xf32>
    %cst_9 = arith.constant 0.000000e+00 : f32
    %13 = vector.broadcast %cst_9 : f32 to vector<18x1x128xf32>
    %c0_10 = arith.constant 0 : index
    %c0_11 = arith.constant 0 : index
    %c0_12 = arith.constant 0 : index
    %14 = vector.load %arg7[%c0_10, %c0_11, %c0_12] : memref<18x24x128xf32, #tpu.memory_space<vmem>>, vector<1x24x128xf32>
    tpu.vector_store %arg7[%c0_10, %c0_11, %c0_12], %12 {strides = array<i32>} : memref<18x24x128xf32, #tpu.memory_space<vmem>>, vector<1x24x128xf32>,
    %c17 = arith.constant 17 : index
    %c0_13 = arith.constant 0 : index
    %c0_14 = arith.constant 0 : index
    %15 = vector.load %arg7[%c17, %c0_13, %c0_14] : memref<18x24x128xf32, #tpu.memory_space<vmem>>, vector<1x24x128xf32>
    tpu.vector_store %arg7[%c17, %c0_13, %c0_14], %12 {strides = array<i32>} : memref<18x24x128xf32, #tpu.memory_space<vmem>>, vector<1x24x128xf32>,
    %c0_15 = arith.constant 0 : index
    %c0_16 = arith.constant 0 : index
    %c0_17 = arith.constant 0 : index
    %16 = vector.load %arg7[%c0_15, %c0_16, %c0_17] : memref<18x24x128xf32, #tpu.memory_space<vmem>>, vector<18x1x128xf32>
    tpu.vector_store %arg7[%c0_15, %c0_16, %c0_17], %13 {strides = array<i32>} : memref<18x24x128xf32, #tpu.memory_space<vmem>>, vector<18x1x128xf32>,
    %c0_18 = arith.constant 0 : index
    %c17_19 = arith.constant 17 : index
    %c0_20 = arith.constant 0 : index
    %17 = vector.load %arg7[%c0_18, %c17_19, %c0_20] : memref<18x24x128xf32, #tpu.memory_space<vmem>>, vector<18x1x128xf32>
    tpu.vector_store %arg7[%c0_18, %c17_19, %c0_20], %13 {strides = array<i32>} : memref<18x24x128xf32, #tpu.memory_space<vmem>>, vector<18x1x128xf32>,
    %18 = vector.shape_cast %11 : vector<256x128xf32> to vector<16x16x128xf32>
    %c1 = arith.constant 1 : index
    %c1_21 = arith.constant 1 : index
    %c0_22 = arith.constant 0 : index
    %19 = vector.load %arg7[%c1, %c1_21, %c0_22] : memref<18x24x128xf32, #tpu.memory_space<vmem>>, vector<16x16x128xf32>
    tpu.vector_store %arg7[%c1, %c1_21, %c0_22], %18 {strides = array<i32>} : memref<18x24x128xf32, #tpu.memory_space<vmem>>, vector<16x16x128xf32>,
    %c0_23 = arith.constant 0 : index
    %c0_24 = arith.constant 0 : index
    %c0_25 = arith.constant 0 : index
    %20 = vector.load %arg7[%c0_23, %c0_24, %c0_25] : memref<18x24x128xf32, #tpu.memory_space<vmem>>, vector<16x16x128xf32>
    %21 = vector.shape_cast %20 : vector<16x16x128xf32> to vector<256x128xf32>
    %22 = arith.truncf %21 : vector<256x128xf32> to vector<256x128xbf16>
    %c0_26 = arith.constant 0 : index
    %c0_27 = arith.constant 0 : index
    %23 = vector.load %arg4[%c0_26, %c0_27] : memref<1152x128xbf16, #tpu.memory_space<vmem>>, vector<128x128xbf16>
    %cst_28 = arith.constant dense<0.000000e+00> : vector<256x128xf32>
    %24 = tpu.matmul %22, %23, %cst_28 {dimension_numbers = #tpu.dot_dimension_numbers<[1], [0], [0], [1], [0, 0, 1, 1], [], []>} : vector<256x128xbf16>, vector<128x128xbf16>, vector<256x128xf32> -> vector<256x128xf32>
    %c0_29 = arith.constant 0 : index
    %c1_30 = arith.constant 1 : index
    %c0_31 = arith.constant 0 : index
    %25 = vector.load %arg7[%c0_29, %c1_30, %c0_31] : memref<18x24x128xf32, #tpu.memory_space<vmem>>, vector<16x16x128xf32>
    %26 = vector.shape_cast %25 : vector<16x16x128xf32> to vector<256x128xf32>
    %27 = arith.truncf %26 : vector<256x128xf32> to vector<256x128xbf16>
    %c128 = arith.constant 128 : index
    %c0_32 = arith.constant 0 : index
    %28 = vector.load %arg4[%c128, %c0_32] : memref<1152x128xbf16, #tpu.memory_space<vmem>>, vector<128x128xbf16>
    %cst_33 = arith.constant dense<0.000000e+00> : vector<256x128xf32>
    %29 = tpu.matmul %27, %28, %cst_33 {dimension_numbers = #tpu.dot_dimension_numbers<[1], [0], [0], [1], [0, 0, 1, 1], [], []>} : vector<256x128xbf16>, vector<128x128xbf16>, vector<256x128xf32> -> vector<256x128xf32>
    %30 = arith.addf %24, %29 : vector<256x128xf32>
    %c0_34 = arith.constant 0 : index
    %c2 = arith.constant 2 : index
    %c0_35 = arith.constant 0 : index
    %31 = vector.load %arg7[%c0_34, %c2, %c0_35] : memref<18x24x128xf32, #tpu.memory_space<vmem>>, vector<16x16x128xf32>
    %32 = vector.shape_cast %31 : vector<16x16x128xf32> to vector<256x128xf32>
    %33 = arith.truncf %32 : vector<256x128xf32> to vector<256x128xbf16>
    %c256 = arith.constant 256 : index
    %c0_36 = arith.constant 0 : index
    %34 = vector.load %arg4[%c256, %c0_36] : memref<1152x128xbf16, #tpu.memory_space<vmem>>, vector<128x128xbf16>
    %cst_37 = arith.constant dense<0.000000e+00> : vector<256x128xf32>
    %35 = tpu.matmul %33, %34, %cst_37 {dimension_numbers = #tpu.dot_dimension_numbers<[1], [0], [0], [1], [0, 0, 1, 1], [], []>} : vector<256x128xbf16>, vector<128x128xbf16>, vector<256x128xf32> -> vector<256x128xf32>
    %36 = arith.addf %30, %35 : vector<256x128xf32>
    %c1_38 = arith.constant 1 : index
    %c0_39 = arith.constant 0 : index
    %c0_40 = arith.constant 0 : index
    %37 = vector.load %arg7[%c1_38, %c0_39, %c0_40] : memref<18x24x128xf32, #tpu.memory_space<vmem>>, vector<16x16x128xf32>
    %38 = vector.shape_cast %37 : vector<16x16x128xf32> to vector<256x128xf32>
    %39 = arith.truncf %38 : vector<256x128xf32> to vector<256x128xbf16>
    %c384 = arith.constant 384 : index
    %c0_41 = arith.constant 0 : index
    %40 = vector.load %arg4[%c384, %c0_41] : memref<1152x128xbf16, #tpu.memory_space<vmem>>, vector<128x128xbf16>
    %cst_42 = arith.constant dense<0.000000e+00> : vector<256x128xf32>
    %41 = tpu.matmul %39, %40, %cst_42 {dimension_numbers = #tpu.dot_dimension_numbers<[1], [0], [0], [1], [0, 0, 1, 1], [], []>} : vector<256x128xbf16>, vector<128x128xbf16>, vector<256x128xf32> -> vector<256x128xf32>
    %42 = arith.addf %36, %41 : vector<256x128xf32>
    %c1_43 = arith.constant 1 : index
    %c1_44 = arith.constant 1 : index
    %c0_45 = arith.constant 0 : index
    %43 = vector.load %arg7[%c1_43, %c1_44, %c0_45] : memref<18x24x128xf32, #tpu.memory_space<vmem>>, vector<16x16x128xf32>
    %44 = vector.shape_cast %43 : vector<16x16x128xf32> to vector<256x128xf32>
    %45 = arith.truncf %44 : vector<256x128xf32> to vector<256x128xbf16>
    %c512 = arith.constant 512 : index
    %c0_46 = arith.constant 0 : index
    %46 = vector.load %arg4[%c512, %c0_46] : memref<1152x128xbf16, #tpu.memory_space<vmem>>, vector<128x128xbf16>
    %cst_47 = arith.constant dense<0.000000e+00> : vector<256x128xf32>
    %47 = tpu.matmul %45, %46, %cst_47 {dimension_numbers = #tpu.dot_dimension_numbers<[1], [0], [0], [1], [0, 0, 1, 1], [], []>} : vector<256x128xbf16>, vector<128x128xbf16>, vector<256x128xf32> -> vector<256x128xf32>
    %48 = arith.addf %42, %47 : vector<256x128xf32>
    %c1_48 = arith.constant 1 : index
    %c2_49 = arith.constant 2 : index
    %c0_50 = arith.constant 0 : index
    %49 = vector.load %arg7[%c1_48, %c2_49, %c0_50] : memref<18x24x128xf32, #tpu.memory_space<vmem>>, vector<16x16x128xf32>
    %50 = vector.shape_cast %49 : vector<16x16x128xf32> to vector<256x128xf32>
    %51 = arith.truncf %50 : vector<256x128xf32> to vector<256x128xbf16>
    %c640 = arith.constant 640 : index
    %c0_51 = arith.constant 0 : index
    %52 = vector.load %arg4[%c640, %c0_51] : memref<1152x128xbf16, #tpu.memory_space<vmem>>, vector<128x128xbf16>
    %cst_52 = arith.constant dense<0.000000e+00> : vector<256x128xf32>
    %53 = tpu.matmul %51, %52, %cst_52 {dimension_numbers = #tpu.dot_dimension_numbers<[1], [0], [0], [1], [0, 0, 1, 1], [], []>} : vector<256x128xbf16>, vector<128x128xbf16>, vector<256x128xf32> -> vector<256x128xf32>
    %54 = arith.addf %48, %53 : vector<256x128xf32>
    %c2_53 = arith.constant 2 : index
    %c0_54 = arith.constant 0 : index
    %c0_55 = arith.constant 0 : index
    %55 = vector.load %arg7[%c2_53, %c0_54, %c0_55] : memref<18x24x128xf32, #tpu.memory_space<vmem>>, vector<16x16x128xf32>
    %56 = vector.shape_cast %55 : vector<16x16x128xf32> to vector<256x128xf32>
    %57 = arith.truncf %56 : vector<256x128xf32> to vector<256x128xbf16>
    %c768 = arith.constant 768 : index
    %c0_56 = arith.constant 0 : index
    %58 = vector.load %arg4[%c768, %c0_56] : memref<1152x128xbf16, #tpu.memory_space<vmem>>, vector<128x128xbf16>
    %cst_57 = arith.constant dense<0.000000e+00> : vector<256x128xf32>
    %59 = tpu.matmul %57, %58, %cst_57 {dimension_numbers = #tpu.dot_dimension_numbers<[1], [0], [0], [1], [0, 0, 1, 1], [], []>} : vector<256x128xbf16>, vector<128x128xbf16>, vector<256x128xf32> -> vector<256x128xf32>
    %60 = arith.addf %54, %59 : vector<256x128xf32>
    %c2_58 = arith.constant 2 : index
    %c1_59 = arith.constant 1 : index
    %c0_60 = arith.constant 0 : index
    %61 = vector.load %arg7[%c2_58, %c1_59, %c0_60] : memref<18x24x128xf32, #tpu.memory_space<vmem>>, vector<16x16x128xf32>
    %62 = vector.shape_cast %61 : vector<16x16x128xf32> to vector<256x128xf32>
    %63 = arith.truncf %62 : vector<256x128xf32> to vector<256x128xbf16>
    %c896 = arith.constant 896 : index
    %c0_61 = arith.constant 0 : index
    %64 = vector.load %arg4[%c896, %c0_61] : memref<1152x128xbf16, #tpu.memory_space<vmem>>, vector<128x128xbf16>
    %cst_62 = arith.constant dense<0.000000e+00> : vector<256x128xf32>
    %65 = tpu.matmul %63, %64, %cst_62 {dimension_numbers = #tpu.dot_dimension_numbers<[1], [0], [0], [1], [0, 0, 1, 1], [], []>} : vector<256x128xbf16>, vector<128x128xbf16>, vector<256x128xf32> -> vector<256x128xf32>
    %66 = arith.addf %60, %65 : vector<256x128xf32>
    %c2_63 = arith.constant 2 : index
    %c2_64 = arith.constant 2 : index
    %c0_65 = arith.constant 0 : index
    %67 = vector.load %arg7[%c2_63, %c2_64, %c0_65] : memref<18x24x128xf32, #tpu.memory_space<vmem>>, vector<16x16x128xf32>
    %68 = vector.shape_cast %67 : vector<16x16x128xf32> to vector<256x128xf32>
    %69 = arith.truncf %68 : vector<256x128xf32> to vector<256x128xbf16>
    %c1024 = arith.constant 1024 : index
    %c0_66 = arith.constant 0 : index
    %70 = vector.load %arg4[%c1024, %c0_66] : memref<1152x128xbf16, #tpu.memory_space<vmem>>, vector<128x128xbf16>
    %cst_67 = arith.constant dense<0.000000e+00> : vector<256x128xf32>
    %71 = tpu.matmul %69, %70, %cst_67 {dimension_numbers = #tpu.dot_dimension_numbers<[1], [0], [0], [1], [0, 0, 1, 1], [], []>} : vector<256x128xbf16>, vector<128x128xbf16>, vector<256x128xf32> -> vector<256x128xf32>
    %72 = arith.addf %66, %71 : vector<256x128xf32>
    %c0_68 = arith.constant 0 : index
    %c0_69 = arith.constant 0 : index
    %c0_70 = arith.constant 0 : index
    %73 = vector.load %arg5[%c0_68, %c0_69, %c0_70] : memref<1x256x128xf32, #tpu.memory_space<vmem>>, vector<1x256x128xf32>
    %74 = vector.shape_cast %73 : vector<1x256x128xf32> to vector<256x128xf32>
    %75 = vector.shape_cast %72 : vector<256x128xf32> to vector<1x256x128xf32>
    tpu.vector_store %arg5[%c0_68, %c0_69, %c0_70], %75 {strides = array<i32>} : memref<1x256x128xf32, #tpu.memory_space<vmem>>, vector<1x256x128xf32>,
    %cst_71 = arith.constant dense<0.000000e+00> : vector<128xf32>
    %76 = vector.multi_reduction <add>, %72, %cst_71 [0] : vector<256x128xf32> to vector<128xf32>
    %77 = vector.shape_cast %76 : vector<128xf32> to vector<1x128xf32>
    %c0_72 = arith.constant 0 : index
    %c0_73 = arith.constant 0 : index
    %c0_74 = arith.constant 0 : index
    %78 = vector.load %arg6[%c0_72, %c0_73, %c0_74] : memref<1x2x128xf32, #tpu.memory_space<vmem>>, vector<1x1x128xf32>
    %79 = vector.shape_cast %78 : vector<1x1x128xf32> to vector<1x128xf32>
    %80 = vector.shape_cast %77 : vector<1x128xf32> to vector<1x1x128xf32>
    tpu.vector_store %arg6[%c0_72, %c0_73, %c0_74], %80 {strides = array<i32>} : memref<1x2x128xf32, #tpu.memory_space<vmem>>, vector<1x1x128xf32>,
    %81 = arith.mulf %72, %72 : vector<256x128xf32>
    %cst_75 = arith.constant dense<0.000000e+00> : vector<128xf32>
    %82 = vector.multi_reduction <add>, %81, %cst_75 [0] : vector<256x128xf32> to vector<128xf32>
    %83 = vector.shape_cast %82 : vector<128xf32> to vector<1x128xf32>
    %c0_76 = arith.constant 0 : index
    %c1_77 = arith.constant 1 : index
    %c0_78 = arith.constant 0 : index
    %84 = vector.load %arg6[%c0_76, %c1_77, %c0_78] : memref<1x2x128xf32, #tpu.memory_space<vmem>>, vector<1x1x128xf32>
    %85 = vector.shape_cast %84 : vector<1x1x128xf32> to vector<1x128xf32>
    %86 = vector.shape_cast %83 : vector<1x128xf32> to vector<1x1x128xf32>
    tpu.vector_store %arg6[%c0_76, %c1_77, %c0_78], %86 {strides = array<i32>} : memref<1x2x128xf32, #tpu.memory_space<vmem>>, vector<1x1x128xf32>,
    return
  }
  func.func @transform_0(%arg0: i32) -> (i32, i32, i32) {
    %c0_i32 = arith.constant 0 : i32
    %c0_i32_0 = arith.constant 0 : i32
    %c0_i32_1 = arith.constant 0 : i32
    return %arg0, %c0_i32, %c0_i32_0 : i32, i32, i32
  }
  func.func @transform_1(%arg0: i32) -> (i32, i32, i32) {
    %c0_i32 = arith.constant 0 : i32
    %c0_i32_0 = arith.constant 0 : i32
    %c0_i32_1 = arith.constant 0 : i32
    return %arg0, %c0_i32, %c0_i32_0 : i32, i32, i32
  }
  func.func @transform_2(%arg0: i32) -> (i32, i32, i32) {
    %c0_i32 = arith.constant 0 : i32
    %c0_i32_0 = arith.constant 0 : i32
    %c0_i32_1 = arith.constant 0 : i32
    return %arg0, %c0_i32, %c0_i32_0 : i32, i32, i32
  }
  func.func @transform_3(%arg0: i32) -> (i32, i32) {
    %c0_i32 = arith.constant 0 : i32
    %c0_i32_0 = arith.constant 0 : i32
    %c0_i32_1 = arith.constant 0 : i32
    return %c0_i32, %c0_i32_0 : i32, i32
  }
  func.func @transform_4(%arg0: i32) -> (i32, i32, i32) {
    %c0_i32 = arith.constant 0 : i32
    %c0_i32_0 = arith.constant 0 : i32
    %c0_i32_1 = arith.constant 0 : i32
    return %arg0, %c0_i32, %c0_i32_0 : i32, i32, i32
  }
  func.func @transform_5(%arg0: i32) -> (i32, i32, i32) {
    %c0_i32 = arith.constant 0 : i32
    %c0_i32_0 = arith.constant 0 : i32
    %c0_i32_1 = arith.constant 0 : i32
    return %arg0, %c0_i32, %c0_i32_0 : i32, i32, i32
  }
}

</mosaic_0001>

<llo_original>
// kernel: vgg_block_forward.2
$region0: #{vgg_block_forward.2}
  #allocation0 [shape = 'u32[]', space=smem, size = 0x4, offset = 0x4, fixed_abs, tag = 'smem constant byte address 0x4 - core index']
  #allocation1 [shape = 'u32[144,128]{1,0:T(1,128)}', space=vmem, size = 0x12000, scoped, tag = 'internal scratch']
  %s0 = inlined_call_operand.vmem [shape: bf16[2,256,128], index: 0, kind: input, shape index: {}]
  %s1 = inlined_call_operand.vmem [shape: bf16[128,128], index: 1, kind: input, shape index: {}]
  %s2 = inlined_call_operand.vmem [shape: f32[2,256,128], index: 2, kind: output, shape index: {0}]
  %s3 = inlined_call_operand.vmem [shape: f32[2,2,128], index: 3, kind: output, shape index: {1}]
  %4 = xla_tuple %s2, %s3
  %s5 = sld [smem:[#allocation0]]
  $region49: #{vgg_block_forward.2} parent=0
    _
  %s7 = ssub.s32 1, %s5
  %s8 = scalar_select 0, %s7, %s5
  loop: start=0, step=1, limit=4
  $region2: #{vgg_block_forward.2} parent=0 // loop_pre_header
    _
  $region3: #{vgg_block_forward.2} parent=0 // loop_header
    %s10 = sphi 0, %s14
    %p11 = scmp.ge.s32.totalorder %s10, 4
    %s20 = sphi 0, %s22
    %s23 = sphi 0, %s20
    %s24 = sphi 0, %s23
    %s40 = sphi 0, %s24
    %s44 = sphi 0, %s44
    %s46 = sphi 0, %s44
    %s47 = sphi 0, %s46
    %s61 = sphi 0, %s47
    %s67 = sphi 0, %s69
    %s70 = sphi 0, %s67
    %s71 = sphi 0, %s70
    %s87 = sphi 0, %s71
    %s93 = sphi 0, %s95
    %s96 = sphi 0, %s93
    %s97 = sphi 0, %s96
    %s113 = sphi 0, %s97
  $region4: #{vgg_block_forward.2} parent=0 // loop_header_branch
    %13 = sbr.rel (%p11) target = $region8
  $region5: #{vgg_block_forward.2} parent=0 // loop_body
    %s15 = ssub.s32 %s10, 1
    %s16 = ssub.s32 %s10, 2
    %s17 = sadd.s32 %s10, 1
    %s18 = ssub.s32 %s10, %s17
    %p19 = scmp.eq.s32.totalorder %s18, 0
    %s21 = sadd.s32 %s20, 1
    %s22 = scalar_select %p19, %s20, %s21
    %p25 = pneg %p19
    %p26 = scmp.eq.s32.totalorder %s10, 1
    %p27 = por %p25, %p26
    %p28 = scmp.ne.s32.totalorder %s20, %s23
    %p29 = scmp.eq.s32.totalorder %s10, 0
    %p30 = por %p28, %p29
    %p31 = scmp.ne.s32.totalorder %s20, %s23
    %p32 = scmp.eq.s32.totalorder %s15, 1
    %p33 = por %p31, %p32
    %p34 = scmp.ne.s32.totalorder %s23, %s24
    %p35 = scmp.eq.s32.totalorder %s15, 0
    %p36 = por %p34, %p35
    %p37 = scmp.ne.s32.totalorder %s23, %s24
    %p38 = scmp.eq.s32.totalorder %s16, 1
    %p39 = por %p37, %p38
    %p41 = scmp.ne.s32.totalorder %s24, %s40
    %p42 = scmp.eq.s32.totalorder %s16, 0
    %p43 = por %p41, %p42
    %s45 = sadd.s32 %s44, 1
    %p48 = scmp.eq.s32.totalorder %s10, 1
    %p49 = scmp.ne.s32.totalorder %s44, %s46
    %p50 = scmp.eq.s32.totalorder %s10, 0
    %p51 = por %p49, %p50
    %p52 = scmp.ne.s32.totalorder %s44, %s46
    %p53 = scmp.eq.s32.totalorder %s15, 1
    %p54 = por %p52, %p53
    %p55 = scmp.ne.s32.totalorder %s46, %s47
    %p56 = scmp.eq.s32.totalorder %s15, 0
    %p57 = por %p55, %p56
    %p58 = scmp.ne.s32.totalorder %s46, %s47
    %p59 = scmp.eq.s32.totalorder %s16, 1
    %p60 = por %p58, %p59
    %p62 = scmp.ne.s32.totalorder %s47, %s61
    %p63 = scmp.eq.s32.totalorder %s16, 0
    %p64 = por %p62, %p63
    %s65 = ssub.s32 %s10, %s17
    %p66 = scmp.eq.s32.totalorder %s65, 0
    %s68 = sadd.s32 %s67, 1
    %s69 = scalar_select %p66, %s67, %s68
    %p72 = pneg %p66
    %p73 = scmp.eq.s32.totalorder %s10, 1
    %p74 = por %p72, %p73
    %p75 = scmp.ne.s32.totalorder %s67, %s70
    %p76 = scmp.eq.s32.totalorder %s10, 0
    %p77 = por %p75, %p76
    %p78 = scmp.ne.s32.totalorder %s67, %s70
    %p79 = scmp.eq.s32.totalorder %s15, 1
    %p80 = por %p78, %p79
    %p81 = scmp.ne.s32.totalorder %s70, %s71
    %p82 = scmp.eq.s32.totalorder %s15, 0
    %p83 = por %p81, %p82
    %p84 = scmp.ne.s32.totalorder %s70, %s71
    %p85 = scmp.eq.s32.totalorder %s16, 1
    %p86 = por %p84, %p85
    %p88 = scmp.ne.s32.totalorder %s71, %s87
    %p89 = scmp.eq.s32.totalorder %s16, 0
    %p90 = por %p88, %p89
    %s91 = ssub.s32 %s10, %s17
    %p92 = scmp.eq.s32.totalorder %s91, 0
    %s94 = sadd.s32 %s93, 1
    %s95 = scalar_select %p92, %s93, %s94
    %p98 = pneg %p92
    %p99 = scmp.eq.s32.totalorder %s10, 1
    %p100 = por %p98, %p99
    %p101 = scmp.ne.s32.totalorder %s93, %s96
    %p102 = scmp.eq.s32.totalorder %s10, 0
    %p103 = por %p101, %p102
    %p104 = scmp.ne.s32.totalorder %s93, %s96
    %p105 = scmp.eq.s32.totalorder %s15, 1
    %p106 = por %p104, %p105
    %p107 = scmp.ne.s32.totalorder %s96, %s97
    %p108 = scmp.eq.s32.totalorder %s15, 0
    %p109 = por %p107, %p108
    %p110 = scmp.ne.s32.totalorder %s96, %s97
    %p111 = scmp.eq.s32.totalorder %s16, 1
    %p112 = por %p110, %p111
    %p114 = scmp.ne.s32.totalorder %s97, %s113
    %p115 = scmp.eq.s32.totalorder %s16, 0
    %p116 = por %p114, %p115
    %p117 = scmp.le.s32.totalorder 1, %s10
    %p118 = scmp.lt.s32.totalorder %s10, 3
    %p119 = pnand %p117, %p118
    %p120 = pneg %p119
    // Predicated region
    $region9: #{vgg_block_forward.2} parent=5 // pred_check
      _
    $region10: #{vgg_block_forward.2} parent=5 // pred_check_branch
      %122 = sbr.rel (%p119) target = $region12
    $region11: #{vgg_block_forward.2} parent=5 // pred_region
      %s123 = ssub.s32 %s10, 1
      // Predicated region
      $region13: #{vgg_block_forward.2} parent=11 // pred_check
        %p124 = pneg %p57
      $region14: #{vgg_block_forward.2} parent=11 // pred_check_branch
        %126 = sbr.rel (%p124) target = $region16
      $region15: #{vgg_block_forward.2} parent=11 // pred_region
        _
      $region16: #{vgg_block_forward.2} parent=11 // pred_fallthru
        _
    $region12: #{vgg_block_forward.2} parent=5 // pred_fallthru
      _
    %p127 = scmp.lt.s32.totalorder %s10, 2
    // Predicated region
    $region17: #{vgg_block_forward.2} parent=5 // pred_check
      %p128 = pneg %p127
    $region18: #{vgg_block_forward.2} parent=5 // pred_check_branch
      %130 = sbr.rel (%p128) target = $region20
    $region19: #{vgg_block_forward.2} parent=5 // pred_region
      // Predicated region
      $region21: #{vgg_block_forward.2} parent=19 // pred_check
        %p131 = pneg %p30
      $region22: #{vgg_block_forward.2} parent=19 // pred_check_branch
        %133 = sbr.rel (%p131) target = $region24
      $region23: #{vgg_block_forward.2} parent=19 // pred_region
        %p134 = scmp.lt.s32.totalorder %s10, 1
        %s135 = scalar_select %p134, %s10, 1
        %s136 = smul.addr %s135, 32
        %s137 = smul.addr %s136, 4
        %s138 = scalar_lea.vmem %s0, %s137
      $region24: #{vgg_block_forward.2} parent=19 // pred_fallthru
        _
    $region20: #{vgg_block_forward.2} parent=5 // pred_fallthru
      _
    %p139 = scmp.le.s32.totalorder 1, %s10
    %p140 = scmp.lt.s32.totalorder %s10, 3
    %p141 = pnand %p139, %p140
    %p142 = pneg %p141
    // Predicated region
    $region25: #{vgg_block_forward.2} parent=5 // pred_check
      _
    $region26: #{vgg_block_forward.2} parent=5 // pred_check_branch
      %144 = sbr.rel (%p141) target = $region28
    $region27: #{vgg_block_forward.2} parent=5 // pred_region
      %s145 = ssub.s32 %s10, 1
      %p146 = scmp.lt.s32.totalorder %s15, 1
      %s147 = scalar_select %p146, %s15, 1
      %s148 = smul.addr %s147, 32
      %s149 = smul.addr %s148, 4
      %s150 = scalar_lea.vmem %s0, %s149
      %p151 = pneg %p36
      %p152 = pneg %p33
      %p153 = pneg %p57
      %p154 = pneg %p54
      %p155 = pneg %p83
      %p156 = pneg %p80
      %p157 = scmp.lt.s32.totalorder %s15, 1
      %s158 = scalar_select %p157, %s15, 1
      %s159 = smul.addr %s158, 32
      %s160 = smul.addr %s159, 8
      %s161 = scalar_lea.vmem %s2, %s160
      %p162 = pneg %p109
      %p163 = pneg %p106
      %p164 = scmp.lt.s32.totalorder %s15, 1
      %s165 = scalar_select %p164, %s15, 1
      %s166 = smul.addr %s165, 2
      %s167 = scalar_lea.vmem %s3, %s166
      %p168 = scmp.lt.s32.totalorder %s15, 1
      %s169 = scalar_select %p168, %s15, 1
      %s170 = smul.addr %s169, 32
      %s171 = smul.addr %s170, 4
      %s172 = scalar_lea.vmem %s0, %s171
      %p173 = scmp.lt.s32.totalorder %s15, 1
      %s174 = scalar_select %p173, %s15, 1
      %s175 = smul.addr %s174, 32
      %s176 = smul.addr %s175, 8
      %s177 = scalar_lea.vmem %s2, %s176
      %p178 = scmp.lt.s32.totalorder %s15, 1
      %s179 = scalar_select %p178, %s15, 1
      %s180 = smul.addr %s179, 2
      %s181 = scalar_lea.vmem %s3, %s180
      %v183 = vld [vmem:[%s172] sm:$0xf]
      %v184 = vld [vmem:[%s172 + $0x4] sm:$0xf]
      %v185 = vld [vmem:[%s172 + $0x8] sm:$0xf]
      %v186 = vld [vmem:[%s172 + $0xc] sm:$0xf]
      %v187 = vld [vmem:[%s172 + $0x10] sm:$0xf]
      %v188 = vld [vmem:[%s172 + $0x14] sm:$0xf]
      %v189 = vld [vmem:[%s172 + $0x18] sm:$0xf]
      %v190 = vld [vmem:[%s172 + $0x1c] sm:$0xf]
      %v191 = vld [vmem:[%s172 + $0x20] sm:$0xf]
      %v192 = vld [vmem:[%s172 + $0x24] sm:$0xf]
      %v193 = vld [vmem:[%s172 + $0x28] sm:$0xf]
      %v194 = vld [vmem:[%s172 + $0x2c] sm:$0xf]
      %v195 = vld [vmem:[%s172 + $0x30] sm:$0xf]
      %v196 = vld [vmem:[%s172 + $0x34] sm:$0xf]
      %v197 = vld [vmem:[%s172 + $0x38] sm:$0xf]
      %v198 = vld [vmem:[%s172 + $0x3c] sm:$0xf]
      %v199 = vld [vmem:[%s172 + $0x40] sm:$0xf]
      %v200 = vld [vmem:[%s172 + $0x44] sm:$0xf]
      %v201 = vld [vmem:[%s172 + $0x48] sm:$0xf]
      %v202 = vld [vmem:[%s172 + $0x4c] sm:$0xf]
      %v203 = vld [vmem:[%s172 + $0x50] sm:$0xf]
      %v204 = vld [vmem:[%s172 + $0x54] sm:$0xf]
      %v205 = vld [vmem:[%s172 + $0x58] sm:$0xf]
      %v206 = vld [vmem:[%s172 + $0x5c] sm:$0xf]
      %v207 = vld [vmem:[%s172 + $0x60] sm:$0xf]
      %v208 = vld [vmem:[%s172 + $0x64] sm:$0xf]
      %v209 = vld [vmem:[%s172 + $0x68] sm:$0xf]
      %v210 = vld [vmem:[%s172 + $0x6c] sm:$0xf]
      %v211 = vld [vmem:[%s172 + $0x70] sm:$0xf]
      %v212 = vld [vmem:[%s172 + $0x74] sm:$0xf]
      %v213 = vld [vmem:[%s172 + $0x78] sm:$0xf]
      %v214 = vld [vmem:[%s172 + $0x7c] sm:$0xf]
      %v215 = vld [vmem:[%s1] sm:$0xf]
      %v216 = vld [vmem:[%s1 + $0x4] sm:$0xf]
      %v217 = vld [vmem:[%s1 + $0x8] sm:$0xf]
      %v218 = vld [vmem:[%s1 + $0xc] sm:$0xf]
      %v219 = vld [vmem:[%s1 + $0x10] sm:$0xf]
      %v220 = vld [vmem:[%s1 + $0x14] sm:$0xf]
      %v221 = vld [vmem:[%s1 + $0x18] sm:$0xf]
      %v222 = vld [vmem:[%s1 + $0x1c] sm:$0xf]
      %v223 = vld [vmem:[%s1 + $0x20] sm:$0xf]
      %v224 = vld [vmem:[%s1 + $0x24] sm:$0xf]
      %v225 = vld [vmem:[%s1 + $0x28] sm:$0xf]
      %v226 = vld [vmem:[%s1 + $0x2c] sm:$0xf]
      %v227 = vld [vmem:[%s1 + $0x30] sm:$0xf]
      %v228 = vld [vmem:[%s1 + $0x34] sm:$0xf]
      %v229 = vld [vmem:[%s1 + $0x38] sm:$0xf]
      %v230 = vld [vmem:[%s1 + $0x3c] sm:$0xf]
      %v263 = vunpack.c.l.b16 %v183
      %v264 = vunpack.c.l.b16 %v184
      %v265 = vunpack.c.l.b16 %v185
      %v266 = vunpack.c.l.b16 %v186
      %v267 = vunpack.c.l.b16 %v187
      %v268 = vunpack.c.l.b16 %v188
      %v269 = vunpack.c.l.b16 %v189
      %v270 = vunpack.c.l.b16 %v190
      %v271 = vunpack.c.l.b16 %v191
      %v272 = vunpack.c.l.b16 %v192
      %v273 = vunpack.c.l.b16 %v193
      %v274 = vunpack.c.l.b16 %v194
      %v275 = vunpack.c.l.b16 %v195
      %v276 = vunpack.c.l.b16 %v196
      %v277 = vunpack.c.l.b16 %v197
      %v278 = vunpack.c.l.b16 %v198
      %v279 = vunpack.c.l.b16 %v199
      %v280 = vunpack.c.l.b16 %v200
      %v281 = vunpack.c.l.b16 %v201
      %v282 = vunpack.c.l.b16 %v202
      %v283 = vunpack.c.l.b16 %v203
      %v284 = vunpack.c.l.b16 %v204
      %v285 = vunpack.c.l.b16 %v205
      %v286 = vunpack.c.l.b16 %v206
      %v287 = vunpack.c.l.b16 %v207
      %v288 = vunpack.c.l.b16 %v208
      %v289 = vunpack.c.l.b16 %v209
      %v290 = vunpack.c.l.b16 %v210
      %v291 = vunpack.c.l.b16 %v211
      %v292 = vunpack.c.l.b16 %v212
      %v293 = vunpack.c.l.b16 %v213
      %v294 = vunpack.c.l.b16 %v214
      %v295 = vpack.c.b16 %v264, %v263
      %v296 = vpack.c.b16 %v266, %v265
      %v297 = vpack.c.b16 %v268, %v267
      %v298 = vpack.c.b16 %v270, %v269
      %v299 = vpack.c.b16 %v272, %v271
      %v300 = vpack.c.b16 %v274, %v273
      %v301 = vpack.c.b16 %v276, %v275
      %v302 = vpack.c.b16 %v278, %v277
      %v303 = vpack.c.b16 %v280, %v279
      %v304 = vpack.c.b16 %v282, %v281
      %v305 = vpack.c.b16 %v284, %v283
      %v306 = vpack.c.b16 %v286, %v285
      %v307 = vpack.c.b16 %v288, %v287
      %v308 = vpack.c.b16 %v290, %v289
      %v309 = vpack.c.b16 %v292, %v291
      %v310 = vpack.c.b16 %v294, %v293
      %v343 = vunpack.c.l.b16 %v215
      %v344 = vunpack.c.l.b16 %v216
      %v345 = vunpack.c.l.b16 %v217
      %v346 = vunpack.c.l.b16 %v218
      %v347 = vunpack.c.l.b16 %v219
      %v348 = vunpack.c.l.b16 %v220
      %v349 = vunpack.c.l.b16 %v221
      %v350 = vunpack.c.l.b16 %v222
      %v351 = vunpack.c.l.b16 %v223
      %v352 = vunpack.c.l.b16 %v224
      %v353 = vunpack.c.l.b16 %v225
      %v354 = vunpack.c.l.b16 %v226
      %v355 = vunpack.c.l.b16 %v227
      %v356 = vunpack.c.l.b16 %v228
      %v357 = vunpack.c.l.b16 %v229
      %v358 = vunpack.c.l.b16 %v230
      %v359 = vpack.c.b16 %v344, %v343
      %v360 = vpack.c.b16 %v346, %v345
      %v361 = vpack.c.b16 %v348, %v347
      %v362 = vpack.c.b16 %v350, %v349
      %v363 = vpack.c.b16 %v352, %v351
      %v364 = vpack.c.b16 %v354, %v353
      %v365 = vpack.c.b16 %v356, %v355
      %v366 = vpack.c.b16 %v358, %v357
      %375 = vmatprep.subr.bf16.mxu0 0
      %376 = vmatpush1.bf16.msra.mxu0 %v359
      %377 = vmatprep.subr.bf16.mxu0 0
      %378 = vmatpush1.bf16.msra.mxu0 %v360
      %379 = vmatprep.subr.bf16.mxu0 0
      %380 = vmatpush1.bf16.msra.mxu0 %v361
      %381 = vmatprep.subr.bf16.mxu0 0
      %382 = vmatpush1.bf16.msra.mxu0 %v362
      %383 = vmatprep.subr.bf16.mxu0 0
      %384 = vmatpush1.bf16.msra.mxu0 %v363
      %385 = vmatprep.subr.bf16.mxu0 0
      %386 = vmatpush1.bf16.msra.mxu0 %v364
      %387 = vmatprep.subr.bf16.mxu0 0
      %388 = vmatpush1.bf16.msra.mxu0 %v365
      %389 = vmatprep.subr.bf16.mxu0 0
      %390 = vmatpush1.bf16.msra.mxu0 %v366
      %391 = vmatprep.subr.bf16.mxu0 0
      %392 = vmatpush1.bf16.msra.mxu0 0
      %393 = vmatprep.subr.bf16.mxu0 0
      %394 = vmatpush1.bf16.msra.mxu0 0
      %395 = vmatprep.subr.bf16.mxu0 0
      %396 = vmatpush1.bf16.msra.mxu0 0
      %397 = vmatprep.subr.bf16.mxu0 0
      %398 = vmatpush1.bf16.msra.mxu0 0
      %399 = vmatprep.subr.bf16.mxu0 0
      %400 = vmatpush1.bf16.msra.mxu0 0
      %401 = vmatprep.subr.bf16.mxu0 0
      %402 = vmatpush1.bf16.msra.mxu0 0
      %403 = vmatprep.subr.bf16.mxu0 0
      %404 = vmatpush1.bf16.msra.mxu0 0
      %405 = vmatprep.subr.bf16.mxu0 0
      %406 = vmatpush1.bf16.msra.mxu0 0
      %407 = vmatprep.mubr.bf16.mxu0 0
      %408 = vmatmul.mubr.bf16.gmra.mrb[0].mxu0 %v295
      %v409 = vpop.f32.mrb[0].mxu0
      %v410 = vadd.f32 0.0, %v409
      %v411 = vpop.f32.mrb[0].mxu0
      %v412 = vpop.f32.mrb[0].mxu0
      %v413 = vadd.f32 0.0, %v412
      %v414 = vpop.f32.mrb[0].mxu0
      %415 = vmatprep.mubr.bf16.mxu0 0
      %416 = vmatmul.mubr.bf16.gmra.mrb[0].mxu0 %v296
      %v417 = vpop.f32.mrb[0].mxu0
      %v418 = vadd.f32 0.0, %v417
      %v419 = vpop.f32.mrb[0].mxu0
      %v420 = vpop.f32.mrb[0].mxu0
      %v421 = vadd.f32 0.0, %v420
      %v422 = vpop.f32.mrb[0].mxu0
      %423 = vmatprep.mubr.bf16.mxu0 0
      %424 = vmatmul.mubr.bf16.gmra.mrb[0].mxu0 %v297
      %v425 = vpop.f32.mrb[0].mxu0
      %v426 = vadd.f32 0.0, %v425
      %v427 = vpop.f32.mrb[0].mxu0
      %v428 = vpop.f32.mrb[0].mxu0
      %v429 = vadd.f32 0.0, %v428
      %v430 = vpop.f32.mrb[0].mxu0
      %431 = vmatprep.mubr.bf16.mxu0 0
      %432 = vmatmul.mubr.bf16.gmra.mrb[0].mxu0 %v298
      %v433 = vpop.f32.mrb[0].mxu0
      %v434 = vadd.f32 0.0, %v433
      %v435 = vpop.f32.mrb[0].mxu0
      %v436 = vpop.f32.mrb[0].mxu0
      %v437 = vadd.f32 0.0, %v436
      %v438 = vpop.f32.mrb[0].mxu0
      %439 = vmatprep.mubr.bf16.mxu0 0
      %440 = vmatmul.mubr.bf16.gmra.mrb[0].mxu0 %v299
      %v441 = vpop.f32.mrb[0].mxu0
      %v442 = vadd.f32 0.0, %v441
      %v443 = vpop.f32.mrb[0].mxu0
      %v444 = vpop.f32.mrb[0].mxu0
      %v445 = vadd.f32 0.0, %v444
      %v446 = vpop.f32.mrb[0].mxu0
      %447 = vmatprep.mubr.bf16.mxu0 0
      %448 = vmatmul.mubr.bf16.gmra.mrb[0].mxu0 %v300
      %v449 = vpop.f32.mrb[0].mxu0
      %v450 = vadd.f32 0.0, %v449
      %v451 = vpop.f32.mrb[0].mxu0
      %v452 = vpop.f32.mrb[0].mxu0
      %v453 = vadd.f32 0.0, %v452
      %v454 = vpop.f32.mrb[0].mxu0
      %455 = vmatprep.mubr.bf16.mxu0 0
      %456 = vmatmul.mubr.bf16.gmra.mrb[0].mxu0 %v301
      %v457 = vpop.f32.mrb[0].mxu0
      %v458 = vadd.f32 0.0, %v457
      %v459 = vpop.f32.mrb[0].mxu0
      %v460 = vpop.f32.mrb[0].mxu0
      %v461 = vadd.f32 0.0, %v460
      %v462 = vpop.f32.mrb[0].mxu0
      %463 = vmatprep.mubr.bf16.mxu0 0
      %464 = vmatmul.mubr.bf16.gmra.mrb[0].mxu0 %v302
      %v465 = vpop.f32.mrb[0].mxu0
      %v466 = vadd.f32 0.0, %v465
      %v467 = vpop.f32.mrb[0].mxu0
      %v468 = vpop.f32.mrb[0].mxu0
      %v469 = vadd.f32 0.0, %v468
      %v470 = vpop.f32.mrb[0].mxu0
      %471 = vmatprep.mubr.bf16.mxu0 0
      %472 = vmatmul.mubr.bf16.gmra.mrb[0].mxu0 %v303
      %v473 = vpop.f32.mrb[0].mxu0
      %v474 = vadd.f32 0.0, %v473
      %v475 = vpop.f32.mrb[0].mxu0
      %v476 = vpop.f32.mrb[0].mxu0
      %v477 = vadd.f32 0.0, %v476
      %v478 = vpop.f32.mrb[0].mxu0
      %479 = vmatprep.mubr.bf16.mxu0 0
      %480 = vmatmul.mubr.bf16.gmra.mrb[0].mxu0 %v304
      %v481 = vpop.f32.mrb[0].mxu0
      %v482 = vadd.f32 0.0, %v481
      %v483 = vpop.f32.mrb[0].mxu0
      %v484 = vpop.f32.mrb[0].mxu0
      %v485 = vadd.f32 0.0, %v484
      %v486 = vpop.f32.mrb[0].mxu0
      %487 = vmatprep.mubr.bf16.mxu0 0
      %488 = vmatmul.mubr.bf16.gmra.mrb[0].mxu0 %v305
      %v489 = vpop.f32.mrb[0].mxu0
      %v490 = vadd.f32 0.0, %v489
      %v491 = vpop.f32.mrb[0].mxu0
      %v492 = vpop.f32.mrb[0].mxu0
      %v493 = vadd.f32 0.0, %v492
      %v494 = vpop.f32.mrb[0].mxu0
      %495 = vmatprep.mubr.bf16.mxu0 0
      %496 = vmatmul.mubr.bf16.gmra.mrb[0].mxu0 %v306
      %v497 = vpop.f32.mrb[0].mxu0
      %v498 = vadd.f32 0.0, %v497
      %v499 = vpop.f32.mrb[0].mxu0
      %v500 = vpop.f32.mrb[0].mxu0
      %v501 = vadd.f32 0.0, %v500
      %v502 = vpop.f32.mrb[0].mxu0
      %503 = vmatprep.mubr.bf16.mxu0 0
      %504 = vmatmul.mubr.bf16.gmra.mrb[0].mxu0 %v307
      %v505 = vpop.f32.mrb[0].mxu0
      %v506 = vadd.f32 0.0, %v505
      %v507 = vpop.f32.mrb[0].mxu0
      %v508 = vpop.f32.mrb[0].mxu0
      %v509 = vadd.f32 0.0, %v508
      %v510 = vpop.f32.mrb[0].mxu0
      %511 = vmatprep.mubr.bf16.mxu0 0
      %512 = vmatmul.mubr.bf16.gmra.mrb[0].mxu0 %v308
      %v513 = vpop.f32.mrb[0].mxu0
      %v514 = vadd.f32 0.0, %v513
      %v515 = vpop.f32.mrb[0].mxu0
      %v516 = vpop.f32.mrb[0].mxu0
      %v517 = vadd.f32 0.0, %v516
      %v518 = vpop.f32.mrb[0].mxu0
      %519 = vmatprep.mubr.bf16.mxu0 0
      %520 = vmatmul.mubr.bf16.gmra.mrb[0].mxu0 %v309
      %v521 = vpop.f32.mrb[0].mxu0
      %v522 = vadd.f32 0.0, %v521
      %v523 = vpop.f32.mrb[0].mxu0
      %v524 = vpop.f32.mrb[0].mxu0
      %v525 = vadd.f32 0.0, %v524
      %v526 = vpop.f32.mrb[0].mxu0
      %527 = vmatprep.mubr.bf16.mxu0 0
      %528 = vmatmul.mubr.bf16.gmra.mrb[0].mxu0 %v310
      %v529 = vpop.f32.mrb[0].mxu0
      %v530 = vadd.f32 0.0, %v529
      %v531 = vpop.f32.mrb[0].mxu0
      %v532 = vpop.f32.mrb[0].mxu0
      %v533 = vadd.f32 0.0, %v532
      %v534 = vpop.f32.mrb[0].mxu0
      %535 = vdwg.mxu0
      %536 = vst [vmem:[%s177] sm:$0xff] %v410
      %537 = vst [vmem:[%s177 + $0x8] sm:$0xff] %v413
      %538 = vst [vmem:[%s177 + $0x10] sm:$0xff] %v418
      %539 = vst [vmem:[%s177 + $0x18] sm:$0xff] %v421
      %540 = vst [vmem:[%s177 + $0x20] sm:$0xff] %v426
      %541 = vst [vmem:[%s177 + $0x28] sm:$0xff] %v429
      %542 = vst [vmem:[%s177 + $0x30] sm:$0xff] %v434
      %543 = vst [vmem:[%s177 + $0x38] sm:$0xff] %v437
      %544 = vst [vmem:[%s177 + $0x40] sm:$0xff] %v442
      %545 = vst [vmem:[%s177 + $0x48] sm:$0xff] %v445
      %546 = vst [vmem:[%s177 + $0x50] sm:$0xff] %v450
      %547 = vst [vmem:[%s177 + $0x58] sm:$0xff] %v453
      %548 = vst [vmem:[%s177 + $0x60] sm:$0xff] %v458
      %549 = vst [vmem:[%s177 + $0x68] sm:$0xff] %v461
      %550 = vst [vmem:[%s177 + $0x70] sm:$0xff] %v466
      %551 = vst [vmem:[%s177 + $0x78] sm:$0xff] %v469
      %552 = vst [vmem:[%s177 + $0x80] sm:$0xff] %v474
      %553 = vst [vmem:[%s177 + $0x88] sm:$0xff] %v477
      %554 = vst [vmem:[%s177 + $0x90] sm:$0xff] %v482
      %555 = vst [vmem:[%s177 + $0x98] sm:$0xff] %v485
      %556 = vst [vmem:[%s177 + $0xa0] sm:$0xff] %v490
      %557 = vst [vmem:[%s177 + $0xa8] sm:$0xff] %v493
      %558 = vst [vmem:[%s177 + $0xb0] sm:$0xff] %v498
      %559 = vst [vmem:[%s177 + $0xb8] sm:$0xff] %v501
      %560 = vst [vmem:[%s177 + $0xc0] sm:$0xff] %v506
      %561 = vst [vmem:[%s177 + $0xc8] sm:$0xff] %v509
      %562 = vst [vmem:[%s177 + $0xd0] sm:$0xff] %v514
      %563 = vst [vmem:[%s177 + $0xd8] sm:$0xff] %v517
      %564 = vst [vmem:[%s177 + $0xe0] sm:$0xff] %v522
      %565 = vst [vmem:[%s177 + $0xe8] sm:$0xff] %v525
      %566 = vst [vmem:[%s177 + $0xf0] sm:$0xff] %v530
      %567 = vst [vmem:[%s177 + $0xf8] sm:$0xff] %v533
      %v568 = vadd.f32 %v410, %v413
      %v569 = vadd.f32 %v568, %v418
      %v570 = vadd.f32 %v569, %v421
      %v571 = vadd.f32 %v570, %v426
      %v572 = vadd.f32 %v571, %v429
      %v573 = vadd.f32 %v572, %v434
      %v574 = vadd.f32 %v573, %v437
      %v575 = vadd.f32 %v574, %v442
      %v576 = vadd.f32 %v575, %v445
      %v577 = vadd.f32 %v576, %v450
      %v578 = vadd.f32 %v577, %v453
      %v579 = vadd.f32 %v578, %v458
      %v580 = vadd.f32 %v579, %v461
      %v581 = vadd.f32 %v580, %v466
      %v582 = vadd.f32 %v581, %v469
      %v583 = vadd.f32 %v582, %v474
      %v584 = vadd.f32 %v583, %v477
      %v585 = vadd.f32 %v584, %v482
      %v586 = vadd.f32 %v585, %v485
      %v587 = vadd.f32 %v586, %v490
      %v588 = vadd.f32 %v587, %v493
      %v589 = vadd.f32 %v588, %v498
      %v590 = vadd.f32 %v589, %v501
      %v591 = vadd.f32 %v590, %v506
      %v592 = vadd.f32 %v591, %v509
      %v593 = vadd.f32 %v592, %v514
      %v594 = vadd.f32 %v593, %v517
      %v595 = vadd.f32 %v594, %v522
      %v596 = vadd.f32 %v595, %v525
      %v597 = vadd.f32 %v596, %v530
      %v598 = vadd.f32 %v597, %v533
      %v599 = vrot.slane %v598, 4
      %v600 = vadd.f32 %v598, %v599
      %v601 = vrot.slane %v600, 2
      %v602 = vadd.f32 %v600, %v601
      %v603 = vrot.slane %v602, 1
      %v604 = vadd.f32 %v602, %v603
      %605 = vst [vmem:[%s181] sm:$0x1] %v604
      %v606 = vmul.f32 %v410, %v410
      %v607 = vmul.f32 %v413, %v413
      %v608 = vmul.f32 %v418, %v418
      %v609 = vmul.f32 %v421, %v421
      %v610 = vmul.f32 %v426, %v426
      %v611 = vmul.f32 %v429, %v429
      %v612 = vmul.f32 %v434, %v434
      %v613 = vmul.f32 %v437, %v437
      %v614 = vmul.f32 %v442, %v442
      %v615 = vmul.f32 %v445, %v445
      %v616 = vmul.f32 %v450, %v450
      %v617 = vmul.f32 %v453, %v453
      %v618 = vmul.f32 %v458, %v458
      %v619 = vmul.f32 %v461, %v461
      %v620 = vmul.f32 %v466, %v466
      %v621 = vmul.f32 %v469, %v469
      %v622 = vmul.f32 %v474, %v474
      %v623 = vmul.f32 %v477, %v477
      %v624 = vmul.f32 %v482, %v482
      %v625 = vmul.f32 %v485, %v485
      %v626 = vmul.f32 %v490, %v490
      %v627 = vmul.f32 %v493, %v493
      %v628 = vmul.f32 %v498, %v498
      %v629 = vmul.f32 %v501, %v501
      %v630 = vmul.f32 %v506, %v506
      %v631 = vmul.f32 %v509, %v509
      %v632 = vmul.f32 %v514, %v514
      %v633 = vmul.f32 %v517, %v517
      %v634 = vmul.f32 %v522, %v522
      %v635 = vmul.f32 %v525, %v525
      %v636 = vmul.f32 %v530, %v530
      %v637 = vmul.f32 %v533, %v533
      %v638 = vadd.f32 %v606, %v607
      %v639 = vadd.f32 %v638, %v608
      %v640 = vadd.f32 %v639, %v609
      %v641 = vadd.f32 %v640, %v610
      %v642 = vadd.f32 %v641, %v611
      %v643 = vadd.f32 %v642, %v612
      %v644 = vadd.f32 %v643, %v613
      %v645 = vadd.f32 %v644, %v614
      %v646 = vadd.f32 %v645, %v615
      %v647 = vadd.f32 %v646, %v616
      %v648 = vadd.f32 %v647, %v617
      %v649 = vadd.f32 %v648, %v618
      %v650 = vadd.f32 %v649, %v619
      %v651 = vadd.f32 %v650, %v620
      %v652 = vadd.f32 %v651, %v621
      %v653 = vadd.f32 %v652, %v622
      %v654 = vadd.f32 %v653, %v623
      %v655 = vadd.f32 %v654, %v624
      %v656 = vadd.f32 %v655, %v625
      %v657 = vadd.f32 %v656, %v626
      %v658 = vadd.f32 %v657, %v627
      %v659 = vadd.f32 %v658, %v628
      %v660 = vadd.f32 %v659, %v629
      %v661 = vadd.f32 %v660, %v630
      %v662 = vadd.f32 %v661, %v631
      %v663 = vadd.f32 %v662, %v632
      %v664 = vadd.f32 %v663, %v633
      %v665 = vadd.f32 %v664, %v634
      %v666 = vadd.f32 %v665, %v635
      %v667 = vadd.f32 %v666, %v636
      %v668 = vadd.f32 %v667, %v637
      %v669 = vrot.slane %v668, 4
      %v670 = vadd.f32 %v668, %v669
      %v671 = vrot.slane %v670, 2
      %v672 = vadd.f32 %v670, %v671
      %v673 = vrot.slane %v672, 1
      %v674 = vadd.f32 %v672, %v673
      %675 = vst [vmem:[%s181 + $0x1] sm:$0x1] %v674
      %p676 = scmp.lt.s32.totalorder %s15, 1
      %s677 = scalar_select %p676, %s15, 1
      %s678 = smul.addr %s677, 32
      %s679 = smul.addr %s678, 8
      %s680 = scalar_lea.vmem %s2, %s679
      %p681 = scmp.lt.s32.totalorder %s15, 1
      %s682 = scalar_select %p681, %s15, 1
      %s683 = smul.addr %s682, 2
      %s684 = scalar_lea.vmem %s3, %s683
      // Predicated region
      $region29: #{vgg_block_forward.2} parent=27 // pred_check
        %p685 = pneg %p80
      $region30: #{vgg_block_forward.2} parent=27 // pred_check_branch
        %687 = sbr.rel (%p685) target = $region32
      $region31: #{vgg_block_forward.2} parent=27 // pred_region
        _
      $region32: #{vgg_block_forward.2} parent=27 // pred_fallthru
        _
      // Predicated region
      $region33: #{vgg_block_forward.2} parent=27 // pred_check
        %p688 = pneg %p106
      $region34: #{vgg_block_forward.2} parent=27 // pred_check_branch
        %690 = sbr.rel (%p688) target = $region36
      $region35: #{vgg_block_forward.2} parent=27 // pred_region
        _
      $region36: #{vgg_block_forward.2} parent=27 // pred_fallthru
        _
    $region28: #{vgg_block_forward.2} parent=5 // pred_fallthru
      _
    %p691 = scmp.le.s32.totalorder 2, %s10
    // Predicated region
    $region37: #{vgg_block_forward.2} parent=5 // pred_check
      %p692 = pneg %p691
    $region38: #{vgg_block_forward.2} parent=5 // pred_check_branch
      %694 = sbr.rel (%p692) target = $region40
    $region39: #{vgg_block_forward.2} parent=5 // pred_region
      %s695 = ssub.s32 %s10, 2
      // Predicated region
      $region41: #{vgg_block_forward.2} parent=39 // pred_check
        %p696 = pneg %p86
      $region42: #{vgg_block_forward.2} parent=39 // pred_check_branch
        %698 = sbr.rel (%p696) target = $region44
      $region43: #{vgg_block_forward.2} parent=39 // pred_region
        %p699 = scmp.lt.s32.totalorder %s16, 1
        %s700 = scalar_select %p699, %s16, 1
        %s701 = smul.addr %s700, 32
        %s702 = smul.addr %s701, 8
        %s703 = scalar_lea.vmem %s2, %s702
      $region44: #{vgg_block_forward.2} parent=39 // pred_fallthru
        _
      // Predicated region
      $region45: #{vgg_block_forward.2} parent=39 // pred_check
        %p704 = pneg %p112
      $region46: #{vgg_block_forward.2} parent=39 // pred_check_branch
        %706 = sbr.rel (%p704) target = $region48
      $region47: #{vgg_block_forward.2} parent=39 // pred_region
        %p707 = scmp.lt.s32.totalorder %s16, 1
        %s708 = scalar_select %p707, %s16, 1
        %s709 = smul.addr %s708, 2
        %s710 = scalar_lea.vmem %s3, %s709
      $region48: #{vgg_block_forward.2} parent=39 // pred_fallthru
        _
    $region40: #{vgg_block_forward.2} parent=5 // pred_fallthru
      _
  $region6: #{vgg_block_forward.2} parent=0 // loop_footer
    %s14 = sadd.s32 1, %s10
  $region7: #{vgg_block_forward.2} parent=0 // loop_footer_branch
    %9 = sbr.rel target = $region3
  $region8: #{vgg_block_forward.2} parent=0 // loop_exit
    _

// kernel: vgg_block_forward.3
$region0: #{vgg_block_forward.3}
  #allocation0 [shape = 'u32[]', space=smem, size = 0x4, offset = 0x4, fixed_abs, tag = 'smem constant byte address 0x4 - core index']
  #allocation1 [shape = 'u32[144,128]{1,0:T(1,128)}', space=vmem, size = 0x12000, scoped, tag = 'internal scratch']
  #allocation2 [shape = 'f32[18,24,128]{2,1,0:T(8,128)}', space=vmem, size = 0x36000, scoped, tag = 'scratch operand']
  %s0 = inlined_call_operand.vmem [shape: f32[2,256,128], index: 0, kind: input, shape index: {}]
  %s1 = inlined_call_operand.vmem [shape: f32[2,1,128], index: 1, kind: input, shape index: {}]
  %s2 = inlined_call_operand.vmem [shape: f32[2,1,128], index: 2, kind: input, shape index: {}]
  %s3 = inlined_call_operand.vmem [shape: bf16[1152,128], index: 3, kind: input, shape index: {}]
  %s4 = inlined_call_operand.vmem [shape: f32[2,256,128], index: 4, kind: output, shape index: {0}]
  %s5 = inlined_call_operand.vmem [shape: f32[2,2,128], index: 5, kind: output, shape index: {1}]
  %6 = xla_tuple %s4, %s5
  %s7 = sld [smem:[#allocation0]]
  $region57: #{vgg_block_forward.3} parent=0
    _
  %s9 = ssub.s32 1, %s7
  %s10 = scalar_select 0, %s9, %s7
  loop: start=0, step=1, limit=4
  $region2: #{vgg_block_forward.3} parent=0 // loop_pre_header
    _
  $region3: #{vgg_block_forward.3} parent=0 // loop_header
    %s12 = sphi 0, %s16
    %p13 = scmp.ge.s32.totalorder %s12, 4
    %s22 = sphi 0, %s24
    %s25 = sphi 0, %s22
    %s26 = sphi 0, %s25
    %s42 = sphi 0, %s26
    %s48 = sphi 0, %s50
    %s51 = sphi 0, %s48
    %s52 = sphi 0, %s51
    %s68 = sphi 0, %s52
    %s74 = sphi 0, %s76
    %s77 = sphi 0, %s74
    %s78 = sphi 0, %s77
    %s94 = sphi 0, %s78
    %s98 = sphi 0, %s98
    %s100 = sphi 0, %s98
    %s101 = sphi 0, %s100
    %s115 = sphi 0, %s101
    %s121 = sphi 0, %s123
    %s124 = sphi 0, %s121
    %s125 = sphi 0, %s124
    %s141 = sphi 0, %s125
    %s147 = sphi 0, %s149
    %s150 = sphi 0, %s147
    %s151 = sphi 0, %s150
    %s167 = sphi 0, %s151
  $region4: #{vgg_block_forward.3} parent=0 // loop_header_branch
    %15 = sbr.rel (%p13) target = $region8
  $region5: #{vgg_block_forward.3} parent=0 // loop_body
    %s17 = ssub.s32 %s12, 1
    %s18 = ssub.s32 %s12, 2
    %s19 = sadd.s32 %s12, 1
    %s20 = ssub.s32 %s12, %s19
    %p21 = scmp.eq.s32.totalorder %s20, 0
    %s23 = sadd.s32 %s22, 1
    %s24 = scalar_select %p21, %s22, %s23
    %p27 = pneg %p21
    %p28 = scmp.eq.s32.totalorder %s12, 1
    %p29 = por %p27, %p28
    %p30 = scmp.ne.s32.totalorder %s22, %s25
    %p31 = scmp.eq.s32.totalorder %s12, 0
    %p32 = por %p30, %p31
    %p33 = scmp.ne.s32.totalorder %s22, %s25
    %p34 = scmp.eq.s32.totalorder %s17, 1
    %p35 = por %p33, %p34
    %p36 = scmp.ne.s32.totalorder %s25, %s26
    %p37 = scmp.eq.s32.totalorder %s17, 0
    %p38 = por %p36, %p37
    %p39 = scmp.ne.s32.totalorder %s25, %s26
    %p40 = scmp.eq.s32.totalorder %s18, 1
    %p41 = por %p39, %p40
    %p43 = scmp.ne.s32.totalorder %s26, %s42
    %p44 = scmp.eq.s32.totalorder %s18, 0
    %p45 = por %p43, %p44
    %s46 = ssub.s32 %s12, %s19
    %p47 = scmp.eq.s32.totalorder %s46, 0
    %s49 = sadd.s32 %s48, 1
    %s50 = scalar_select %p47, %s48, %s49
    %p53 = pneg %p47
    %p54 = scmp.eq.s32.totalorder %s12, 1
    %p55 = por %p53, %p54
    %p56 = scmp.ne.s32.totalorder %s48, %s51
    %p57 = scmp.eq.s32.totalorder %s12, 0
    %p58 = por %p56, %p57
    %p59 = scmp.ne.s32.totalorder %s48, %s51
    %p60 = scmp.eq.s32.totalorder %s17, 1
    %p61 = por %p59, %p60
    %p62 = scmp.ne.s32.totalorder %s51, %s52
    %p63 = scmp.eq.s32.totalorder %s17, 0
    %p64 = por %p62, %p63
    %p65 = scmp.ne.s32.totalorder %s51, %s52
    %p66 = scmp.eq.s32.totalorder %s18, 1
    %p67 = por %p65, %p66
    %p69 = scmp.ne.s32.totalorder %s52, %s68
    %p70 = scmp.eq.s32.totalorder %s18, 0
    %p71 = por %p69, %p70
    %s72 = ssub.s32 %s12, %s19
    %p73 = scmp.eq.s32.totalorder %s72, 0
    %s75 = sadd.s32 %s74, 1
    %s76 = scalar_select %p73, %s74, %s75
    %p79 = pneg %p73
    %p80 = scmp.eq.s32.totalorder %s12, 1
    %p81 = por %p79, %p80
    %p82 = scmp.ne.s32.totalorder %s74, %s77
    %p83 = scmp.eq.s32.totalorder %s12, 0
    %p84 = por %p82, %p83
    %p85 = scmp.ne.s32.totalorder %s74, %s77
    %p86 = scmp.eq.s32.totalorder %s17, 1
    %p87 = por %p85, %p86
    %p88 = scmp.ne.s32.totalorder %s77, %s78
    %p89 = scmp.eq.s32.totalorder %s17, 0
    %p90 = por %p88, %p89
    %p91 = scmp.ne.s32.totalorder %s77, %s78
    %p92 = scmp.eq.s32.totalorder %s18, 1
    %p93 = por %p91, %p92
    %p95 = scmp.ne.s32.totalorder %s78, %s94
    %p96 = scmp.eq.s32.totalorder %s18, 0
    %p97 = por %p95, %p96
    %s99 = sadd.s32 %s98, 1
    %p102 = scmp.eq.s32.totalorder %s12, 1
    %p103 = scmp.ne.s32.totalorder %s98, %s100
    %p104 = scmp.eq.s32.totalorder %s12, 0
    %p105 = por %p103, %p104
    %p106 = scmp.ne.s32.totalorder %s98, %s100
    %p107 = scmp.eq.s32.totalorder %s17, 1
    %p108 = por %p106, %p107
    %p109 = scmp.ne.s32.totalorder %s100, %s101
    %p110 = scmp.eq.s32.totalorder %s17, 0
    %p111 = por %p109, %p110
    %p112 = scmp.ne.s32.totalorder %s100, %s101
    %p113 = scmp.eq.s32.totalorder %s18, 1
    %p114 = por %p112, %p113
    %p116 = scmp.ne.s32.totalorder %s101, %s115
    %p117 = scmp.eq.s32.totalorder %s18, 0
    %p118 = por %p116, %p117
    %s119 = ssub.s32 %s12, %s19
    %p120 = scmp.eq.s32.totalorder %s119, 0
    %s122 = sadd.s32 %s121, 1
    %s123 = scalar_select %p120, %s121, %s122
    %p126 = pneg %p120
    %p127 = scmp.eq.s32.totalorder %s12, 1
    %p128 = por %p126, %p127
    %p129 = scmp.ne.s32.totalorder %s121, %s124
    %p130 = scmp.eq.s32.totalorder %s12, 0
    %p131 = por %p129, %p130
    %p132 = scmp.ne.s32.totalorder %s121, %s124
    %p133 = scmp.eq.s32.totalorder %s17, 1
    %p134 = por %p132, %p133
    %p135 = scmp.ne.s32.totalorder %s124, %s125
    %p136 = scmp.eq.s32.totalorder %s17, 0
    %p137 = por %p135, %p136
    %p138 = scmp.ne.s32.totalorder %s124, %s125
    %p139 = scmp.eq.s32.totalorder %s18, 1
    %p140 = por %p138, %p139
    %p142 = scmp.ne.s32.totalorder %s125, %s141
    %p143 = scmp.eq.s32.totalorder %s18, 0
    %p144 = por %p142, %p143
    %s145 = ssub.s32 %s12, %s19
    %p146 = scmp.eq.s32.totalorder %s145, 0
    %s148 = sadd.s32 %s147, 1
    %s149 = scalar_select %p146, %s147, %s148
    %p152 = pneg %p146
    %p153 = scmp.eq.s32.totalorder %s12, 1
    %p154 = por %p152, %p153
    %p155 = scmp.ne.s32.totalorder %s147, %s150
    %p156 = scmp.eq.s32.totalorder %s12, 0
    %p157 = por %p155, %p156
    %p158 = scmp.ne.s32.totalorder %s147, %s150
    %p159 = scmp.eq.s32.totalorder %s17, 1
    %p160 = por %p158, %p159
    %p161 = scmp.ne.s32.totalorder %s150, %s151
    %p162 = scmp.eq.s32.totalorder %s17, 0
    %p163 = por %p161, %p162
    %p164 = scmp.ne.s32.totalorder %s150, %s151
    %p165 = scmp.eq.s32.totalorder %s18, 1
    %p166 = por %p164, %p165
    %p168 = scmp.ne.s32.totalorder %s151, %s167
    %p169 = scmp.eq.s32.totalorder %s18, 0
    %p170 = por %p168, %p169
    %p171 = scmp.le.s32.totalorder 1, %s12
    %p172 = scmp.lt.s32.totalorder %s12, 3
    %p173 = pnand %p171, %p172
    %p174 = pneg %p173
    // Predicated region
    $region9: #{vgg_block_forward.3} parent=5 // pred_check
      _
    $region10: #{vgg_block_forward.3} parent=5 // pred_check_branch
      %176 = sbr.rel (%p173) target = $region12
    $region11: #{vgg_block_forward.3} parent=5 // pred_region
      %s177 = ssub.s32 %s12, 1
      // Predicated region
      $region13: #{vgg_block_forward.3} parent=11 // pred_check
        %p178 = pneg %p111
      $region14: #{vgg_block_forward.3} parent=11 // pred_check_branch
        %180 = sbr.rel (%p178) target = $region16
      $region15: #{vgg_block_forward.3} parent=11 // pred_region
        _
      $region16: #{vgg_block_forward.3} parent=11 // pred_fallthru
        _
    $region12: #{vgg_block_forward.3} parent=5 // pred_fallthru
      _
    %p181 = scmp.lt.s32.totalorder %s12, 2
    // Predicated region
    $region17: #{vgg_block_forward.3} parent=5 // pred_check
      %p182 = pneg %p181
    $region18: #{vgg_block_forward.3} parent=5 // pred_check_branch
      %184 = sbr.rel (%p182) target = $region20
    $region19: #{vgg_block_forward.3} parent=5 // pred_region
      // Predicated region
      $region21: #{vgg_block_forward.3} parent=19 // pred_check
        %p185 = pneg %p32
      $region22: #{vgg_block_forward.3} parent=19 // pred_check_branch
        %187 = sbr.rel (%p185) target = $region24
      $region23: #{vgg_block_forward.3} parent=19 // pred_region
        %p188 = scmp.lt.s32.totalorder %s12, 1
        %s189 = scalar_select %p188, %s12, 1
        %s190 = smul.addr %s189, 32
        %s191 = smul.addr %s190, 8
        %s192 = scalar_lea.vmem %s0, %s191
      $region24: #{vgg_block_forward.3} parent=19 // pred_fallthru
        _
      // Predicated region
      $region25: #{vgg_block_forward.3} parent=19 // pred_check
        %p193 = pneg %p58
      $region26: #{vgg_block_forward.3} parent=19 // pred_check_branch
        %195 = sbr.rel (%p193) target = $region28
      $region27: #{vgg_block_forward.3} parent=19 // pred_region
        %p196 = scmp.lt.s32.totalorder %s12, 1
        %s197 = scalar_select %p196, %s12, 1
        %s198 = scalar_lea.vmem %s1, %s197
      $region28: #{vgg_block_forward.3} parent=19 // pred_fallthru
        _
      // Predicated region
      $region29: #{vgg_block_forward.3} parent=19 // pred_check
        %p199 = pneg %p84
      $region30: #{vgg_block_forward.3} parent=19 // pred_check_branch
        %201 = sbr.rel (%p199) target = $region32
      $region31: #{vgg_block_forward.3} parent=19 // pred_region
        %p202 = scmp.lt.s32.totalorder %s12, 1
        %s203 = scalar_select %p202, %s12, 1
        %s204 = scalar_lea.vmem %s2, %s203
      $region32: #{vgg_block_forward.3} parent=19 // pred_fallthru
        _
    $region20: #{vgg_block_forward.3} parent=5 // pred_fallthru
      _
    %p205 = scmp.le.s32.totalorder 1, %s12
    %p206 = scmp.lt.s32.totalorder %s12, 3
    %p207 = pnand %p205, %p206
    %p208 = pneg %p207
    // Predicated region
    $region33: #{vgg_block_forward.3} parent=5 // pred_check
      _
    $region34: #{vgg_block_forward.3} parent=5 // pred_check_branch
      %210 = sbr.rel (%p207) target = $region36
    $region35: #{vgg_block_forward.3} parent=5 // pred_region
      %s211 = ssub.s32 %s12, 1
      %p212 = scmp.lt.s32.totalorder %s17, 1
      %s213 = scalar_select %p212, %s17, 1
      %s214 = smul.addr %s213, 32
      %s215 = smul.addr %s214, 8
      %s216 = scalar_lea.vmem %s0, %s215
      %p217 = pneg %p38
      %p218 = pneg %p35
      %p219 = scmp.lt.s32.totalorder %s17, 1
      %s220 = scalar_select %p219, %s17, 1
      %s221 = scalar_lea.vmem %s1, %s220
      %p222 = pneg %p64
      %p223 = pneg %p61
      %p224 = scmp.lt.s32.totalorder %s17, 1
      %s225 = scalar_select %p224, %s17, 1
      %s226 = scalar_lea.vmem %s2, %s225
      %p227 = pneg %p90
      %p228 = pneg %p87
      %p229 = pneg %p111
      %p230 = pneg %p108
      %p231 = pneg %p137
      %p232 = pneg %p134
      %p233 = scmp.lt.s32.totalorder %s17, 1
      %s234 = scalar_select %p233, %s17, 1
      %s235 = smul.addr %s234, 32
      %s236 = smul.addr %s235, 8
      %s237 = scalar_lea.vmem %s4, %s236
      %p238 = pneg %p163
      %p239 = pneg %p160
      %p240 = scmp.lt.s32.totalorder %s17, 1
      %s241 = scalar_select %p240, %s17, 1
      %s242 = smul.addr %s241, 2
      %s243 = scalar_lea.vmem %s5, %s242
      %p244 = scmp.lt.s32.totalorder %s17, 1
      %s245 = scalar_select %p244, %s17, 1
      %s246 = smul.addr %s245, 32
      %s247 = smul.addr %s246, 8
      %s248 = scalar_lea.vmem %s0, %s247
      %p249 = scmp.lt.s32.totalorder %s17, 1
      %s250 = scalar_select %p249, %s17, 1
      %s251 = scalar_lea.vmem %s1, %s250
      %p252 = scmp.lt.s32.totalorder %s17, 1
      %s253 = scalar_select %p252, %s17, 1
      %s254 = scalar_lea.vmem %s2, %s253
      %p255 = scmp.lt.s32.totalorder %s17, 1
      %s256 = scalar_select %p255, %s17, 1
      %s257 = smul.addr %s256, 32
      %s258 = smul.addr %s257, 8
      %s259 = scalar_lea.vmem %s4, %s258
      %p260 = scmp.lt.s32.totalorder %s17, 1
      %s261 = scalar_select %p260, %s17, 1
      %s262 = smul.addr %s261, 2
      %s263 = scalar_lea.vmem %s5, %s262
      %v265 = vld [vmem:[%s248] sm:$0xff]
      %v266 = vld [vmem:[%s248 + $0x8] sm:$0xff]
      %v267 = vld [vmem:[%s248 + $0x10] sm:$0xff]
      %v268 = vld [vmem:[%s248 + $0x18] sm:$0xff]
      %v269 = vld [vmem:[%s248 + $0x20] sm:$0xff]
      %v270 = vld [vmem:[%s248 + $0x28] sm:$0xff]
      %v271 = vld [vmem:[%s248 + $0x30] sm:$0xff]
      %v272 = vld [vmem:[%s248 + $0x38] sm:$0xff]
      %v273 = vld [vmem:[%s248 + $0x40] sm:$0xff]
      %v274 = vld [vmem:[%s248 + $0x48] sm:$0xff]
      %v275 = vld [vmem:[%s248 + $0x50] sm:$0xff]
      %v276 = vld [vmem:[%s248 + $0x58] sm:$0xff]
      %v277 = vld [vmem:[%s248 + $0x60] sm:$0xff]
      %v278 = vld [vmem:[%s248 + $0x68] sm:$0xff]
      %v279 = vld [vmem:[%s248 + $0x70] sm:$0xff]
      %v280 = vld [vmem:[%s248 + $0x78] sm:$0xff]
      %v281 = vld [vmem:[%s248 + $0x80] sm:$0xff]
      %v282 = vld [vmem:[%s248 + $0x88] sm:$0xff]
      %v283 = vld [vmem:[%s248 + $0x90] sm:$0xff]
      %v284 = vld [vmem:[%s248 + $0x98] sm:$0xff]
      %v285 = vld [vmem:[%s248 + $0xa0] sm:$0xff]
      %v286 = vld [vmem:[%s248 + $0xa8] sm:$0xff]
      %v287 = vld [vmem:[%s248 + $0xb0] sm:$0xff]
      %v288 = vld [vmem:[%s248 + $0xb8] sm:$0xff]
      %v289 = vld [vmem:[%s248 + $0xc0] sm:$0xff]
      %v290 = vld [vmem:[%s248 + $0xc8] sm:$0xff]
      %v291 = vld [vmem:[%s248 + $0xd0] sm:$0xff]
      %v292 = vld [vmem:[%s248 + $0xd8] sm:$0xff]
      %v293 = vld [vmem:[%s248 + $0xe0] sm:$0xff]
      %v294 = vld [vmem:[%s248 + $0xe8] sm:$0xff]
      %v295 = vld [vmem:[%s248 + $0xf0] sm:$0xff]
      %v296 = vld [vmem:[%s248 + $0xf8] sm:$0xff]
      %v297 = vld [vmem:[%s251] sm:$0x1]
      %v299 = vlaneseq
      %v300 = vshrl.u32 %v299, 7
      %v301 = vsub.s32 0, %v300
      %v302 = vrot.slane %v297, %v301
      %v304 = vmul.f32 %v265, %v302
      %v305 = vmul.f32 %v266, %v302
      %v306 = vmul.f32 %v267, %v302
      %v307 = vmul.f32 %v268, %v302
      %v308 = vmul.f32 %v269, %v302
      %v309 = vmul.f32 %v270, %v302
      %v310 = vmul.f32 %v271, %v302
      %v311 = vmul.f32 %v272, %v302
      %v312 = vmul.f32 %v273, %v302
      %v313 = vmul.f32 %v274, %v302
      %v314 = vmul.f32 %v275, %v302
      %v315 = vmul.f32 %v276, %v302
      %v316 = vmul.f32 %v277, %v302
      %v317 = vmul.f32 %v278, %v302
      %v318 = vmul.f32 %v279, %v302
      %v319 = vmul.f32 %v280, %v302
      %v320 = vmul.f32 %v281, %v302
      %v321 = vmul.f32 %v282, %v302
      %v322 = vmul.f32 %v283, %v302
      %v323 = vmul.f32 %v284, %v302
      %v324 = vmul.f32 %v285, %v302
      %v325 = vmul.f32 %v286, %v302
      %v326 = vmul.f32 %v287, %v302
      %v327 = vmul.f32 %v288, %v302
      %v328 = vmul.f32 %v289, %v302
      %v329 = vmul.f32 %v290, %v302
      %v330 = vmul.f32 %v291, %v302
      %v331 = vmul.f32 %v292, %v302
      %v332 = vmul.f32 %v293, %v302
      %v333 = vmul.f32 %v294, %v302
      %v334 = vmul.f32 %v295, %v302
      %v335 = vmul.f32 %v296, %v302
      %v336 = vld [vmem:[%s254] sm:$0x1]
      %v338 = vlaneseq
      %v339 = vshrl.u32 %v338, 7
      %v340 = vsub.s32 0, %v339
      %v341 = vrot.slane %v336, %v340
      %v343 = vadd.f32 %v304, %v341
      %v344 = vadd.f32 %v305, %v341
      %v345 = vadd.f32 %v306, %v341
      %v346 = vadd.f32 %v307, %v341
      %v347 = vadd.f32 %v308, %v341
      %v348 = vadd.f32 %v309, %v341
      %v349 = vadd.f32 %v310, %v341
      %v350 = vadd.f32 %v311, %v341
      %v351 = vadd.f32 %v312, %v341
      %v352 = vadd.f32 %v313, %v341
      %v353 = vadd.f32 %v314, %v341
      %v354 = vadd.f32 %v315, %v341
      %v355 = vadd.f32 %v316, %v341
      %v356 = vadd.f32 %v317, %v341
      %v357 = vadd.f32 %v318, %v341
      %v358 = vadd.f32 %v319, %v341
      %v359 = vadd.f32 %v320, %v341
      %v360 = vadd.f32 %v321, %v341
      %v361 = vadd.f32 %v322, %v341
      %v362 = vadd.f32 %v323, %v341
      %v363 = vadd.f32 %v324, %v341
      %v364 = vadd.f32 %v325, %v341
      %v365 = vadd.f32 %v326, %v341
      %v366 = vadd.f32 %v327, %v341
      %v367 = vadd.f32 %v328, %v341
      %v368 = vadd.f32 %v329, %v341
      %v369 = vadd.f32 %v330, %v341
      %v370 = vadd.f32 %v331, %v341
      %v371 = vadd.f32 %v332, %v341
      %v372 = vadd.f32 %v333, %v341
      %v373 = vadd.f32 %v334, %v341
      %v374 = vadd.f32 %v335, %v341
      %v375 = vmax.f32 %v343, 0.0
      %v376 = vmax.f32 %v344, 0.0
      %v377 = vmax.f32 %v345, 0.0
      %v378 = vmax.f32 %v346, 0.0
      %v379 = vmax.f32 %v347, 0.0
      %v380 = vmax.f32 %v348, 0.0
      %v381 = vmax.f32 %v349, 0.0
      %v382 = vmax.f32 %v350, 0.0
      %v383 = vmax.f32 %v351, 0.0
      %v384 = vmax.f32 %v352, 0.0
      %v385 = vmax.f32 %v353, 0.0
      %v386 = vmax.f32 %v354, 0.0
      %v387 = vmax.f32 %v355, 0.0
      %v388 = vmax.f32 %v356, 0.0
      %v389 = vmax.f32 %v357, 0.0
      %v390 = vmax.f32 %v358, 0.0
      %v391 = vmax.f32 %v359, 0.0
      %v392 = vmax.f32 %v360, 0.0
      %v393 = vmax.f32 %v361, 0.0
      %v394 = vmax.f32 %v362, 0.0
      %v395 = vmax.f32 %v363, 0.0
      %v396 = vmax.f32 %v364, 0.0
      %v397 = vmax.f32 %v365, 0.0
      %v398 = vmax.f32 %v366, 0.0
      %v399 = vmax.f32 %v367, 0.0
      %v400 = vmax.f32 %v368, 0.0
      %v401 = vmax.f32 %v369, 0.0
      %v402 = vmax.f32 %v370, 0.0
      %v403 = vmax.f32 %v371, 0.0
      %v404 = vmax.f32 %v372, 0.0
      %v405 = vmax.f32 %v373, 0.0
      %v406 = vmax.f32 %v374, 0.0
      %407 = vst [vmem:[#allocation2] sm:$0xff] 0.0
      %408 = vst [vmem:[#allocation2 + $0x8] sm:$0xff] 0.0
      %409 = vst [vmem:[#allocation2 + $0x10] sm:$0xff] 0.0
      %s410 = scalar_lea.vmem [#allocation2], 408
      %411 = vst [vmem:[%s410] sm:$0xff] 0.0
      %412 = vst [vmem:[%s410 + $0x8] sm:$0xff] 0.0
      %413 = vst [vmem:[%s410 + $0x10] sm:$0xff] 0.0
      %414 = vst [vmem:[#allocation2] sm:$0x1] 0.0
      %415 = vst [vmem:[#allocation2 + $0x18] sm:$0x1] 0.0
      %416 = vst [vmem:[#allocation2 + $0x30] sm:$0x1] 0.0
      %417 = vst [vmem:[#allocation2 + $0x48] sm:$0x1] 0.0
      %418 = vst [vmem:[#allocation2 + $0x60] sm:$0x1] 0.0
      %419 = vst [vmem:[#allocation2 + $0x78] sm:$0x1] 0.0
      %420 = vst [vmem:[#allocation2 + $0x90] sm:$0x1] 0.0
      %421 = vst [vmem:[#allocation2 + $0xa8] sm:$0x1] 0.0
      %422 = vst [vmem:[#allocation2 + $0xc0] sm:$0x1] 0.0
      %423 = vst [vmem:[#allocation2 + $0xd8] sm:$0x1] 0.0
      %424 = vst [vmem:[#allocation2 + $0xf0] sm:$0x1] 0.0
      %425 = vst [vmem:[#allocation2 + $0x108] sm:$0x1] 0.0
      %426 = vst [vmem:[#allocation2 + $0x120] sm:$0x1] 0.0
      %427 = vst [vmem:[#allocation2 + $0x138] sm:$0x1] 0.0
      %428 = vst [vmem:[#allocation2 + $0x150] sm:$0x1] 0.0
      %429 = vst [vmem:[#allocation2 + $0x168] sm:$0x1] 0.0
      %430 = vst [vmem:[#allocation2 + $0x180] sm:$0x1] 0.0
      %431 = vst [vmem:[#allocation2 + $0x198] sm:$0x1] 0.0
      %432 = vst [vmem:[#allocation2 + $0x11] sm:$0x1] 0.0
      %433 = vst [vmem:[#allocation2 + $0x29] sm:$0x1] 0.0
      %434 = vst [vmem:[#allocation2 + $0x41] sm:$0x1] 0.0
      %435 = vst [vmem:[#allocation2 + $0x59] sm:$0x1] 0.0
      %436 = vst [vmem:[#allocation2 + $0x71] sm:$0x1] 0.0
      %437 = vst [vmem:[#allocation2 + $0x89] sm:$0x1] 0.0
      %438 = vst [vmem:[#allocation2 + $0xa1] sm:$0x1] 0.0
      %439 = vst [vmem:[#allocation2 + $0xb9] sm:$0x1] 0.0
      %440 = vst [vmem:[#allocation2 + $0xd1] sm:$0x1] 0.0
      %441 = vst [vmem:[#allocation2 + $0xe9] sm:$0x1] 0.0
      %442 = vst [vmem:[#allocation2 + $0x101] sm:$0x1] 0.0
      %443 = vst [vmem:[#allocation2 + $0x119] sm:$0x1] 0.0
      %444 = vst [vmem:[#allocation2 + $0x131] sm:$0x1] 0.0
      %445 = vst [vmem:[#allocation2 + $0x149] sm:$0x1] 0.0
      %446 = vst [vmem:[#allocation2 + $0x161] sm:$0x1] 0.0
      %447 = vst [vmem:[#allocation2 + $0x179] sm:$0x1] 0.0
      %448 = vst [vmem:[#allocation2 + $0x191] sm:$0x1] 0.0
      %449 = vst [vmem:[#allocation2 + $0x1a9] sm:$0x1] 0.0
      %s450 = scalar_lea.vmem [#allocation2], 24
      %451 = vst [vmem:[%s450 + $0x1] sm:$0xff] %v375
      %452 = vst [vmem:[%s450 + $0x9] sm:$0xff] %v376
      %453 = vst [vmem:[%s450 + $0x19] sm:$0xff] %v377
      %454 = vst [vmem:[%s450 + $0x21] sm:$0xff] %v378
      %455 = vst [vmem:[%s450 + $0x31] sm:$0xff] %v379
      %456 = vst [vmem:[%s450 + $0x39] sm:$0xff] %v380
      %457 = vst [vmem:[%s450 + $0x49] sm:$0xff] %v381
      %458 = vst [vmem:[%s450 + $0x51] sm:$0xff] %v382
      %459 = vst [vmem:[%s450 + $0x61] sm:$0xff] %v383
      %460 = vst [vmem:[%s450 + $0x69] sm:$0xff] %v384
      %461 = vst [vmem:[%s450 + $0x79] sm:$0xff] %v385
      %462 = vst [vmem:[%s450 + $0x81] sm:$0xff] %v386
      %463 = vst [vmem:[%s450 + $0x91] sm:$0xff] %v387
      %464 = vst [vmem:[%s450 + $0x99] sm:$0xff] %v388
      %465 = vst [vmem:[%s450 + $0xa9] sm:$0xff] %v389
      %466 = vst [vmem:[%s450 + $0xb1] sm:$0xff] %v390
      %467 = vst [vmem:[%s450 + $0xc1] sm:$0xff] %v391
      %468 = vst [vmem:[%s450 + $0xc9] sm:$0xff] %v392
      %469 = vst [vmem:[%s450 + $0xd9] sm:$0xff] %v393
      %470 = vst [vmem:[%s450 + $0xe1] sm:$0xff] %v394
      %471 = vst [vmem:[%s450 + $0xf1] sm:$0xff] %v395
      %472 = vst [vmem:[%s450 + $0xf9] sm:$0xff] %v396
      %473 = vst [vmem:[%s450 + $0x109] sm:$0xff] %v397
      %474 = vst [vmem:[%s450 + $0x111] sm:$0xff] %v398
      %475 = vst [vmem:[%s450 + $0x121] sm:$0xff] %v399
      %476 = vst [vmem:[%s450 + $0x129] sm:$0xff] %v400
      %477 = vst [vmem:[%s450 + $0x139] sm:$0xff] %v401
      %478 = vst [vmem:[%s450 + $0x141] sm:$0xff] %v402
      %479 = vst [vmem:[%s450 + $0x151] sm:$0xff] %v403
      %480 = vst [vmem:[%s450 + $0x159] sm:$0xff] %v404
      %481 = vst [vmem:[%s450 + $0x169] sm:$0xff] %v405
      %482 = vst [vmem:[%s450 + $0x171] sm:$0xff] %v406
      %v483 = vld [vmem:[#allocation2] sm:$0xff]
      %v484 = vld [vmem:[#allocation2 + $0x8] sm:$0xff]
      %v485 = vld [vmem:[#allocation2 + $0x18] sm:$0xff]
      %v486 = vld [vmem:[#allocation2 + $0x20] sm:$0xff]
      %v487 = vld [vmem:[#allocation2 + $0x30] sm:$0xff]
      %v488 = vld [vmem:[#allocation2 + $0x38] sm:$0xff]
      %v489 = vld [vmem:[#allocation2 + $0x48] sm:$0xff]
      %v490 = vld [vmem:[#allocation2 + $0x50] sm:$0xff]
      %v491 = vld [vmem:[#allocation2 + $0x60] sm:$0xff]
      %v492 = vld [vmem:[#allocation2 + $0x68] sm:$0xff]
      %v493 = vld [vmem:[#allocation2 + $0x78] sm:$0xff]
      %v494 = vld [vmem:[#allocation2 + $0x80] sm:$0xff]
      %v495 = vld [vmem:[#allocation2 + $0x90] sm:$0xff]
      %v496 = vld [vmem:[#allocation2 + $0x98] sm:$0xff]
      %v497 = vld [vmem:[#allocation2 + $0xa8] sm:$0xff]
      %v498 = vld [vmem:[#allocation2 + $0xb0] sm:$0xff]
      %v499 = vld [vmem:[#allocation2 + $0xc0] sm:$0xff]
      %v500 = vld [vmem:[#allocation2 + $0xc8] sm:$0xff]
      %v501 = vld [vmem:[#allocation2 + $0xd8] sm:$0xff]
      %v502 = vld [vmem:[#allocation2 + $0xe0] sm:$0xff]
      %v503 = vld [vmem:[#allocation2 + $0xf0] sm:$0xff]
      %v504 = vld [vmem:[#allocation2 + $0xf8] sm:$0xff]
      %v505 = vld [vmem:[#allocation2 + $0x108] sm:$0xff]
      %v506 = vld [vmem:[#allocation2 + $0x110] sm:$0xff]
      %v507 = vld [vmem:[#allocation2 + $0x120] sm:$0xff]
      %v508 = vld [vmem:[#allocation2 + $0x128] sm:$0xff]
      %v509 = vld [vmem:[#allocation2 + $0x138] sm:$0xff]
      %v510 = vld [vmem:[#allocation2 + $0x140] sm:$0xff]
      %v511 = vld [vmem:[#allocation2 + $0x150] sm:$0xff]
      %v512 = vld [vmem:[#allocation2 + $0x158] sm:$0xff]
      %v513 = vld [vmem:[#allocation2 + $0x168] sm:$0xff]
      %v514 = vld [vmem:[#allocation2 + $0x170] sm:$0xff]
      %v515 = vpack.c.bf16 %v484, %v483
      %v516 = vpack.c.bf16 %v486, %v485
      %v517 = vpack.c.bf16 %v488, %v487
      %v518 = vpack.c.bf16 %v490, %v489
      %v519 = vpack.c.bf16 %v492, %v491
      %v520 = vpack.c.bf16 %v494, %v493
      %v521 = vpack.c.bf16 %v496, %v495
      %v522 = vpack.c.bf16 %v498, %v497
      %v523 = vpack.c.bf16 %v500, %v499
      %v524 = vpack.c.bf16 %v502, %v501
      %v525 = vpack.c.bf16 %v504, %v503
      %v526 = vpack.c.bf16 %v506, %v505
      %v527 = vpack.c.bf16 %v508, %v507
      %v528 = vpack.c.bf16 %v510, %v509
      %v529 = vpack.c.bf16 %v512, %v511
      %v530 = vpack.c.bf16 %v514, %v513
      %v531 = vld [vmem:[%s3] sm:$0xf]
      %v532 = vld [vmem:[%s3 + $0x4] sm:$0xf]
      %v533 = vld [vmem:[%s3 + $0x8] sm:$0xf]
      %v534 = vld [vmem:[%s3 + $0xc] sm:$0xf]
      %v535 = vld [vmem:[%s3 + $0x10] sm:$0xf]
      %v536 = vld [vmem:[%s3 + $0x14] sm:$0xf]
      %v537 = vld [vmem:[%s3 + $0x18] sm:$0xf]
      %v538 = vld [vmem:[%s3 + $0x1c] sm:$0xf]
      %v539 = vld [vmem:[%s3 + $0x20] sm:$0xf]
      %v540 = vld [vmem:[%s3 + $0x24] sm:$0xf]
      %v541 = vld [vmem:[%s3 + $0x28] sm:$0xf]
      %v542 = vld [vmem:[%s3 + $0x2c] sm:$0xf]
      %v543 = vld [vmem:[%s3 + $0x30] sm:$0xf]
      %v544 = vld [vmem:[%s3 + $0x34] sm:$0xf]
      %v545 = vld [vmem:[%s3 + $0x38] sm:$0xf]
      %v546 = vld [vmem:[%s3 + $0x3c] sm:$0xf]
      %v547 = vld [vmem:[#allocation2 + $0x1] sm:$0xff]
      %v548 = vld [vmem:[#allocation2 + $0x9] sm:$0xff]
      %v549 = vld [vmem:[#allocation2 + $0x19] sm:$0xff]
      %v550 = vld [vmem:[#allocation2 + $0x21] sm:$0xff]
      %v551 = vld [vmem:[#allocation2 + $0x31] sm:$0xff]
      %v552 = vld [vmem:[#allocation2 + $0x39] sm:$0xff]
      %v553 = vld [vmem:[#allocation2 + $0x49] sm:$0xff]
      %v554 = vld [vmem:[#allocation2 + $0x51] sm:$0xff]
      %v555 = vld [vmem:[#allocation2 + $0x61] sm:$0xff]
      %v556 = vld [vmem:[#allocation2 + $0x69] sm:$0xff]
      %v557 = vld [vmem:[#allocation2 + $0x79] sm:$0xff]
      %v558 = vld [vmem:[#allocation2 + $0x81] sm:$0xff]
      %v559 = vld [vmem:[#allocation2 + $0x91] sm:$0xff]
      %v560 = vld [vmem:[#allocation2 + $0x99] sm:$0xff]
      %v561 = vld [vmem:[#allocation2 + $0xa9] sm:$0xff]
      %v562 = vld [vmem:[#allocation2 + $0xb1] sm:$0xff]
      %v563 = vld [vmem:[#allocation2 + $0xc1] sm:$0xff]
      %v564 = vld [vmem:[#allocation2 + $0xc9] sm:$0xff]
      %v565 = vld [vmem:[#allocation2 + $0xd9] sm:$0xff]
      %v566 = vld [vmem:[#allocation2 + $0xe1] sm:$0xff]
      %v567 = vld [vmem:[#allocation2 + $0xf1] sm:$0xff]
      %v568 = vld [vmem:[#allocation2 + $0xf9] sm:$0xff]
      %v569 = vld [vmem:[#allocation2 + $0x109] sm:$0xff]
      %v570 = vld [vmem:[#allocation2 + $0x111] sm:$0xff]
      %v571 = vld [vmem:[#allocation2 + $0x121] sm:$0xff]
      %v572 = vld [vmem:[#allocation2 + $0x129] sm:$0xff]
      %v573 = vld [vmem:[#allocation2 + $0x139] sm:$0xff]
      %v574 = vld [vmem:[#allocation2 + $0x141] sm:$0xff]
      %v575 = vld [vmem:[#allocation2 + $0x151] sm:$0xff]
      %v576 = vld [vmem:[#allocation2 + $0x159] sm:$0xff]
      %v577 = vld [vmem:[#allocation2 + $0x169] sm:$0xff]
      %v578 = vld [vmem:[#allocation2 + $0x171] sm:$0xff]
      %v579 = vpack.c.bf16 %v548, %v547
      %v580 = vpack.c.bf16 %v550, %v549
      %v581 = vpack.c.bf16 %v552, %v551
      %v582 = vpack.c.bf16 %v554, %v553
      %v583 = vpack.c.bf16 %v556, %v555
      %v584 = vpack.c.bf16 %v558, %v557
      %v585 = vpack.c.bf16 %v560, %v559
      %v586 = vpack.c.bf16 %v562, %v561
      %v587 = vpack.c.bf16 %v564, %v563
      %v588 = vpack.c.bf16 %v566, %v565
      %v589 = vpack.c.bf16 %v568, %v567
      %v590 = vpack.c.bf16 %v570, %v569
      %v591 = vpack.c.bf16 %v572, %v571
      %v592 = vpack.c.bf16 %v574, %v573
      %v593 = vpack.c.bf16 %v576, %v575
      %v594 = vpack.c.bf16 %v578, %v577
      %v595 = vld [vmem:[%s3 + $0x40] sm:$0xf]
      %v596 = vld [vmem:[%s3 + $0x44] sm:$0xf]
      %v597 = vld [vmem:[%s3 + $0x48] sm:$0xf]
      %v598 = vld [vmem:[%s3 + $0x4c] sm:$0xf]
      %v599 = vld [vmem:[%s3 + $0x50] sm:$0xf]
      %v600 = vld [vmem:[%s3 + $0x54] sm:$0xf]
      %v601 = vld [vmem:[%s3 + $0x58] sm:$0xf]
      %v602 = vld [vmem:[%s3 + $0x5c] sm:$0xf]
      %v603 = vld [vmem:[%s3 + $0x60] sm:$0xf]
      %v604 = vld [vmem:[%s3 + $0x64] sm:$0xf]
      %v605 = vld [vmem:[%s3 + $0x68] sm:$0xf]
      %v606 = vld [vmem:[%s3 + $0x6c] sm:$0xf]
      %v607 = vld [vmem:[%s3 + $0x70] sm:$0xf]
      %v608 = vld [vmem:[%s3 + $0x74] sm:$0xf]
      %v609 = vld [vmem:[%s3 + $0x78] sm:$0xf]
      %v610 = vld [vmem:[%s3 + $0x7c] sm:$0xf]
      %v627 = vunpack.c.l.b16 %v595
      %v628 = vunpack.c.l.b16 %v596
      %v629 = vunpack.c.l.b16 %v597
      %v630 = vunpack.c.l.b16 %v598
      %v631 = vunpack.c.l.b16 %v599
      %v632 = vunpack.c.l.b16 %v600
      %v633 = vunpack.c.l.b16 %v601
      %v634 = vunpack.c.l.b16 %v602
      %v635 = vunpack.c.l.b16 %v603
      %v636 = vunpack.c.l.b16 %v604
      %v637 = vunpack.c.l.b16 %v605
      %v638 = vunpack.c.l.b16 %v606
      %v639 = vunpack.c.l.b16 %v607
      %v640 = vunpack.c.l.b16 %v608
      %v641 = vunpack.c.l.b16 %v609
      %v642 = vunpack.c.l.b16 %v610
      %v643 = vpack.c.b16 %v628, %v627
      %v644 = vpack.c.b16 %v630, %v629
      %v645 = vpack.c.b16 %v632, %v631
      %v646 = vpack.c.b16 %v634, %v633
      %v647 = vpack.c.b16 %v636, %v635
      %v648 = vpack.c.b16 %v638, %v637
      %v649 = vpack.c.b16 %v640, %v639
      %v650 = vpack.c.b16 %v642, %v641
      %659 = vmatprep.subr.bf16.mxu0 0
      %660 = vmatpush1.bf16.msra.mxu0 %v643
      %661 = vmatprep.subr.bf16.mxu0 0
      %662 = vmatpush1.bf16.msra.mxu0 %v644
      %663 = vmatprep.subr.bf16.mxu0 0
      %664 = vmatpush1.bf16.msra.mxu0 %v645
      %665 = vmatprep.subr.bf16.mxu0 0
      %666 = vmatpush1.bf16.msra.mxu0 %v646
      %667 = vmatprep.subr.bf16.mxu0 0
      %668 = vmatpush1.bf16.msra.mxu0 %v647
      %669 = vmatprep.subr.bf16.mxu0 0
      %670 = vmatpush1.bf16.msra.mxu0 %v648
      %671 = vmatprep.subr.bf16.mxu0 0
      %672 = vmatpush1.bf16.msra.mxu0 %v649
      %673 = vmatprep.subr.bf16.mxu0 0
      %674 = vmatpush1.bf16.msra.mxu0 %v650
      %675 = vmatprep.subr.bf16.mxu0 0
      %676 = vmatpush1.bf16.msra.mxu0 0
      %677 = vmatprep.subr.bf16.mxu0 0
      %678 = vmatpush1.bf16.msra.mxu0 0
      %679 = vmatprep.subr.bf16.mxu0 0
      %680 = vmatpush1.bf16.msra.mxu0 0
      %681 = vmatprep.subr.bf16.mxu0 0
      %682 = vmatpush1.bf16.msra.mxu0 0
      %683 = vmatprep.subr.bf16.mxu0 0
      %684 = vmatpush1.bf16.msra.mxu0 0
      %685 = vmatprep.subr.bf16.mxu0 0
      %686 = vmatpush1.bf16.msra.mxu0 0
      %687 = vmatprep.subr.bf16.mxu0 0
      %688 = vmatpush1.bf16.msra.mxu0 0
      %689 = vmatprep.subr.bf16.mxu0 0
      %690 = vmatpush1.bf16.msra.mxu0 0
      %691 = vmatprep.mubr.bf16.mxu0 0
      %692 = vmatmul.mubr.bf16.gmra.mrb[0].mxu0 %v579
      %v693 = vpop.f32.mrb[0].mxu0
      %v694 = vadd.f32 0.0, %v693
      %v695 = vpop.f32.mrb[0].mxu0
      %v696 = vpop.f32.mrb[0].mxu0
      %v697 = vadd.f32 0.0, %v696
      %v698 = vpop.f32.mrb[0].mxu0
      %699 = vmatprep.mubr.bf16.mxu0 0
      %700 = vmatmul.mubr.bf16.gmra.mrb[0].mxu0 %v580
      %v701 = vpop.f32.mrb[0].mxu0
      %v702 = vadd.f32 0.0, %v701
      %v703 = vpop.f32.mrb[0].mxu0
      %v704 = vpop.f32.mrb[0].mxu0
      %v705 = vadd.f32 0.0, %v704
      %v706 = vpop.f32.mrb[0].mxu0
      %707 = vmatprep.mubr.bf16.mxu0 0
      %708 = vmatmul.mubr.bf16.gmra.mrb[0].mxu0 %v581
      %v709 = vpop.f32.mrb[0].mxu0
      %v710 = vadd.f32 0.0, %v709
      %v711 = vpop.f32.mrb[0].mxu0
      %v712 = vpop.f32.mrb[0].mxu0
      %v713 = vadd.f32 0.0, %v712
      %v714 = vpop.f32.mrb[0].mxu0
      %715 = vmatprep.mubr.bf16.mxu0 0
      %716 = vmatmul.mubr.bf16.gmra.mrb[0].mxu0 %v582
      %v717 = vpop.f32.mrb[0].mxu0
      %v718 = vadd.f32 0.0, %v717
      %v719 = vpop.f32.mrb[0].mxu0
      %v720 = vpop.f32.mrb[0].mxu0
      %v721 = vadd.f32 0.0, %v720
      %v722 = vpop.f32.mrb[0].mxu0
      %723 = vmatprep.mubr.bf16.mxu0 0
      %724 = vmatmul.mubr.bf16.gmra.mrb[0].mxu0 %v583
      %v725 = vpop.f32.mrb[0].mxu0
      %v726 = vadd.f32 0.0, %v725
      %v727 = vpop.f32.mrb[0].mxu0
      %v728 = vpop.f32.mrb[0].mxu0
      %v729 = vadd.f32 0.0, %v728
      %v730 = vpop.f32.mrb[0].mxu0
      %731 = vmatprep.mubr.bf16.mxu0 0
      %732 = vmatmul.mubr.bf16.gmra.mrb[0].mxu0 %v584
      %v733 = vpop.f32.mrb[0].mxu0
      %v734 = vadd.f32 0.0, %v733
      %v735 = vpop.f32.mrb[0].mxu0
      %v736 = vpop.f32.mrb[0].mxu0
      %v737 = vadd.f32 0.0, %v736
      %v738 = vpop.f32.mrb[0].mxu0
      %739 = vmatprep.mubr.bf16.mxu0 0
      %740 = vmatmul.mubr.bf16.gmra.mrb[0].mxu0 %v585
      %v741 = vpop.f32.mrb[0].mxu0
      %v742 = vadd.f32 0.0, %v741
      %v743 = vpop.f32.mrb[0].mxu0
      %v744 = vpop.f32.mrb[0].mxu0
      %v745 = vadd.f32 0.0, %v744
      %v746 = vpop.f32.mrb[0].mxu0
      %747 = vmatprep.mubr.bf16.mxu0 0
      %748 = vmatmul.mubr.bf16.gmra.mrb[0].mxu0 %v586
      %v749 = vpop.f32.mrb[0].mxu0
      %v750 = vadd.f32 0.0, %v749
      %v751 = vpop.f32.mrb[0].mxu0
      %v752 = vpop.f32.mrb[0].mxu0
      %v753 = vadd.f32 0.0, %v752
      %v754 = vpop.f32.mrb[0].mxu0
      %755 = vmatprep.mubr.bf16.mxu0 0
      %756 = vmatmul.mubr.bf16.gmra.mrb[0].mxu0 %v587
      %v757 = vpop.f32.mrb[0].mxu0
      %v758 = vadd.f32 0.0, %v757
      %v759 = vpop.f32.mrb[0].mxu0
      %v760 = vpop.f32.mrb[0].mxu0
      %v761 = vadd.f32 0.0, %v760
      %v762 = vpop.f32.mrb[0].mxu0
      %763 = vmatprep.mubr.bf16.mxu0 0
      %764 = vmatmul.mubr.bf16.gmra.mrb[0].mxu0 %v588
      %v765 = vpop.f32.mrb[0].mxu0
      %v766 = vadd.f32 0.0, %v765
      %v767 = vpop.f32.mrb[0].mxu0
      %v768 = vpop.f32.mrb[0].mxu0
      %v769 = vadd.f32 0.0, %v768
      %v770 = vpop.f32.mrb[0].mxu0
      %771 = vmatprep.mubr.bf16.mxu0 0
      %772 = vmatmul.mubr.bf16.gmra.mrb[0].mxu0 %v589
      %v773 = vpop.f32.mrb[0].mxu0
      %v774 = vadd.f32 0.0, %v773
      %v775 = vpop.f32.mrb[0].mxu0
      %v776 = vpop.f32.mrb[0].mxu0
      %v777 = vadd.f32 0.0, %v776
      %v778 = vpop.f32.mrb[0].mxu0
      %779 = vmatprep.mubr.bf16.mxu0 0
      %780 = vmatmul.mubr.bf16.gmra.mrb[0].mxu0 %v590
      %v781 = vpop.f32.mrb[0].mxu0
      %v782 = vadd.f32 0.0, %v781
      %v783 = vpop.f32.mrb[0].mxu0
      %v784 = vpop.f32.mrb[0].mxu0
      %v785 = vadd.f32 0.0, %v784
      %v786 = vpop.f32.mrb[0].mxu0
      %787 = vmatprep.mubr.bf16.mxu0 0
      %788 = vmatmul.mubr.bf16.gmra.mrb[0].mxu0 %v591
      %v789 = vpop.f32.mrb[0].mxu0
      %v790 = vadd.f32 0.0, %v789
      %v791 = vpop.f32.mrb[0].mxu0
      %v792 = vpop.f32.mrb[0].mxu0
      %v793 = vadd.f32 0.0, %v792
      %v794 = vpop.f32.mrb[0].mxu0
      %795 = vmatprep.mubr.bf16.mxu0 0
      %796 = vmatmul.mubr.bf16.gmra.mrb[0].mxu0 %v592
      %v797 = vpop.f32.mrb[0].mxu0
      %v798 = vadd.f32 0.0, %v797
      %v799 = vpop.f32.mrb[0].mxu0
      %v800 = vpop.f32.mrb[0].mxu0
      %v801 = vadd.f32 0.0, %v800
      %v802 = vpop.f32.mrb[0].mxu0
      %803 = vmatprep.mubr.bf16.mxu0 0
      %804 = vmatmul.mubr.bf16.gmra.mrb[0].mxu0 %v593
      %v805 = vpop.f32.mrb[0].mxu0
      %v806 = vadd.f32 0.0, %v805
      %v807 = vpop.f32.mrb[0].mxu0
      %v808 = vpop.f32.mrb[0].mxu0
      %v809 = vadd.f32 0.0, %v808
      %v810 = vpop.f32.mrb[0].mxu0
      %811 = vmatprep.mubr.bf16.mxu0 0
      %812 = vmatmul.mubr.bf16.gmra.mrb[0].mxu0 %v594
      %v813 = vpop.f32.mrb[0].mxu0
      %v814 = vadd.f32 0.0, %v813
      %v815 = vpop.f32.mrb[0].mxu0
      %v816 = vpop.f32.mrb[0].mxu0
      %v817 = vadd.f32 0.0, %v816
      %v818 = vpop.f32.mrb[0].mxu0
      %819 = vdwg.mxu0
      %v836 = vunpack.c.l.b16 %v531
      %v837 = vunpack.c.l.b16 %v532
      %v838 = vunpack.c.l.b16 %v533
      %v839 = vunpack.c.l.b16 %v534
      %v840 = vunpack.c.l.b16 %v535
      %v841 = vunpack.c.l.b16 %v536
      %v842 = vunpack.c.l.b16 %v537
      %v843 = vunpack.c.l.b16 %v538
      %v844 = vunpack.c.l.b16 %v539
      %v845 = vunpack.c.l.b16 %v540
      %v846 = vunpack.c.l.b16 %v541
      %v847 = vunpack.c.l.b16 %v542
      %v848 = vunpack.c.l.b16 %v543
      %v849 = vunpack.c.l.b16 %v544
      %v850 = vunpack.c.l.b16 %v545
      %v851 = vunpack.c.l.b16 %v546
      %v852 = vpack.c.b16 %v837, %v836
      %v853 = vpack.c.b16 %v839, %v838
      %v854 = vpack.c.b16 %v841, %v840
      %v855 = vpack.c.b16 %v843, %v842
      %v856 = vpack.c.b16 %v845, %v844
      %v857 = vpack.c.b16 %v847, %v846
      %v858 = vpack.c.b16 %v849, %v848
      %v859 = vpack.c.b16 %v851, %v850
      %868 = vmatprep.subr.bf16.mxu0 0
      %869 = vmatpush1.bf16.msra.mxu0 %v852
      %870 = vmatprep.subr.bf16.mxu0 0
      %871 = vmatpush1.bf16.msra.mxu0 %v853
      %872 = vmatprep.subr.bf16.mxu0 0
      %873 = vmatpush1.bf16.msra.mxu0 %v854
      %874 = vmatprep.subr.bf16.mxu0 0
      %875 = vmatpush1.bf16.msra.mxu0 %v855
      %876 = vmatprep.subr.bf16.mxu0 0
      %877 = vmatpush1.bf16.msra.mxu0 %v856
      %878 = vmatprep.subr.bf16.mxu0 0
      %879 = vmatpush1.bf16.msra.mxu0 %v857
      %880 = vmatprep.subr.bf16.mxu0 0
      %881 = vmatpush1.bf16.msra.mxu0 %v858
      %882 = vmatprep.subr.bf16.mxu0 0
      %883 = vmatpush1.bf16.msra.mxu0 %v859
      %884 = vmatprep.subr.bf16.mxu0 0
      %885 = vmatpush1.bf16.msra.mxu0 0
      %886 = vmatprep.subr.bf16.mxu0 0
      %887 = vmatpush1.bf16.msra.mxu0 0
      %888 = vmatprep.subr.bf16.mxu0 0
      %889 = vmatpush1.bf16.msra.mxu0 0
      %890 = vmatprep.subr.bf16.mxu0 0
      %891 = vmatpush1.bf16.msra.mxu0 0
      %892 = vmatprep.subr.bf16.mxu0 0
      %893 = vmatpush1.bf16.msra.mxu0 0
      %894 = vmatprep.subr.bf16.mxu0 0
      %895 = vmatpush1.bf16.msra.mxu0 0
      %896 = vmatprep.subr.bf16.mxu0 0
      %897 = vmatpush1.bf16.msra.mxu0 0
      %898 = vmatprep.subr.bf16.mxu0 0
      %899 = vmatpush1.bf16.msra.mxu0 0
      %900 = vmatprep.mubr.bf16.mxu0 0
      %901 = vmatmul.mubr.bf16.gmra.mrb[0].mxu0 %v515
      %v902 = vpop.f32.mrb[0].mxu0
      %v903 = vadd.f32 %v694, %v902
      %v904 = vpop.f32.mrb[0].mxu0
      %v905 = vpop.f32.mrb[0].mxu0
      %v906 = vadd.f32 %v697, %v905
      %v907 = vpop.f32.mrb[0].mxu0
      %908 = vmatprep.mubr.bf16.mxu0 0
      %909 = vmatmul.mubr.bf16.gmra.mrb[0].mxu0 %v516
      %v910 = vpop.f32.mrb[0].mxu0
      %v911 = vadd.f32 %v702, %v910
      %v912 = vpop.f32.mrb[0].mxu0
      %v913 = vpop.f32.mrb[0].mxu0
      %v914 = vadd.f32 %v705, %v913
      %v915 = vpop.f32.mrb[0].mxu0
      %916 = vmatprep.mubr.bf16.mxu0 0
      %917 = vmatmul.mubr.bf16.gmra.mrb[0].mxu0 %v517
      %v918 = vpop.f32.mrb[0].mxu0
      %v919 = vadd.f32 %v710, %v918
      %v920 = vpop.f32.mrb[0].mxu0
      %v921 = vpop.f32.mrb[0].mxu0
      %v922 = vadd.f32 %v713, %v921
      %v923 = vpop.f32.mrb[0].mxu0
      %924 = vmatprep.mubr.bf16.mxu0 0
      %925 = vmatmul.mubr.bf16.gmra.mrb[0].mxu0 %v518
      %v926 = vpop.f32.mrb[0].mxu0
      %v927 = vadd.f32 %v718, %v926
      %v928 = vpop.f32.mrb[0].mxu0
      %v929 = vpop.f32.mrb[0].mxu0
      %v930 = vadd.f32 %v721, %v929
      %v931 = vpop.f32.mrb[0].mxu0
      %932 = vmatprep.mubr.bf16.mxu0 0
      %933 = vmatmul.mubr.bf16.gmra.mrb[0].mxu0 %v519
      %v934 = vpop.f32.mrb[0].mxu0
      %v935 = vadd.f32 %v726, %v934
      %v936 = vpop.f32.mrb[0].mxu0
      %v937 = vpop.f32.mrb[0].mxu0
      %v938 = vadd.f32 %v729, %v937
      %v939 = vpop.f32.mrb[0].mxu0
      %940 = vmatprep.mubr.bf16.mxu0 0
      %941 = vmatmul.mubr.bf16.gmra.mrb[0].mxu0 %v520
      %v942 = vpop.f32.mrb[0].mxu0
      %v943 = vadd.f32 %v734, %v942
      %v944 = vpop.f32.mrb[0].mxu0
      %v945 = vpop.f32.mrb[0].mxu0
      %v946 = vadd.f32 %v737, %v945
      %v947 = vpop.f32.mrb[0].mxu0
      %948 = vmatprep.mubr.bf16.mxu0 0
      %949 = vmatmul.mubr.bf16.gmra.mrb[0].mxu0 %v521
      %v950 = vpop.f32.mrb[0].mxu0
      %v951 = vadd.f32 %v742, %v950
      %v952 = vpop.f32.mrb[0].mxu0
      %v953 = vpop.f32.mrb[0].mxu0
      %v954 = vadd.f32 %v745, %v953
      %v955 = vpop.f32.mrb[0].mxu0
      %956 = vmatprep.mubr.bf16.mxu0 0
      %957 = vmatmul.mubr.bf16.gmra.mrb[0].mxu0 %v522
      %v958 = vpop.f32.mrb[0].mxu0
      %v959 = vadd.f32 %v750, %v958
      %v960 = vpop.f32.mrb[0].mxu0
      %v961 = vpop.f32.mrb[0].mxu0
      %v962 = vadd.f32 %v753, %v961
      %v963 = vpop.f32.mrb[0].mxu0
      %964 = vmatprep.mubr.bf16.mxu0 0
      %965 = vmatmul.mubr.bf16.gmra.mrb[0].mxu0 %v523
      %v966 = vpop.f32.mrb[0].mxu0
      %v967 = vadd.f32 %v758, %v966
      %v968 = vpop.f32.mrb[0].mxu0
      %v969 = vpop.f32.mrb[0].mxu0
      %v970 = vadd.f32 %v761, %v969
      %v971 = vpop.f32.mrb[0].mxu0
      %972 = vmatprep.mubr.bf16.mxu0 0
      %973 = vmatmul.mubr.bf16.gmra.mrb[0].mxu0 %v524
      %v974 = vpop.f32.mrb[0].mxu0
      %v975 = vadd.f32 %v766, %v974
      %v976 = vpop.f32.mrb[0].mxu0
      %v977 = vpop.f32.mrb[0].mxu0
      %v978 = vadd.f32 %v769, %v977
      %v979 = vpop.f32.mrb[0].mxu0
      %980 = vmatprep.mubr.bf16.mxu0 0
      %981 = vmatmul.mubr.bf16.gmra.mrb[0].mxu0 %v525
      %v982 = vpop.f32.mrb[0].mxu0
      %v983 = vadd.f32 %v774, %v982
      %v984 = vpop.f32.mrb[0].mxu0
      %v985 = vpop.f32.mrb[0].mxu0
      %v986 = vadd.f32 %v777, %v985
      %v987 = vpop.f32.mrb[0].mxu0
      %988 = vmatprep.mubr.bf16.mxu0 0
      %989 = vmatmul.mubr.bf16.gmra.mrb[0].mxu0 %v526
      %v990 = vpop.f32.mrb[0].mxu0
      %v991 = vadd.f32 %v782, %v990
      %v992 = vpop.f32.mrb[0].mxu0
      %v993 = vpop.f32.mrb[0].mxu0
      %v994 = vadd.f32 %v785, %v993
      %v995 = vpop.f32.mrb[0].mxu0
      %996 = vmatprep.mubr.bf16.mxu0 0
      %997 = vmatmul.mubr.bf16.gmra.mrb[0].mxu0 %v527
      %v998 = vpop.f32.mrb[0].mxu0
      %v999 = vadd.f32 %v790, %v998
      %v1000 = vpop.f32.mrb[0].mxu0
      %v1001 = vpop.f32.mrb[0].mxu0
      %v1002 = vadd.f32 %v793, %v1001
      %v1003 = vpop.f32.mrb[0].mxu0
      %1004 = vmatprep.mubr.bf16.mxu0 0
      %1005 = vmatmul.mubr.bf16.gmra.mrb[0].mxu0 %v528
      %v1006 = vpop.f32.mrb[0].mxu0
      %v1007 = vadd.f32 %v798, %v1006
      %v1008 = vpop.f32.mrb[0].mxu0
      %v1009 = vpop.f32.mrb[0].mxu0
      %v1010 = vadd.f32 %v801, %v1009
      %v1011 = vpop.f32.mrb[0].mxu0
      %1012 = vmatprep.mubr.bf16.mxu0 0
      %1013 = vmatmul.mubr.bf16.gmra.mrb[0].mxu0 %v529
      %v1014 = vpop.f32.mrb[0].mxu0
      %v1015 = vadd.f32 %v806, %v1014
      %v1016 = vpop.f32.mrb[0].mxu0
      %v1017 = vpop.f32.mrb[0].mxu0
      %v1018 = vadd.f32 %v809, %v1017
      %v1019 = vpop.f32.mrb[0].mxu0
      %1020 = vmatprep.mubr.bf16.mxu0 0
      %1021 = vmatmul.mubr.bf16.gmra.mrb[0].mxu0 %v530
      %v1022 = vpop.f32.mrb[0].mxu0
      %v1023 = vadd.f32 %v814, %v1022
      %v1024 = vpop.f32.mrb[0].mxu0
      %v1025 = vpop.f32.mrb[0].mxu0
      %v1026 = vadd.f32 %v817, %v1025
      %v1027 = vpop.f32.mrb[0].mxu0
      %1028 = vdwg.mxu0
      %v1029 = vld [vmem:[#allocation2 + $0x2] sm:$0xff]
      %v1030 = vld [vmem:[#allocation2 + $0xa] sm:$0xff]
      %v1031 = vld [vmem:[#allocation2 + $0x1a] sm:$0xff]
      %v1032 = vld [vmem:[#allocation2 + $0x22] sm:$0xff]
      %v1033 = vld [vmem:[#allocation2 + $0x32] sm:$0xff]
      %v1034 = vld [vmem:[#allocation2 + $0x3a] sm:$0xff]
      %v1035 = vld [vmem:[#allocation2 + $0x4a] sm:$0xff]
      %v1036 = vld [vmem:[#allocation2 + $0x52] sm:$0xff]
      %v1037 = vld [vmem:[#allocation2 + $0x62] sm:$0xff]
      %v1038 = vld [vmem:[#allocation2 + $0x6a] sm:$0xff]
      %v1039 = vld [vmem:[#allocation2 + $0x7a] sm:$0xff]
      %v1040 = vld [vmem:[#allocation2 + $0x82] sm:$0xff]
      %v1041 = vld [vmem:[#allocation2 + $0x92] sm:$0xff]
      %v1042 = vld [vmem:[#allocation2 + $0x9a] sm:$0xff]
      %v1043 = vld [vmem:[#allocation2 + $0xaa] sm:$0xff]
      %v1044 = vld [vmem:[#allocation2 + $0xb2] sm:$0xff]
      %v1045 = vld [vmem:[#allocation2 + $0xc2] sm:$0xff]
      %v1046 = vld [vmem:[#allocation2 + $0xca] sm:$0xff]
      %v1047 = vld [vmem:[#allocation2 + $0xda] sm:$0xff]
      %v1048 = vld [vmem:[#allocation2 + $0xe2] sm:$0xff]
      %v1049 = vld [vmem:[#allocation2 + $0xf2] sm:$0xff]
      %v1050 = vld [vmem:[#allocation2 + $0xfa] sm:$0xff]
      %v1051 = vld [vmem:[#allocation2 + $0x10a] sm:$0xff]
      %v1052 = vld [vmem:[#allocation2 + $0x112] sm:$0xff]
      %v1053 = vld [vmem:[#allocation2 + $0x122] sm:$0xff]
      %v1054 = vld [vmem:[#allocation2 + $0x12a] sm:$0xff]
      %v1055 = vld [vmem:[#allocation2 + $0x13a] sm:$0xff]
      %v1056 = vld [vmem:[#allocation2 + $0x142] sm:$0xff]
      %v1057 = vld [vmem:[#allocation2 + $0x152] sm:$0xff]
      %v1058 = vld [vmem:[#allocation2 + $0x15a] sm:$0xff]
      %v1059 = vld [vmem:[#allocation2 + $0x16a] sm:$0xff]
      %v1060 = vld [vmem:[#allocation2 + $0x172] sm:$0xff]
      %v1061 = vpack.c.bf16 %v1030, %v1029
      %v1062 = vpack.c.bf16 %v1032, %v1031
      %v1063 = vpack.c.bf16 %v1034, %v1033
      %v1064 = vpack.c.bf16 %v1036, %v1035
      %v1065 = vpack.c.bf16 %v1038, %v1037
      %v1066 = vpack.c.bf16 %v1040, %v1039
      %v1067 = vpack.c.bf16 %v1042, %v1041
      %v1068 = vpack.c.bf16 %v1044, %v1043
      %v1069 = vpack.c.bf16 %v1046, %v1045
      %v1070 = vpack.c.bf16 %v1048, %v1047
      %v1071 = vpack.c.bf16 %v1050, %v1049
      %v1072 = vpack.c.bf16 %v1052, %v1051
      %v1073 = vpack.c.bf16 %v1054, %v1053
      %v1074 = vpack.c.bf16 %v1056, %v1055
      %v1075 = vpack.c.bf16 %v1058, %v1057
      %v1076 = vpack.c.bf16 %v1060, %v1059
      %v1077 = vld [vmem:[%s3 + $0x80] sm:$0xf]
      %v1078 = vld [vmem:[%s3 + $0x84] sm:$0xf]
      %v1079 = vld [vmem:[%s3 + $0x88] sm:$0xf]
      %v1080 = vld [vmem:[%s3 + $0x8c] sm:$0xf]
      %v1081 = vld [vmem:[%s3 + $0x90] sm:$0xf]
      %v1082 = vld [vmem:[%s3 + $0x94] sm:$0xf]
      %v1083 = vld [vmem:[%s3 + $0x98] sm:$0xf]
      %v1084 = vld [vmem:[%s3 + $0x9c] sm:$0xf]
      %v1085 = vld [vmem:[%s3 + $0xa0] sm:$0xf]
      %v1086 = vld [vmem:[%s3 + $0xa4] sm:$0xf]
      %v1087 = vld [vmem:[%s3 + $0xa8] sm:$0xf]
      %v1088 = vld [vmem:[%s3 + $0xac] sm:$0xf]
      %v1089 = vld [vmem:[%s3 + $0xb0] sm:$0xf]
      %v1090 = vld [vmem:[%s3 + $0xb4] sm:$0xf]
      %v1091 = vld [vmem:[%s3 + $0xb8] sm:$0xf]
      %v1092 = vld [vmem:[%s3 + $0xbc] sm:$0xf]
      %v1109 = vunpack.c.l.b16 %v1077
      %v1110 = vunpack.c.l.b16 %v1078
      %v1111 = vunpack.c.l.b16 %v1079
      %v1112 = vunpack.c.l.b16 %v1080
      %v1113 = vunpack.c.l.b16 %v1081
      %v1114 = vunpack.c.l.b16 %v1082
      %v1115 = vunpack.c.l.b16 %v1083
      %v1116 = vunpack.c.l.b16 %v1084
      %v1117 = vunpack.c.l.b16 %v1085
      %v1118 = vunpack.c.l.b16 %v1086
      %v1119 = vunpack.c.l.b16 %v1087
      %v1120 = vunpack.c.l.b16 %v1088
      %v1121 = vunpack.c.l.b16 %v1089
      %v1122 = vunpack.c.l.b16 %v1090
      %v1123 = vunpack.c.l.b16 %v1091
      %v1124 = vunpack.c.l.b16 %v1092
      %v1125 = vpack.c.b16 %v1110, %v1109
      %v1126 = vpack.c.b16 %v1112, %v1111
      %v1127 = vpack.c.b16 %v1114, %v1113
      %v1128 = vpack.c.b16 %v1116, %v1115
      %v1129 = vpack.c.b16 %v1118, %v1117
      %v1130 = vpack.c.b16 %v1120, %v1119
      %v1131 = vpack.c.b16 %v1122, %v1121
      %v1132 = vpack.c.b16 %v1124, %v1123
      %1141 = vmatprep.subr.bf16.mxu0 0
      %1142 = vmatpush1.bf16.msra.mxu0 %v1125
      %1143 = vmatprep.subr.bf16.mxu0 0
      %1144 = vmatpush1.bf16.msra.mxu0 %v1126
      %1145 = vmatprep.subr.bf16.mxu0 0
      %1146 = vmatpush1.bf16.msra.mxu0 %v1127
      %1147 = vmatprep.subr.bf16.mxu0 0
      %1148 = vmatpush1.bf16.msra.mxu0 %v1128
      %1149 = vmatprep.subr.bf16.mxu0 0
      %1150 = vmatpush1.bf16.msra.mxu0 %v1129
      %1151 = vmatprep.subr.bf16.mxu0 0
      %1152 = vmatpush1.bf16.msra.mxu0 %v1130
      %1153 = vmatprep.subr.bf16.mxu0 0
      %1154 = vmatpush1.bf16.msra.mxu0 %v1131
      %1155 = vmatprep.subr.bf16.mxu0 0
      %1156 = vmatpush1.bf16.msra.mxu0 %v1132
      %1157 = vmatprep.subr.bf16.mxu0 0
      %1158 = vmatpush1.bf16.msra.mxu0 0
      %1159 = vmatprep.subr.bf16.mxu0 0
      %1160 = vmatpush1.bf16.msra.mxu0 0
      %1161 = vmatprep.subr.bf16.mxu0 0
      %1162 = vmatpush1.bf16.msra.mxu0 0
      %1163 = vmatprep.subr.bf16.mxu0 0
      %1164 = vmatpush1.bf16.msra.mxu0 0
      %1165 = vmatprep.subr.bf16.mxu0 0
      %1166 = vmatpush1.bf16.msra.mxu0 0
      %1167 = vmatprep.subr.bf16.mxu0 0
      %1168 = vmatpush1.bf16.msra.mxu0 0
      %1169 = vmatprep.subr.bf16.mxu0 0
      %1170 = vmatpush1.bf16.msra.mxu0 0
      %1171 = vmatprep.subr.bf16.mxu0 0
      %1172 = vmatpush1.bf16.msra.mxu0 0
      %1173 = vmatprep.mubr.bf16.mxu0 0
      %1174 = vmatmul.mubr.bf16.gmra.mrb[0].mxu0 %v1061
      %v1175 = vpop.f32.mrb[0].mxu0
      %v1176 = vadd.f32 0.0, %v1175
      %v1177 = vpop.f32.mrb[0].mxu0
      %v1178 = vpop.f32.mrb[0].mxu0
      %v1179 = vadd.f32 0.0, %v1178
      %v1180 = vpop.f32.mrb[0].mxu0
      %1181 = vmatprep.mubr.bf16.mxu0 0
      %1182 = vmatmul.mubr.bf16.gmra.mrb[0].mxu0 %v1062
      %v1183 = vpop.f32.mrb[0].mxu0
      %v1184 = vadd.f32 0.0, %v1183
      %v1185 = vpop.f32.mrb[0].mxu0
      %v1186 = vpop.f32.mrb[0].mxu0
      %v1187 = vadd.f32 0.0, %v1186
      %v1188 = vpop.f32.mrb[0].mxu0
      %1189 = vmatprep.mubr.bf16.mxu0 0
      %1190 = vmatmul.mubr.bf16.gmra.mrb[0].mxu0 %v1063
      %v1191 = vpop.f32.mrb[0].mxu0
      %v1192 = vadd.f32 0.0, %v1191
      %v1193 = vpop.f32.mrb[0].mxu0
      %v1194 = vpop.f32.mrb[0].mxu0
      %v1195 = vadd.f32 0.0, %v1194
      %v1196 = vpop.f32.mrb[0].mxu0
      %1197 = vmatprep.mubr.bf16.mxu0 0
      %1198 = vmatmul.mubr.bf16.gmra.mrb[0].mxu0 %v1064
      %v1199 = vpop.f32.mrb[0].mxu0
      %v1200 = vadd.f32 0.0, %v1199
      %v1201 = vpop.f32.mrb[0].mxu0
      %v1202 = vpop.f32.mrb[0].mxu0
      %v1203 = vadd.f32 0.0, %v1202
      %v1204 = vpop.f32.mrb[0].mxu0
      %1205 = vmatprep.mubr.bf16.mxu0 0
      %1206 = vmatmul.mubr.bf16.gmra.mrb[0].mxu0 %v1065
      %v1207 = vpop.f32.mrb[0].mxu0
      %v1208 = vadd.f32 0.0, %v1207
      %v1209 = vpop.f32.mrb[0].mxu0
      %v1210 = vpop.f32.mrb[0].mxu0
      %v1211 = vadd.f32 0.0, %v1210
      %v1212 = vpop.f32.mrb[0].mxu0
      %1213 = vmatprep.mubr.bf16.mxu0 0
      %1214 = vmatmul.mubr.bf16.gmra.mrb[0].mxu0 %v1066
      %v1215 = vpop.f32.mrb[0].mxu0
      %v1216 = vadd.f32 0.0, %v1215
      %v1217 = vpop.f32.mrb[0].mxu0
      %v1218 = vpop.f32.mrb[0].mxu0
      %v1219 = vadd.f32 0.0, %v1218
      %v1220 = vpop.f32.mrb[0].mxu0
      %1221 = vmatprep.mubr.bf16.mxu0 0
      %1222 = vmatmul.mubr.bf16.gmra.mrb[0].mxu0 %v1067
      %v1223 = vpop.f32.mrb[0].mxu0
      %v1224 = vadd.f32 0.0, %v1223
      %v1225 = vpop.f32.mrb[0].mxu0
      %v1226 = vpop.f32.mrb[0].mxu0
      %v1227 = vadd.f32 0.0, %v1226
      %v1228 = vpop.f32.mrb[0].mxu0
      %1229 = vmatprep.mubr.bf16.mxu0 0
      %1230 = vmatmul.mubr.bf16.gmra.mrb[0].mxu0 %v1068
      %v1231 = vpop.f32.mrb[0].mxu0
      %v1232 = vadd.f32 0.0, %v1231
      %v1233 = vpop.f32.mrb[0].mxu0
      %v1234 = vpop.f32.mrb[0].mxu0
      %v1235 = vadd.f32 0.0, %v1234
      %v1236 = vpop.f32.mrb[0].mxu0
      %1237 = vmatprep.mubr.bf16.mxu0 0
      %1238 = vmatmul.mubr.bf16.gmra.mrb[0].mxu0 %v1069
      %v1239 = vpop.f32.mrb[0].mxu0
      %v1240 = vadd.f32 0.0, %v1239
      %v1241 = vpop.f32.mrb[0].mxu0
      %v1242 = vpop.f32.mrb[0].mxu0
      %v1243 = vadd.f32 0.0, %v1242
      %v1244 = vpop.f32.mrb[0].mxu0
      %1245 = vmatprep.mubr.bf16.mxu0 0
      %1246 = vmatmul.mubr.bf16.gmra.mrb[0].mxu0 %v1070
      %v1247 = vpop.f32.mrb[0].mxu0
      %v1248 = vadd.f32 0.0, %v1247
      %v1249 = vpop.f32.mrb[0].mxu0
      %v1250 = vpop.f32.mrb[0].mxu0
      %v1251 = vadd.f32 0.0, %v1250
      %v1252 = vpop.f32.mrb[0].mxu0
      %1253 = vmatprep.mubr.bf16.mxu0 0
      %1254 = vmatmul.mubr.bf16.gmra.mrb[0].mxu0 %v1071
      %v1255 = vpop.f32.mrb[0].mxu0
      %v1256 = vadd.f32 0.0, %v1255
      %v1257 = vpop.f32.mrb[0].mxu0
      %v1258 = vpop.f32.mrb[0].mxu0
      %v1259 = vadd.f32 0.0, %v1258
      %v1260 = vpop.f32.mrb[0].mxu0
      %1261 = vmatprep.mubr.bf16.mxu0 0
      %1262 = vmatmul.mubr.bf16.gmra.mrb[0].mxu0 %v1072
      %v1263 = vpop.f32.mrb[0].mxu0
      %v1264 = vadd.f32 0.0, %v1263
      %v1265 = vpop.f32.mrb[0].mxu0
      %v1266 = vpop.f32.mrb[0].mxu0
      %v1267 = vadd.f32 0.0, %v1266
      %v1268 = vpop.f32.mrb[0].mxu0
      %1269 = vmatprep.mubr.bf16.mxu0 0
      %1270 = vmatmul.mubr.bf16.gmra.mrb[0].mxu0 %v1073
      %v1271 = vpop.f32.mrb[0].mxu0
      %v1272 = vadd.f32 0.0, %v1271
      %v1273 = vpop.f32.mrb[0].mxu0
      %v1274 = vpop.f32.mrb[0].mxu0
      %v1275 = vadd.f32 0.0, %v1274
      %v1276 = vpop.f32.mrb[0].mxu0
      %1277 = vmatprep.mubr.bf16.mxu0 0
      %1278 = vmatmul.mubr.bf16.gmra.mrb[0].mxu0 %v1074
      %v1279 = vpop.f32.mrb[0].mxu0
      %v1280 = vadd.f32 0.0, %v1279
      %v1281 = vpop.f32.mrb[0].mxu0
      %v1282 = vpop.f32.mrb[0].mxu0
      %v1283 = vadd.f32 0.0, %v1282
      %v1284 = vpop.f32.mrb[0].mxu0
      %1285 = vmatprep.mubr.bf16.mxu0 0
      %1286 = vmatmul.mubr.bf16.gmra.mrb[0].mxu0 %v1075
      %v1287 = vpop.f32.mrb[0].mxu0
      %v1288 = vadd.f32 0.0, %v1287
      %v1289 = vpop.f32.mrb[0].mxu0
      %v1290 = vpop.f32.mrb[0].mxu0
      %v1291 = vadd.f32 0.0, %v1290
      %v1292 = vpop.f32.mrb[0].mxu0
      %1293 = vmatprep.mubr.bf16.mxu0 0
      %1294 = vmatmul.mubr.bf16.gmra.mrb[0].mxu0 %v1076
      %v1295 = vpop.f32.mrb[0].mxu0
      %v1296 = vadd.f32 0.0, %v1295
      %v1297 = vpop.f32.mrb[0].mxu0
      %v1298 = vpop.f32.mrb[0].mxu0
      %v1299 = vadd.f32 0.0, %v1298
      %v1300 = vpop.f32.mrb[0].mxu0
      %1301 = vdwg.mxu0
      %v1302 = vadd.f32 %v903, %v1176
      %v1303 = vadd.f32 %v906, %v1179
      %v1304 = vadd.f32 %v911, %v1184
      %v1305 = vadd.f32 %v914, %v1187
      %v1306 = vadd.f32 %v919, %v1192
      %v1307 = vadd.f32 %v922, %v1195
      %v1308 = vadd.f32 %v927, %v1200
      %v1309 = vadd.f32 %v930, %v1203
      %v1310 = vadd.f32 %v935, %v1208
      %v1311 = vadd.f32 %v938, %v1211
      %v1312 = vadd.f32 %v943, %v1216
      %v1313 = vadd.f32 %v946, %v1219
      %v1314 = vadd.f32 %v951, %v1224
      %v1315 = vadd.f32 %v954, %v1227
      %v1316 = vadd.f32 %v959, %v1232
      %v1317 = vadd.f32 %v962, %v1235
      %v1318 = vadd.f32 %v967, %v1240
      %v1319 = vadd.f32 %v970, %v1243
      %v1320 = vadd.f32 %v975, %v1248
      %v1321 = vadd.f32 %v978, %v1251
      %v1322 = vadd.f32 %v983, %v1256
      %v1323 = vadd.f32 %v986, %v1259
      %v1324 = vadd.f32 %v991, %v1264
      %v1325 = vadd.f32 %v994, %v1267
      %v1326 = vadd.f32 %v999, %v1272
      %v1327 = vadd.f32 %v1002, %v1275
      %v1328 = vadd.f32 %v1007, %v1280
      %v1329 = vadd.f32 %v1010, %v1283
      %v1330 = vadd.f32 %v1015, %v1288
      %v1331 = vadd.f32 %v1018, %v1291
      %v1332 = vadd.f32 %v1023, %v1296
      %v1333 = vadd.f32 %v1026, %v1299
      %v1334 = vld [vmem:[%s450] sm:$0xff]
      %v1335 = vld [vmem:[%s450 + $0x8] sm:$0xff]
      %v1336 = vld [vmem:[%s450 + $0x18] sm:$0xff]
      %v1337 = vld [vmem:[%s450 + $0x20] sm:$0xff]
      %v1338 = vld [vmem:[%s450 + $0x30] sm:$0xff]
      %v1339 = vld [vmem:[%s450 + $0x38] sm:$0xff]
      %v1340 = vld [vmem:[%s450 + $0x48] sm:$0xff]
      %v1341 = vld [vmem:[%s450 + $0x50] sm:$0xff]
      %v1342 = vld [vmem:[%s450 + $0x60] sm:$0xff]
      %v1343 = vld [vmem:[%s450 + $0x68] sm:$0xff]
      %v1344 = vld [vmem:[%s450 + $0x78] sm:$0xff]
      %v1345 = vld [vmem:[%s450 + $0x80] sm:$0xff]
      %v1346 = vld [vmem:[%s450 + $0x90] sm:$0xff]
      %v1347 = vld [vmem:[%s450 + $0x98] sm:$0xff]
      %v1348 = vld [vmem:[%s450 + $0xa8] sm:$0xff]
      %v1349 = vld [vmem:[%s450 + $0xb0] sm:$0xff]
      %v1350 = vld [vmem:[%s450 + $0xc0] sm:$0xff]
      %v1351 = vld [vmem:[%s450 + $0xc8] sm:$0xff]
      %v1352 = vld [vmem:[%s450 + $0xd8] sm:$0xff]
      %v1353 = vld [vmem:[%s450 + $0xe0] sm:$0xff]
      %v1354 = vld [vmem:[%s450 + $0xf0] sm:$0xff]
      %v1355 = vld [vmem:[%s450 + $0xf8] sm:$0xff]
      %v1356 = vld [vmem:[%s450 + $0x108] sm:$0xff]
      %v1357 = vld [vmem:[%s450 + $0x110] sm:$0xff]
      %v1358 = vld [vmem:[%s450 + $0x120] sm:$0xff]
      %v1359 = vld [vmem:[%s450 + $0x128] sm:$0xff]
      %v1360 = vld [vmem:[%s450 + $0x138] sm:$0xff]
      %v1361 = vld [vmem:[%s450 + $0x140] sm:$0xff]
      %v1362 = vld [vmem:[%s450 + $0x150] sm:$0xff]
      %v1363 = vld [vmem:[%s450 + $0x158] sm:$0xff]
      %v1364 = vld [vmem:[%s450 + $0x168] sm:$0xff]
      %v1365 = vld [vmem:[%s450 + $0x170] sm:$0xff]
      %v1366 = vpack.c.bf16 %v1335, %v1334
      %v1367 = vpack.c.bf16 %v1337, %v1336
      %v1368 = vpack.c.bf16 %v1339, %v1338
      %v1369 = vpack.c.bf16 %v1341, %v1340
      %v1370 = vpack.c.bf16 %v1343, %v1342
      %v1371 = vpack.c.bf16 %v1345, %v1344
      %v1372 = vpack.c.bf16 %v1347, %v1346
      %v1373 = vpack.c.bf16 %v1349, %v1348
      %v1374 = vpack.c.bf16 %v1351, %v1350
      %v1375 = vpack.c.bf16 %v1353, %v1352
      %v1376 = vpack.c.bf16 %v1355, %v1354
      %v1377 = vpack.c.bf16 %v1357, %v1356
      %v1378 = vpack.c.bf16 %v1359, %v1358
      %v1379 = vpack.c.bf16 %v1361, %v1360
      %v1380 = vpack.c.bf16 %v1363, %v1362
      %v1381 = vpack.c.bf16 %v1365, %v1364
      %v1382 = vld [vmem:[%s3 + $0xc0] sm:$0xf]
      %v1383 = vld [vmem:[%s3 + $0xc4] sm:$0xf]
      %v1384 = vld [vmem:[%s3 + $0xc8] sm:$0xf]
      %v1385 = vld [vmem:[%s3 + $0xcc] sm:$0xf]
      %v1386 = vld [vmem:[%s3 + $0xd0] sm:$0xf]
      %v1387 = vld [vmem:[%s3 + $0xd4] sm:$0xf]
      %v1388 = vld [vmem:[%s3 + $0xd8] sm:$0xf]
      %v1389 = vld [vmem:[%s3 + $0xdc] sm:$0xf]
      %v1390 = vld [vmem:[%s3 + $0xe0] sm:$0xf]
      %v1391 = vld [vmem:[%s3 + $0xe4] sm:$0xf]
      %v1392 = vld [vmem:[%s3 + $0xe8] sm:$0xf]
      %v1393 = vld [vmem:[%s3 + $0xec] sm:$0xf]
      %v1394 = vld [vmem:[%s3 + $0xf0] sm:$0xf]
      %v1395 = vld [vmem:[%s3 + $0xf4] sm:$0xf]
      %v1396 = vld [vmem:[%s3 + $0xf8] sm:$0xf]
      %v1397 = vld [vmem:[%s3 + $0xfc] sm:$0xf]
      %v1414 = vunpack.c.l.b16 %v1382
      %v1415 = vunpack.c.l.b16 %v1383
      %v1416 = vunpack.c.l.b16 %v1384
      %v1417 = vunpack.c.l.b16 %v1385
      %v1418 = vunpack.c.l.b16 %v1386
      %v1419 = vunpack.c.l.b16 %v1387
      %v1420 = vunpack.c.l.b16 %v1388
      %v1421 = vunpack.c.l.b16 %v1389
      %v1422 = vunpack.c.l.b16 %v1390
      %v1423 = vunpack.c.l.b16 %v1391
      %v1424 = vunpack.c.l.b16 %v1392
      %v1425 = vunpack.c.l.b16 %v1393
      %v1426 = vunpack.c.l.b16 %v1394
      %v1427 = vunpack.c.l.b16 %v1395
      %v1428 = vunpack.c.l.b16 %v1396
      %v1429 = vunpack.c.l.b16 %v1397
      %v1430 = vpack.c.b16 %v1415, %v1414
      %v1431 = vpack.c.b16 %v1417, %v1416
      %v1432 = vpack.c.b16 %v1419, %v1418
      %v1433 = vpack.c.b16 %v1421, %v1420
      %v1434 = vpack.c.b16 %v1423, %v1422
      %v1435 = vpack.c.b16 %v1425, %v1424
      %v1436 = vpack.c.b16 %v1427, %v1426
      %v1437 = vpack.c.b16 %v1429, %v1428
      %1446 = vmatprep.subr.bf16.mxu0 0
      %1447 = vmatpush1.bf16.msra.mxu0 %v1430
      %1448 = vmatprep.subr.bf16.mxu0 0
      %1449 = vmatpush1.bf16.msra.mxu0 %v1431
      %1450 = vmatprep.subr.bf16.mxu0 0
      %1451 = vmatpush1.bf16.msra.mxu0 %v1432
      %1452 = vmatprep.subr.bf16.mxu0 0
      %1453 = vmatpush1.bf16.msra.mxu0 %v1433
      %1454 = vmatprep.subr.bf16.mxu0 0
      %1455 = vmatpush1.bf16.msra.mxu0 %v1434
      %1456 = vmatprep.subr.bf16.mxu0 0
      %1457 = vmatpush1.bf16.msra.mxu0 %v1435
      %1458 = vmatprep.subr.bf16.mxu0 0
      %1459 = vmatpush1.bf16.msra.mxu0 %v1436
      %1460 = vmatprep.subr.bf16.mxu0 0
      %1461 = vmatpush1.bf16.msra.mxu0 %v1437
      %1462 = vmatprep.subr.bf16.mxu0 0
      %1463 = vmatpush1.bf16.msra.mxu0 0
      %1464 = vmatprep.subr.bf16.mxu0 0
      %1465 = vmatpush1.bf16.msra.mxu0 0
      %1466 = vmatprep.subr.bf16.mxu0 0
      %1467 = vmatpush1.bf16.msra.mxu0 0
      %1468 = vmatprep.subr.bf16.mxu0 0
      %1469 = vmatpush1.bf16.msra.mxu0 0
      %1470 = vmatprep.subr.bf16.mxu0 0
      %1471 = vmatpush1.bf16.msra.mxu0 0
      %1472 = vmatprep.subr.bf16.mxu0 0
      %1473 = vmatpush1.bf16.msra.mxu0 0
      %1474 = vmatprep.subr.bf16.mxu0 0
      %1475 = vmatpush1.bf16.msra.mxu0 0
      %1476 = vmatprep.subr.bf16.mxu0 0
      %1477 = vmatpush1.bf16.msra.mxu0 0
      %1478 = vmatprep.mubr.bf16.mxu0 0
      %1479 = vmatmul.mubr.bf16.gmra.mrb[0].mxu0 %v1366
      %v1480 = vpop.f32.mrb[0].mxu0
      %v1481 = vadd.f32 0.0, %v1480
      %v1482 = vpop.f32.mrb[0].mxu0
      %v1483 = vpop.f32.mrb[0].mxu0
      %v1484 = vadd.f32 0.0, %v1483
      %v1485 = vpop.f32.mrb[0].mxu0
      %1486 = vmatprep.mubr.bf16.mxu0 0
      %1487 = vmatmul.mubr.bf16.gmra.mrb[0].mxu0 %v1367
      %v1488 = vpop.f32.mrb[0].mxu0
      %v1489 = vadd.f32 0.0, %v1488
      %v1490 = vpop.f32.mrb[0].mxu0
      %v1491 = vpop.f32.mrb[0].mxu0
      %v1492 = vadd.f32 0.0, %v1491
      %v1493 = vpop.f32.mrb[0].mxu0
      %1494 = vmatprep.mubr.bf16.mxu0 0
      %1495 = vmatmul.mubr.bf16.gmra.mrb[0].mxu0 %v1368
      %v1496 = vpop.f32.mrb[0].mxu0
      %v1497 = vadd.f32 0.0, %v1496
      %v1498 = vpop.f32.mrb[0].mxu0
      %v1499 = vpop.f32.mrb[0].mxu0
      %v1500 = vadd.f32 0.0, %v1499
      %v1501 = vpop.f32.mrb[0].mxu0
      %1502 = vmatprep.mubr.bf16.mxu0 0
      %1503 = vmatmul.mubr.bf16.gmra.mrb[0].mxu0 %v1369
      %v1504 = vpop.f32.mrb[0].mxu0
      %v1505 = vadd.f32 0.0, %v1504
      %v1506 = vpop.f32.mrb[0].mxu0
      %v1507 = vpop.f32.mrb[0].mxu0
      %v1508 = vadd.f32 0.0, %v1507
      %v1509 = vpop.f32.mrb[0].mxu0
      %1510 = vmatprep.mubr.bf16.mxu0 0
      %1511 = vmatmul.mubr.bf16.gmra.mrb[0].mxu0 %v1370
      %v1512 = vpop.f32.mrb[0].mxu0
      %v1513 = vadd.f32 0.0, %v1512
      %v1514 = vpop.f32.mrb[0].mxu0
      %v1515 = vpop.f32.mrb[0].mxu0
      %v1516 = vadd.f32 0.0, %v1515
      %v1517 = vpop.f32.mrb[0].mxu0
      %1518 = vmatprep.mubr.bf16.mxu0 0
      %1519 = vmatmul.mubr.bf16.gmra.mrb[0].mxu0 %v1371
      %v1520 = vpop.f32.mrb[0].mxu0
      %v1521 = vadd.f32 0.0, %v1520
      %v1522 = vpop.f32.mrb[0].mxu0
      %v1523 = vpop.f32.mrb[0].mxu0
      %v1524 = vadd.f32 0.0, %v1523
      %v1525 = vpop.f32.mrb[0].mxu0
      %1526 = vmatprep.mubr.bf16.mxu0 0
      %1527 = vmatmul.mubr.bf16.gmra.mrb[0].mxu0 %v1372
      %v1528 = vpop.f32.mrb[0].mxu0
      %v1529 = vadd.f32 0.0, %v1528
      %v1530 = vpop.f32.mrb[0].mxu0
      %v1531 = vpop.f32.mrb[0].mxu0
      %v1532 = vadd.f32 0.0, %v1531
      %v1533 = vpop.f32.mrb[0].mxu0
      %1534 = vmatprep.mubr.bf16.mxu0 0
      %1535 = vmatmul.mubr.bf16.gmra.mrb[0].mxu0 %v1373
      %v1536 = vpop.f32.mrb[0].mxu0
      %v1537 = vadd.f32 0.0, %v1536
      %v1538 = vpop.f32.mrb[0].mxu0
      %v1539 = vpop.f32.mrb[0].mxu0
      %v1540 = vadd.f32 0.0, %v1539
      %v1541 = vpop.f32.mrb[0].mxu0
      %1542 = vmatprep.mubr.bf16.mxu0 0
      %1543 = vmatmul.mubr.bf16.gmra.mrb[0].mxu0 %v1374
      %v1544 = vpop.f32.mrb[0].mxu0
      %v1545 = vadd.f32 0.0, %v1544
      %v1546 = vpop.f32.mrb[0].mxu0
      %v1547 = vpop.f32.mrb[0].mxu0
      %v1548 = vadd.f32 0.0, %v1547
      %v1549 = vpop.f32.mrb[0].mxu0
      %1550 = vmatprep.mubr.bf16.mxu0 0
      %1551 = vmatmul.mubr.bf16.gmra.mrb[0].mxu0 %v1375
      %v1552 = vpop.f32.mrb[0].mxu0
      %v1553 = vadd.f32 0.0, %v1552
      %v1554 = vpop.f32.mrb[0].mxu0
      %v1555 = vpop.f32.mrb[0].mxu0
      %v1556 = vadd.f32 0.0, %v1555
      %v1557 = vpop.f32.mrb[0].mxu0
      %1558 = vmatprep.mubr.bf16.mxu0 0
      %1559 = vmatmul.mubr.bf16.gmra.mrb[0].mxu0 %v1376
      %v1560 = vpop.f32.mrb[0].mxu0
      %v1561 = vadd.f32 0.0, %v1560
      %v1562 = vpop.f32.mrb[0].mxu0
      %v1563 = vpop.f32.mrb[0].mxu0
      %v1564 = vadd.f32 0.0, %v1563
      %v1565 = vpop.f32.mrb[0].mxu0
      %1566 = vmatprep.mubr.bf16.mxu0 0
      %1567 = vmatmul.mubr.bf16.gmra.mrb[0].mxu0 %v1377
      %v1568 = vpop.f32.mrb[0].mxu0
      %v1569 = vadd.f32 0.0, %v1568
      %v1570 = vpop.f32.mrb[0].mxu0
      %v1571 = vpop.f32.mrb[0].mxu0
      %v1572 = vadd.f32 0.0, %v1571
      %v1573 = vpop.f32.mrb[0].mxu0
      %1574 = vmatprep.mubr.bf16.mxu0 0
      %1575 = vmatmul.mubr.bf16.gmra.mrb[0].mxu0 %v1378
      %v1576 = vpop.f32.mrb[0].mxu0
      %v1577 = vadd.f32 0.0, %v1576
      %v1578 = vpop.f32.mrb[0].mxu0
      %v1579 = vpop.f32.mrb[0].mxu0
      %v1580 = vadd.f32 0.0, %v1579
      %v1581 = vpop.f32.mrb[0].mxu0
      %1582 = vmatprep.mubr.bf16.mxu0 0
      %1583 = vmatmul.mubr.bf16.gmra.mrb[0].mxu0 %v1379
      %v1584 = vpop.f32.mrb[0].mxu0
      %v1585 = vadd.f32 0.0, %v1584
      %v1586 = vpop.f32.mrb[0].mxu0
      %v1587 = vpop.f32.mrb[0].mxu0
      %v1588 = vadd.f32 0.0, %v1587
      %v1589 = vpop.f32.mrb[0].mxu0
      %1590 = vmatprep.mubr.bf16.mxu0 0
      %1591 = vmatmul.mubr.bf16.gmra.mrb[0].mxu0 %v1380
      %v1592 = vpop.f32.mrb[0].mxu0
      %v1593 = vadd.f32 0.0, %v1592
      %v1594 = vpop.f32.mrb[0].mxu0
      %v1595 = vpop.f32.mrb[0].mxu0
      %v1596 = vadd.f32 0.0, %v1595
      %v1597 = vpop.f32.mrb[0].mxu0
      %1598 = vmatprep.mubr.bf16.mxu0 0
      %1599 = vmatmul.mubr.bf16.gmra.mrb[0].mxu0 %v1381
      %v1600 = vpop.f32.mrb[0].mxu0
      %v1601 = vadd.f32 0.0, %v1600
      %v1602 = vpop.f32.mrb[0].mxu0
      %v1603 = vpop.f32.mrb[0].mxu0
      %v1604 = vadd.f32 0.0, %v1603
      %v1605 = vpop.f32.mrb[0].mxu0
      %1606 = vdwg.mxu0
      %v1607 = vadd.f32 %v1302, %v1481
      %v1608 = vadd.f32 %v1303, %v1484
      %v1609 = vadd.f32 %v1304, %v1489
      %v1610 = vadd.f32 %v1305, %v1492
      %v1611 = vadd.f32 %v1306, %v1497
      %v1612 = vadd.f32 %v1307, %v1500
      %v1613 = vadd.f32 %v1308, %v1505
      %v1614 = vadd.f32 %v1309, %v1508
      %v1615 = vadd.f32 %v1310, %v1513
      %v1616 = vadd.f32 %v1311, %v1516
      %v1617 = vadd.f32 %v1312, %v1521
      %v1618 = vadd.f32 %v1313, %v1524
      %v1619 = vadd.f32 %v1314, %v1529
      %v1620 = vadd.f32 %v1315, %v1532
      %v1621 = vadd.f32 %v1316, %v1537
      %v1622 = vadd.f32 %v1317, %v1540
      %v1623 = vadd.f32 %v1318, %v1545
      %v1624 = vadd.f32 %v1319, %v1548
      %v1625 = vadd.f32 %v1320, %v1553
      %v1626 = vadd.f32 %v1321, %v1556
      %v1627 = vadd.f32 %v1322, %v1561
      %v1628 = vadd.f32 %v1323, %v1564
      %v1629 = vadd.f32 %v1324, %v1569
      %v1630 = vadd.f32 %v1325, %v1572
      %v1631 = vadd.f32 %v1326, %v1577
      %v1632 = vadd.f32 %v1327, %v1580
      %v1633 = vadd.f32 %v1328, %v1585
      %v1634 = vadd.f32 %v1329, %v1588
      %v1635 = vadd.f32 %v1330, %v1593
      %v1636 = vadd.f32 %v1331, %v1596
      %v1637 = vadd.f32 %v1332, %v1601
      %v1638 = vadd.f32 %v1333, %v1604
      %v1639 = vld [vmem:[%s450 + $0x1] sm:$0xff]
      %v1640 = vld [vmem:[%s450 + $0x9] sm:$0xff]
      %v1641 = vld [vmem:[%s450 + $0x19] sm:$0xff]
      %v1642 = vld [vmem:[%s450 + $0x21] sm:$0xff]
      %v1643 = vld [vmem:[%s450 + $0x31] sm:$0xff]
      %v1644 = vld [vmem:[%s450 + $0x39] sm:$0xff]
      %v1645 = vld [vmem:[%s450 + $0x49] sm:$0xff]
      %v1646 = vld [vmem:[%s450 + $0x51] sm:$0xff]
      %v1647 = vld [vmem:[%s450 + $0x61] sm:$0xff]
      %v1648 = vld [vmem:[%s450 + $0x69] sm:$0xff]
      %v1649 = vld [vmem:[%s450 + $0x79] sm:$0xff]
      %v1650 = vld [vmem:[%s450 + $0x81] sm:$0xff]
      %v1651 = vld [vmem:[%s450 + $0x91] sm:$0xff]
      %v1652 = vld [vmem:[%s450 + $0x99] sm:$0xff]
      %v1653 = vld [vmem:[%s450 + $0xa9] sm:$0xff]
      %v1654 = vld [vmem:[%s450 + $0xb1] sm:$0xff]
      %v1655 = vld [vmem:[%s450 + $0xc1] sm:$0xff]
      %v1656 = vld [vmem:[%s450 + $0xc9] sm:$0xff]
      %v1657 = vld [vmem:[%s450 + $0xd9] sm:$0xff]
      %v1658 = vld [vmem:[%s450 + $0xe1] sm:$0xff]
      %v1659 = vld [vmem:[%s450 + $0xf1] sm:$0xff]
      %v1660 = vld [vmem:[%s450 + $0xf9] sm:$0xff]
      %v1661 = vld [vmem:[%s450 + $0x109] sm:$0xff]
      %v1662 = vld [vmem:[%s450 + $0x111] sm:$0xff]
      %v1663 = vld [vmem:[%s450 + $0x121] sm:$0xff]
      %v1664 = vld [vmem:[%s450 + $0x129] sm:$0xff]
      %v1665 = vld [vmem:[%s450 + $0x139] sm:$0xff]
      %v1666 = vld [vmem:[%s450 + $0x141] sm:$0xff]
      %v1667 = vld [vmem:[%s450 + $0x151] sm:$0xff]
      %v1668 = vld [vmem:[%s450 + $0x159] sm:$0xff]
      %v1669 = vld [vmem:[%s450 + $0x169] sm:$0xff]
      %v1670 = vld [vmem:[%s450 + $0x171] sm:$0xff]
      %v1671 = vpack.c.bf16 %v1640, %v1639
      %v1672 = vpack.c.bf16 %v1642, %v1641
      %v1673 = vpack.c.bf16 %v1644, %v1643
      %v1674 = vpack.c.bf16 %v1646, %v1645
      %v1675 = vpack.c.bf16 %v1648, %v1647
      %v1676 = vpack.c.bf16 %v1650, %v1649
      %v1677 = vpack.c.bf16 %v1652, %v1651
      %v1678 = vpack.c.bf16 %v1654, %v1653
      %v1679 = vpack.c.bf16 %v1656, %v1655
      %v1680 = vpack.c.bf16 %v1658, %v1657
      %v1681 = vpack.c.bf16 %v1660, %v1659
      %v1682 = vpack.c.bf16 %v1662, %v1661
      %v1683 = vpack.c.bf16 %v1664, %v1663
      %v1684 = vpack.c.bf16 %v1666, %v1665
      %v1685 = vpack.c.bf16 %v1668, %v1667
      %v1686 = vpack.c.bf16 %v1670, %v1669
      %v1687 = vld [vmem:[%s3 + $0x100] sm:$0xf]
      %v1688 = vld [vmem:[%s3 + $0x104] sm:$0xf]
      %v1689 = vld [vmem:[%s3 + $0x108] sm:$0xf]
      %v1690 = vld [vmem:[%s3 + $0x10c] sm:$0xf]
      %v1691 = vld [vmem:[%s3 + $0x110] sm:$0xf]
      %v1692 = vld [vmem:[%s3 + $0x114] sm:$0xf]
      %v1693 = vld [vmem:[%s3 + $0x118] sm:$0xf]
      %v1694 = vld [vmem:[%s3 + $0x11c] sm:$0xf]
      %v1695 = vld [vmem:[%s3 + $0x120] sm:$0xf]
      %v1696 = vld [vmem:[%s3 + $0x124] sm:$0xf]
      %v1697 = vld [vmem:[%s3 + $0x128] sm:$0xf]
      %v1698 = vld [vmem:[%s3 + $0x12c] sm:$0xf]
      %v1699 = vld [vmem:[%s3 + $0x130] sm:$0xf]
      %v1700 = vld [vmem:[%s3 + $0x134] sm:$0xf]
      %v1701 = vld [vmem:[%s3 + $0x138] sm:$0xf]
      %v1702 = vld [vmem:[%s3 + $0x13c] sm:$0xf]
      %v1719 = vunpack.c.l.b16 %v1687
      %v1720 = vunpack.c.l.b16 %v1688
      %v1721 = vunpack.c.l.b16 %v1689
      %v1722 = vunpack.c.l.b16 %v1690
      %v1723 = vunpack.c.l.b16 %v1691
      %v1724 = vunpack.c.l.b16 %v1692
      %v1725 = vunpack.c.l.b16 %v1693
      %v1726 = vunpack.c.l.b16 %v1694
      %v1727 = vunpack.c.l.b16 %v1695
      %v1728 = vunpack.c.l.b16 %v1696
      %v1729 = vunpack.c.l.b16 %v1697
      %v1730 = vunpack.c.l.b16 %v1698
      %v1731 = vunpack.c.l.b16 %v1699
      %v1732 = vunpack.c.l.b16 %v1700
      %v1733 = vunpack.c.l.b16 %v1701
      %v1734 = vunpack.c.l.b16 %v1702
      %v1735 = vpack.c.b16 %v1720, %v1719
      %v1736 = vpack.c.b16 %v1722, %v1721
      %v1737 = vpack.c.b16 %v1724, %v1723
      %v1738 = vpack.c.b16 %v1726, %v1725
      %v1739 = vpack.c.b16 %v1728, %v1727
      %v1740 = vpack.c.b16 %v1730, %v1729
      %v1741 = vpack.c.b16 %v1732, %v1731
      %v1742 = vpack.c.b16 %v1734, %v1733
      %1751 = vmatprep.subr.bf16.mxu0 0
      %1752 = vmatpush1.bf16.msra.mxu0 %v1735
      %1753 = vmatprep.subr.bf16.mxu0 0
      %1754 = vmatpush1.bf16.msra.mxu0 %v1736
      %1755 = vmatprep.subr.bf16.mxu0 0
      %1756 = vmatpush1.bf16.msra.mxu0 %v1737
      %1757 = vmatprep.subr.bf16.mxu0 0
      %1758 = vmatpush1.bf16.msra.mxu0 %v1738
      %1759 = vmatprep.subr.bf16.mxu0 0
      %1760 = vmatpush1.bf16.msra.mxu0 %v1739
      %1761 = vmatprep.subr.bf16.mxu0 0
      %1762 = vmatpush1.bf16.msra.mxu0 %v1740
      %1763 = vmatprep.subr.bf16.mxu0 0
      %1764 = vmatpush1.bf16.msra.mxu0 %v1741
      %1765 = vmatprep.subr.bf16.mxu0 0
      %1766 = vmatpush1.bf16.msra.mxu0 %v1742
      %1767 = vmatprep.subr.bf16.mxu0 0
      %1768 = vmatpush1.bf16.msra.mxu0 0
      %1769 = vmatprep.subr.bf16.mxu0 0
      %1770 = vmatpush1.bf16.msra.mxu0 0
      %1771 = vmatprep.subr.bf16.mxu0 0
      %1772 = vmatpush1.bf16.msra.mxu0 0
      %1773 = vmatprep.subr.bf16.mxu0 0
      %1774 = vmatpush1.bf16.msra.mxu0 0
      %1775 = vmatprep.subr.bf16.mxu0 0
      %1776 = vmatpush1.bf16.msra.mxu0 0
      %1777 = vmatprep.subr.bf16.mxu0 0
      %1778 = vmatpush1.bf16.msra.mxu0 0
      %1779 = vmatprep.subr.bf16.mxu0 0
      %1780 = vmatpush1.bf16.msra.mxu0 0
      %1781 = vmatprep.subr.bf16.mxu0 0
      %1782 = vmatpush1.bf16.msra.mxu0 0
      %1783 = vmatprep.mubr.bf16.mxu0 0
      %1784 = vmatmul.mubr.bf16.gmra.mrb[0].mxu0 %v1671
      %v1785 = vpop.f32.mrb[0].mxu0
      %v1786 = vadd.f32 0.0, %v1785
      %v1787 = vpop.f32.mrb[0].mxu0
      %v1788 = vpop.f32.mrb[0].mxu0
      %v1789 = vadd.f32 0.0, %v1788
      %v1790 = vpop.f32.mrb[0].mxu0
      %1791 = vmatprep.mubr.bf16.mxu0 0
      %1792 = vmatmul.mubr.bf16.gmra.mrb[0].mxu0 %v1672
      %v1793 = vpop.f32.mrb[0].mxu0
      %v1794 = vadd.f32 0.0, %v1793
      %v1795 = vpop.f32.mrb[0].mxu0
      %v1796 = vpop.f32.mrb[0].mxu0
      %v1797 = vadd.f32 0.0, %v1796
      %v1798 = vpop.f32.mrb[0].mxu0
      %1799 = vmatprep.mubr.bf16.mxu0 0
      %1800 = vmatmul.mubr.bf16.gmra.mrb[0].mxu0 %v1673
      %v1801 = vpop.f32.mrb[0].mxu0
      %v1802 = vadd.f32 0.0, %v1801
      %v1803 = vpop.f32.mrb[0].mxu0
      %v1804 = vpop.f32.mrb[0].mxu0
      %v1805 = vadd.f32 0.0, %v1804
      %v1806 = vpop.f32.mrb[0].mxu0
      %1807 = vmatprep.mubr.bf16.mxu0 0
      %1808 = vmatmul.mubr.bf16.gmra.mrb[0].mxu0 %v1674
      %v1809 = vpop.f32.mrb[0].mxu0
      %v1810 = vadd.f32 0.0, %v1809
      %v1811 = vpop.f32.mrb[0].mxu0
      %v1812 = vpop.f32.mrb[0].mxu0
      %v1813 = vadd.f32 0.0, %v1812
      %v1814 = vpop.f32.mrb[0].mxu0
      %1815 = vmatprep.mubr.bf16.mxu0 0
      %1816 = vmatmul.mubr.bf16.gmra.mrb[0].mxu0 %v1675
      %v1817 = vpop.f32.mrb[0].mxu0
      %v1818 = vadd.f32 0.0, %v1817
      %v1819 = vpop.f32.mrb[0].mxu0
      %v1820 = vpop.f32.mrb[0].mxu0
      %v1821 = vadd.f32 0.0, %v1820
      %v1822 = vpop.f32.mrb[0].mxu0
      %1823 = vmatprep.mubr.bf16.mxu0 0
      %1824 = vmatmul.mubr.bf16.gmra.mrb[0].mxu0 %v1676
      %v1825 = vpop.f32.mrb[0].mxu0
      %v1826 = vadd.f32 0.0, %v1825
      %v1827 = vpop.f32.mrb[0].mxu0
      %v1828 = vpop.f32.mrb[0].mxu0
      %v1829 = vadd.f32 0.0, %v1828
      %v1830 = vpop.f32.mrb[0].mxu0
      %1831 = vmatprep.mubr.bf16.mxu0 0
      %1832 = vmatmul.mubr.bf16.gmra.mrb[0].mxu0 %v1677
      %v1833 = vpop.f32.mrb[0].mxu0
      %v1834 = vadd.f32 0.0, %v1833
      %v1835 = vpop.f32.mrb[0].mxu0
      %v1836 = vpop.f32.mrb[0].mxu0
      %v1837 = vadd.f32 0.0, %v1836
      %v1838 = vpop.f32.mrb[0].mxu0
      %1839 = vmatprep.mubr.bf16.mxu0 0
      %1840 = vmatmul.mubr.bf16.gmra.mrb[0].mxu0 %v1678
      %v1841 = vpop.f32.mrb[0].mxu0
      %v1842 = vadd.f32 0.0, %v1841
      %v1843 = vpop.f32.mrb[0].mxu0
      %v1844 = vpop.f32.mrb[0].mxu0
      %v1845 = vadd.f32 0.0, %v1844
      %v1846 = vpop.f32.mrb[0].mxu0
      %1847 = vmatprep.mubr.bf16.mxu0 0
      %1848 = vmatmul.mubr.bf16.gmra.mrb[0].mxu0 %v1679
      %v1849 = vpop.f32.mrb[0].mxu0
      %v1850 = vadd.f32 0.0, %v1849
      %v1851 = vpop.f32.mrb[0].mxu0
      %v1852 = vpop.f32.mrb[0].mxu0
      %v1853 = vadd.f32 0.0, %v1852
      %v1854 = vpop.f32.mrb[0].mxu0
      %1855 = vmatprep.mubr.bf16.mxu0 0
      %1856 = vmatmul.mubr.bf16.gmra.mrb[0].mxu0 %v1680
      %v1857 = vpop.f32.mrb[0].mxu0
      %v1858 = vadd.f32 0.0, %v1857
      %v1859 = vpop.f32.mrb[0].mxu0
      %v1860 = vpop.f32.mrb[0].mxu0
      %v1861 = vadd.f32 0.0, %v1860
      %v1862 = vpop.f32.mrb[0].mxu0
      %1863 = vmatprep.mubr.bf16.mxu0 0
      %1864 = vmatmul.mubr.bf16.gmra.mrb[0].mxu0 %v1681
      %v1865 = vpop.f32.mrb[0].mxu0
      %v1866 = vadd.f32 0.0, %v1865
      %v1867 = vpop.f32.mrb[0].mxu0
      %v1868 = vpop.f32.mrb[0].mxu0
      %v1869 = vadd.f32 0.0, %v1868
      %v1870 = vpop.f32.mrb[0].mxu0
      %1871 = vmatprep.mubr.bf16.mxu0 0
      %1872 = vmatmul.mubr.bf16.gmra.mrb[0].mxu0 %v1682
      %v1873 = vpop.f32.mrb[0].mxu0
      %v1874 = vadd.f32 0.0, %v1873
      %v1875 = vpop.f32.mrb[0].mxu0
      %v1876 = vpop.f32.mrb[0].mxu0
      %v1877 = vadd.f32 0.0, %v1876
      %v1878 = vpop.f32.mrb[0].mxu0
      %1879 = vmatprep.mubr.bf16.mxu0 0
      %1880 = vmatmul.mubr.bf16.gmra.mrb[0].mxu0 %v1683
      %v1881 = vpop.f32.mrb[0].mxu0
      %v1882 = vadd.f32 0.0, %v1881
      %v1883 = vpop.f32.mrb[0].mxu0
      %v1884 = vpop.f32.mrb[0].mxu0
      %v1885 = vadd.f32 0.0, %v1884
      %v1886 = vpop.f32.mrb[0].mxu0
      %1887 = vmatprep.mubr.bf16.mxu0 0
      %1888 = vmatmul.mubr.bf16.gmra.mrb[0].mxu0 %v1684
      %v1889 = vpop.f32.mrb[0].mxu0
      %v1890 = vadd.f32 0.0, %v1889
      %v1891 = vpop.f32.mrb[0].mxu0
      %v1892 = vpop.f32.mrb[0].mxu0
      %v1893 = vadd.f32 0.0, %v1892
      %v1894 = vpop.f32.mrb[0].mxu0
      %1895 = vmatprep.mubr.bf16.mxu0 0
      %1896 = vmatmul.mubr.bf16.gmra.mrb[0].mxu0 %v1685
      %v1897 = vpop.f32.mrb[0].mxu0
      %v1898 = vadd.f32 0.0, %v1897
      %v1899 = vpop.f32.mrb[0].mxu0
      %v1900 = vpop.f32.mrb[0].mxu0
      %v1901 = vadd.f32 0.0, %v1900
      %v1902 = vpop.f32.mrb[0].mxu0
      %1903 = vmatprep.mubr.bf16.mxu0 0
      %1904 = vmatmul.mubr.bf16.gmra.mrb[0].mxu0 %v1686
      %v1905 = vpop.f32.mrb[0].mxu0
      %v1906 = vadd.f32 0.0, %v1905
      %v1907 = vpop.f32.mrb[0].mxu0
      %v1908 = vpop.f32.mrb[0].mxu0
      %v1909 = vadd.f32 0.0, %v1908
      %v1910 = vpop.f32.mrb[0].mxu0
      %1911 = vdwg.mxu0
      %v1912 = vadd.f32 %v1607, %v1786
      %v1913 = vadd.f32 %v1608, %v1789
      %v1914 = vadd.f32 %v1609, %v1794
      %v1915 = vadd.f32 %v1610, %v1797
      %v1916 = vadd.f32 %v1611, %v1802
      %v1917 = vadd.f32 %v1612, %v1805
      %v1918 = vadd.f32 %v1613, %v1810
      %v1919 = vadd.f32 %v1614, %v1813
      %v1920 = vadd.f32 %v1615, %v1818
      %v1921 = vadd.f32 %v1616, %v1821
      %v1922 = vadd.f32 %v1617, %v1826
      %v1923 = vadd.f32 %v1618, %v1829
      %v1924 = vadd.f32 %v1619, %v1834
      %v1925 = vadd.f32 %v1620, %v1837
      %v1926 = vadd.f32 %v1621, %v1842
      %v1927 = vadd.f32 %v1622, %v1845
      %v1928 = vadd.f32 %v1623, %v1850
      %v1929 = vadd.f32 %v1624, %v1853
      %v1930 = vadd.f32 %v1625, %v1858
      %v1931 = vadd.f32 %v1626, %v1861
      %v1932 = vadd.f32 %v1627, %v1866
      %v1933 = vadd.f32 %v1628, %v1869
      %v1934 = vadd.f32 %v1629, %v1874
      %v1935 = vadd.f32 %v1630, %v1877
      %v1936 = vadd.f32 %v1631, %v1882
      %v1937 = vadd.f32 %v1632, %v1885
      %v1938 = vadd.f32 %v1633, %v1890
      %v1939 = vadd.f32 %v1634, %v1893
      %v1940 = vadd.f32 %v1635, %v1898
      %v1941 = vadd.f32 %v1636, %v1901
      %v1942 = vadd.f32 %v1637, %v1906
      %v1943 = vadd.f32 %v1638, %v1909
      %v1944 = vld [vmem:[%s450 + $0x2] sm:$0xff]
      %v1945 = vld [vmem:[%s450 + $0xa] sm:$0xff]
      %v1946 = vld [vmem:[%s450 + $0x1a] sm:$0xff]
      %v1947 = vld [vmem:[%s450 + $0x22] sm:$0xff]
      %v1948 = vld [vmem:[%s450 + $0x32] sm:$0xff]
      %v1949 = vld [vmem:[%s450 + $0x3a] sm:$0xff]
      %v1950 = vld [vmem:[%s450 + $0x4a] sm:$0xff]
      %v1951 = vld [vmem:[%s450 + $0x52] sm:$0xff]
      %v1952 = vld [vmem:[%s450 + $0x62] sm:$0xff]
      %v1953 = vld [vmem:[%s450 + $0x6a] sm:$0xff]
      %v1954 = vld [vmem:[%s450 + $0x7a] sm:$0xff]
      %v1955 = vld [vmem:[%s450 + $0x82] sm:$0xff]
      %v1956 = vld [vmem:[%s450 + $0x92] sm:$0xff]
      %v1957 = vld [vmem:[%s450 + $0x9a] sm:$0xff]
      %v1958 = vld [vmem:[%s450 + $0xaa] sm:$0xff]
      %v1959 = vld [vmem:[%s450 + $0xb2] sm:$0xff]
      %v1960 = vld [vmem:[%s450 + $0xc2] sm:$0xff]
      %v1961 = vld [vmem:[%s450 + $0xca] sm:$0xff]
      %v1962 = vld [vmem:[%s450 + $0xda] sm:$0xff]
      %v1963 = vld [vmem:[%s450 + $0xe2] sm:$0xff]
      %v1964 = vld [vmem:[%s450 + $0xf2] sm:$0xff]
      %v1965 = vld [vmem:[%s450 + $0xfa] sm:$0xff]
      %v1966 = vld [vmem:[%s450 + $0x10a] sm:$0xff]
      %v1967 = vld [vmem:[%s450 + $0x112] sm:$0xff]
      %v1968 = vld [vmem:[%s450 + $0x122] sm:$0xff]
      %v1969 = vld [vmem:[%s450 + $0x12a] sm:$0xff]
      %v1970 = vld [vmem:[%s450 + $0x13a] sm:$0xff]
      %v1971 = vld [vmem:[%s450 + $0x142] sm:$0xff]
      %v1972 = vld [vmem:[%s450 + $0x152] sm:$0xff]
      %v1973 = vld [vmem:[%s450 + $0x15a] sm:$0xff]
      %v1974 = vld [vmem:[%s450 + $0x16a] sm:$0xff]
      %v1975 = vld [vmem:[%s450 + $0x172] sm:$0xff]
      %v1976 = vpack.c.bf16 %v1945, %v1944
      %v1977 = vpack.c.bf16 %v1947, %v1946
      %v1978 = vpack.c.bf16 %v1949, %v1948
      %v1979 = vpack.c.bf16 %v1951, %v1950
      %v1980 = vpack.c.bf16 %v1953, %v1952
      %v1981 = vpack.c.bf16 %v1955, %v1954
      %v1982 = vpack.c.bf16 %v1957, %v1956
      %v1983 = vpack.c.bf16 %v1959, %v1958
      %v1984 = vpack.c.bf16 %v1961, %v1960
      %v1985 = vpack.c.bf16 %v1963, %v1962
      %v1986 = vpack.c.bf16 %v1965, %v1964
      %v1987 = vpack.c.bf16 %v1967, %v1966
      %v1988 = vpack.c.bf16 %v1969, %v1968
      %v1989 = vpack.c.bf16 %v1971, %v1970
      %v1990 = vpack.c.bf16 %v1973, %v1972
      %v1991 = vpack.c.bf16 %v1975, %v1974
      %v1992 = vld [vmem:[%s3 + $0x140] sm:$0xf]
      %v1993 = vld [vmem:[%s3 + $0x144] sm:$0xf]
      %v1994 = vld [vmem:[%s3 + $0x148] sm:$0xf]
      %v1995 = vld [vmem:[%s3 + $0x14c] sm:$0xf]
      %v1996 = vld [vmem:[%s3 + $0x150] sm:$0xf]
      %v1997 = vld [vmem:[%s3 + $0x154] sm:$0xf]
      %v1998 = vld [vmem:[%s3 + $0x158] sm:$0xf]
      %v1999 = vld [vmem:[%s3 + $0x15c] sm:$0xf]
      %v2000 = vld [vmem:[%s3 + $0x160] sm:$0xf]
      %v2001 = vld [vmem:[%s3 + $0x164] sm:$0xf]
      %v2002 = vld [vmem:[%s3 + $0x168] sm:$0xf]
      %v2003 = vld [vmem:[%s3 + $0x16c] sm:$0xf]
      %v2004 = vld [vmem:[%s3 + $0x170] sm:$0xf]
      %v2005 = vld [vmem:[%s3 + $0x174] sm:$0xf]
      %v2006 = vld [vmem:[%s3 + $0x178] sm:$0xf]
      %v2007 = vld [vmem:[%s3 + $0x17c] sm:$0xf]
      %v2024 = vunpack.c.l.b16 %v1992
      %v2025 = vunpack.c.l.b16 %v1993
      %v2026 = vunpack.c.l.b16 %v1994
      %v2027 = vunpack.c.l.b16 %v1995
      %v2028 = vunpack.c.l.b16 %v1996
      %v2029 = vunpack.c.l.b16 %v1997
      %v2030 = vunpack.c.l.b16 %v1998
      %v2031 = vunpack.c.l.b16 %v1999
      %v2032 = vunpack.c.l.b16 %v2000
      %v2033 = vunpack.c.l.b16 %v2001
      %v2034 = vunpack.c.l.b16 %v2002
      %v2035 = vunpack.c.l.b16 %v2003
      %v2036 = vunpack.c.l.b16 %v2004
      %v2037 = vunpack.c.l.b16 %v2005
      %v2038 = vunpack.c.l.b16 %v2006
      %v2039 = vunpack.c.l.b16 %v2007
      %v2040 = vpack.c.b16 %v2025, %v2024
      %v2041 = vpack.c.b16 %v2027, %v2026
      %v2042 = vpack.c.b16 %v2029, %v2028
      %v2043 = vpack.c.b16 %v2031, %v2030
      %v2044 = vpack.c.b16 %v2033, %v2032
      %v2045 = vpack.c.b16 %v2035, %v2034
      %v2046 = vpack.c.b16 %v2037, %v2036
      %v2047 = vpack.c.b16 %v2039, %v2038
      %2056 = vmatprep.subr.bf16.mxu0 0
      %2057 = vmatpush1.bf16.msra.mxu0 %v2040
      %2058 = vmatprep.subr.bf16.mxu0 0
      %2059 = vmatpush1.bf16.msra.mxu0 %v2041
      %2060 = vmatprep.subr.bf16.mxu0 0
      %2061 = vmatpush1.bf16.msra.mxu0 %v2042
      %2062 = vmatprep.subr.bf16.mxu0 0
      %2063 = vmatpush1.bf16.msra.mxu0 %v2043
      %2064 = vmatprep.subr.bf16.mxu0 0
      %2065 = vmatpush1.bf16.msra.mxu0 %v2044
      %2066 = vmatprep.subr.bf16.mxu0 0
      %2067 = vmatpush1.bf16.msra.mxu0 %v2045
      %2068 = vmatprep.subr.bf16.mxu0 0
      %2069 = vmatpush1.bf16.msra.mxu0 %v2046
      %2070 = vmatprep.subr.bf16.mxu0 0
      %2071 = vmatpush1.bf16.msra.mxu0 %v2047
      %2072 = vmatprep.subr.bf16.mxu0 0
      %2073 = vmatpush1.bf16.msra.mxu0 0
      %2074 = vmatprep.subr.bf16.mxu0 0
      %2075 = vmatpush1.bf16.msra.mxu0 0
      %2076 = vmatprep.subr.bf16.mxu0 0
      %2077 = vmatpush1.bf16.msra.mxu0 0
      %2078 = vmatprep.subr.bf16.mxu0 0
      %2079 = vmatpush1.bf16.msra.mxu0 0
      %2080 = vmatprep.subr.bf16.mxu0 0
      %2081 = vmatpush1.bf16.msra.mxu0 0
      %2082 = vmatprep.subr.bf16.mxu0 0
      %2083 = vmatpush1.bf16.msra.mxu0 0
      %2084 = vmatprep.subr.bf16.mxu0 0
      %2085 = vmatpush1.bf16.msra.mxu0 0
      %2086 = vmatprep.subr.bf16.mxu0 0
      %2087 = vmatpush1.bf16.msra.mxu0 0
      %2088 = vmatprep.mubr.bf16.mxu0 0
      %2089 = vmatmul.mubr.bf16.gmra.mrb[0].mxu0 %v1976
      %v2090 = vpop.f32.mrb[0].mxu0
      %v2091 = vadd.f32 0.0, %v2090
      %v2092 = vpop.f32.mrb[0].mxu0
      %v2093 = vpop.f32.mrb[0].mxu0
      %v2094 = vadd.f32 0.0, %v2093
      %v2095 = vpop.f32.mrb[0].mxu0
      %2096 = vmatprep.mubr.bf16.mxu0 0
      %2097 = vmatmul.mubr.bf16.gmra.mrb[0].mxu0 %v1977
      %v2098 = vpop.f32.mrb[0].mxu0
      %v2099 = vadd.f32 0.0, %v2098
      %v2100 = vpop.f32.mrb[0].mxu0
      %v2101 = vpop.f32.mrb[0].mxu0
      %v2102 = vadd.f32 0.0, %v2101
      %v2103 = vpop.f32.mrb[0].mxu0
      %2104 = vmatprep.mubr.bf16.mxu0 0
      %2105 = vmatmul.mubr.bf16.gmra.mrb[0].mxu0 %v1978
      %v2106 = vpop.f32.mrb[0].mxu0
      %v2107 = vadd.f32 0.0, %v2106
      %v2108 = vpop.f32.mrb[0].mxu0
      %v2109 = vpop.f32.mrb[0].mxu0
      %v2110 = vadd.f32 0.0, %v2109
      %v2111 = vpop.f32.mrb[0].mxu0
      %2112 = vmatprep.mubr.bf16.mxu0 0
      %2113 = vmatmul.mubr.bf16.gmra.mrb[0].mxu0 %v1979
      %v2114 = vpop.f32.mrb[0].mxu0
      %v2115 = vadd.f32 0.0, %v2114
      %v2116 = vpop.f32.mrb[0].mxu0
      %v2117 = vpop.f32.mrb[0].mxu0
      %v2118 = vadd.f32 0.0, %v2117
      %v2119 = vpop.f32.mrb[0].mxu0
      %2120 = vmatprep.mubr.bf16.mxu0 0
      %2121 = vmatmul.mubr.bf16.gmra.mrb[0].mxu0 %v1980
      %v2122 = vpop.f32.mrb[0].mxu0
      %v2123 = vadd.f32 0.0, %v2122
      %v2124 = vpop.f32.mrb[0].mxu0
      %v2125 = vpop.f32.mrb[0].mxu0
      %v2126 = vadd.f32 0.0, %v2125
      %v2127 = vpop.f32.mrb[0].mxu0
      %2128 = vmatprep.mubr.bf16.mxu0 0
      %2129 = vmatmul.mubr.bf16.gmra.mrb[0].mxu0 %v1981
      %v2130 = vpop.f32.mrb[0].mxu0
      %v2131 = vadd.f32 0.0, %v2130
      %v2132 = vpop.f32.mrb[0].mxu0
      %v2133 = vpop.f32.mrb[0].mxu0
      %v2134 = vadd.f32 0.0, %v2133
      %v2135 = vpop.f32.mrb[0].mxu0
      %2136 = vmatprep.mubr.bf16.mxu0 0
      %2137 = vmatmul.mubr.bf16.gmra.mrb[0].mxu0 %v1982
      %v2138 = vpop.f32.mrb[0].mxu0
      %v2139 = vadd.f32 0.0, %v2138
      %v2140 = vpop.f32.mrb[0].mxu0
      %v2141 = vpop.f32.mrb[0].mxu0
      %v2142 = vadd.f32 0.0, %v2141
      %v2143 = vpop.f32.mrb[0].mxu0
      %2144 = vmatprep.mubr.bf16.mxu0 0
      %2145 = vmatmul.mubr.bf16.gmra.mrb[0].mxu0 %v1983
      %v2146 = vpop.f32.mrb[0].mxu0
      %v2147 = vadd.f32 0.0, %v2146
      %v2148 = vpop.f32.mrb[0].mxu0
      %v2149 = vpop.f32.mrb[0].mxu0
      %v2150 = vadd.f32 0.0, %v2149
      %v2151 = vpop.f32.mrb[0].mxu0
      %2152 = vmatprep.mubr.bf16.mxu0 0
      %2153 = vmatmul.mubr.bf16.gmra.mrb[0].mxu0 %v1984
      %v2154 = vpop.f32.mrb[0].mxu0
      %v2155 = vadd.f32 0.0, %v2154
      %v2156 = vpop.f32.mrb[0].mxu0
      %v2157 = vpop.f32.mrb[0].mxu0
      %v2158 = vadd.f32 0.0, %v2157
      %v2159 = vpop.f32.mrb[0].mxu0
      %2160 = vmatprep.mubr.bf16.mxu0 0
      %2161 = vmatmul.mubr.bf16.gmra.mrb[0].mxu0 %v1985
      %v2162 = vpop.f32.mrb[0].mxu0
      %v2163 = vadd.f32 0.0, %v2162
      %v2164 = vpop.f32.mrb[0].mxu0
      %v2165 = vpop.f32.mrb[0].mxu0
      %v2166 = vadd.f32 0.0, %v2165
      %v2167 = vpop.f32.mrb[0].mxu0
      %2168 = vmatprep.mubr.bf16.mxu0 0
      %2169 = vmatmul.mubr.bf16.gmra.mrb[0].mxu0 %v1986
      %v2170 = vpop.f32.mrb[0].mxu0
      %v2171 = vadd.f32 0.0, %v2170
      %v2172 = vpop.f32.mrb[0].mxu0
      %v2173 = vpop.f32.mrb[0].mxu0
      %v2174 = vadd.f32 0.0, %v2173
      %v2175 = vpop.f32.mrb[0].mxu0
      %2176 = vmatprep.mubr.bf16.mxu0 0
      %2177 = vmatmul.mubr.bf16.gmra.mrb[0].mxu0 %v1987
      %v2178 = vpop.f32.mrb[0].mxu0
      %v2179 = vadd.f32 0.0, %v2178
      %v2180 = vpop.f32.mrb[0].mxu0
      %v2181 = vpop.f32.mrb[0].mxu0
      %v2182 = vadd.f32 0.0, %v2181
      %v2183 = vpop.f32.mrb[0].mxu0
      %2184 = vmatprep.mubr.bf16.mxu0 0
      %2185 = vmatmul.mubr.bf16.gmra.mrb[0].mxu0 %v1988
      %v2186 = vpop.f32.mrb[0].mxu0
      %v2187 = vadd.f32 0.0, %v2186
      %v2188 = vpop.f32.mrb[0].mxu0
      %v2189 = vpop.f32.mrb[0].mxu0
      %v2190 = vadd.f32 0.0, %v2189
      %v2191 = vpop.f32.mrb[0].mxu0
      %2192 = vmatprep.mubr.bf16.mxu0 0
      %2193 = vmatmul.mubr.bf16.gmra.mrb[0].mxu0 %v1989
      %v2194 = vpop.f32.mrb[0].mxu0
      %v2195 = vadd.f32 0.0, %v2194
      %v2196 = vpop.f32.mrb[0].mxu0
      %v2197 = vpop.f32.mrb[0].mxu0
      %v2198 = vadd.f32 0.0, %v2197
      %v2199 = vpop.f32.mrb[0].mxu0
      %2200 = vmatprep.mubr.bf16.mxu0 0
      %2201 = vmatmul.mubr.bf16.gmra.mrb[0].mxu0 %v1990
      %v2202 = vpop.f32.mrb[0].mxu0
      %v2203 = vadd.f32 0.0, %v2202
      %v2204 = vpop.f32.mrb[0].mxu0
      %v2205 = vpop.f32.mrb[0].mxu0
      %v2206 = vadd.f32 0.0, %v2205
      %v2207 = vpop.f32.mrb[0].mxu0
      %2208 = vmatprep.mubr.bf16.mxu0 0
      %2209 = vmatmul.mubr.bf16.gmra.mrb[0].mxu0 %v1991
      %v2210 = vpop.f32.mrb[0].mxu0
      %v2211 = vadd.f32 0.0, %v2210
      %v2212 = vpop.f32.mrb[0].mxu0
      %v2213 = vpop.f32.mrb[0].mxu0
      %v2214 = vadd.f32 0.0, %v2213
      %v2215 = vpop.f32.mrb[0].mxu0
      %2216 = vdwg.mxu0
      %v2217 = vadd.f32 %v1912, %v2091
      %v2218 = vadd.f32 %v1913, %v2094
      %v2219 = vadd.f32 %v1914, %v2099
      %v2220 = vadd.f32 %v1915, %v2102
      %v2221 = vadd.f32 %v1916, %v2107
      %v2222 = vadd.f32 %v1917, %v2110
      %v2223 = vadd.f32 %v1918, %v2115
      %v2224 = vadd.f32 %v1919, %v2118
      %v2225 = vadd.f32 %v1920, %v2123
      %v2226 = vadd.f32 %v1921, %v2126
      %v2227 = vadd.f32 %v1922, %v2131
      %v2228 = vadd.f32 %v1923, %v2134
      %v2229 = vadd.f32 %v1924, %v2139
      %v2230 = vadd.f32 %v1925, %v2142
      %v2231 = vadd.f32 %v1926, %v2147
      %v2232 = vadd.f32 %v1927, %v2150
      %v2233 = vadd.f32 %v1928, %v2155
      %v2234 = vadd.f32 %v1929, %v2158
      %v2235 = vadd.f32 %v1930, %v2163
      %v2236 = vadd.f32 %v1931, %v2166
      %v2237 = vadd.f32 %v1932, %v2171
      %v2238 = vadd.f32 %v1933, %v2174
      %v2239 = vadd.f32 %v1934, %v2179
      %v2240 = vadd.f32 %v1935, %v2182
      %v2241 = vadd.f32 %v1936, %v2187
      %v2242 = vadd.f32 %v1937, %v2190
      %v2243 = vadd.f32 %v1938, %v2195
      %v2244 = vadd.f32 %v1939, %v2198
      %v2245 = vadd.f32 %v1940, %v2203
      %v2246 = vadd.f32 %v1941, %v2206
      %v2247 = vadd.f32 %v1942, %v2211
      %v2248 = vadd.f32 %v1943, %v2214
      %s2249 = scalar_lea.vmem [#allocation2], 48
      %v2250 = vld [vmem:[%s2249] sm:$0xff]
      %v2251 = vld [vmem:[%s2249 + $0x8] sm:$0xff]
      %v2252 = vld [vmem:[%s2249 + $0x18] sm:$0xff]
      %v2253 = vld [vmem:[%s2249 + $0x20] sm:$0xff]
      %v2254 = vld [vmem:[%s2249 + $0x30] sm:$0xff]
      %v2255 = vld [vmem:[%s2249 + $0x38] sm:$0xff]
      %v2256 = vld [vmem:[%s2249 + $0x48] sm:$0xff]
      %v2257 = vld [vmem:[%s2249 + $0x50] sm:$0xff]
      %v2258 = vld [vmem:[%s2249 + $0x60] sm:$0xff]
      %v2259 = vld [vmem:[%s2249 + $0x68] sm:$0xff]
      %v2260 = vld [vmem:[%s2249 + $0x78] sm:$0xff]
      %v2261 = vld [vmem:[%s2249 + $0x80] sm:$0xff]
      %v2262 = vld [vmem:[%s2249 + $0x90] sm:$0xff]
      %v2263 = vld [vmem:[%s2249 + $0x98] sm:$0xff]
      %v2264 = vld [vmem:[%s2249 + $0xa8] sm:$0xff]
      %v2265 = vld [vmem:[%s2249 + $0xb0] sm:$0xff]
      %v2266 = vld [vmem:[%s2249 + $0xc0] sm:$0xff]
      %v2267 = vld [vmem:[%s2249 + $0xc8] sm:$0xff]
      %v2268 = vld [vmem:[%s2249 + $0xd8] sm:$0xff]
      %v2269 = vld [vmem:[%s2249 + $0xe0] sm:$0xff]
      %v2270 = vld [vmem:[%s2249 + $0xf0] sm:$0xff]
      %v2271 = vld [vmem:[%s2249 + $0xf8] sm:$0xff]
      %v2272 = vld [vmem:[%s2249 + $0x108] sm:$0xff]
      %v2273 = vld [vmem:[%s2249 + $0x110] sm:$0xff]
      %v2274 = vld [vmem:[%s2249 + $0x120] sm:$0xff]
      %v2275 = vld [vmem:[%s2249 + $0x128] sm:$0xff]
      %v2276 = vld [vmem:[%s2249 + $0x138] sm:$0xff]
      %v2277 = vld [vmem:[%s2249 + $0x140] sm:$0xff]
      %v2278 = vld [vmem:[%s2249 + $0x150] sm:$0xff]
      %v2279 = vld [vmem:[%s2249 + $0x158] sm:$0xff]
      %v2280 = vld [vmem:[%s2249 + $0x168] sm:$0xff]
      %v2281 = vld [vmem:[%s2249 + $0x170] sm:$0xff]
      %v2282 = vpack.c.bf16 %v2251, %v2250
      %v2283 = vpack.c.bf16 %v2253, %v2252
      %v2284 = vpack.c.bf16 %v2255, %v2254
      %v2285 = vpack.c.bf16 %v2257, %v2256
      %v2286 = vpack.c.bf16 %v2259, %v2258
      %v2287 = vpack.c.bf16 %v2261, %v2260
      %v2288 = vpack.c.bf16 %v2263, %v2262
      %v2289 = vpack.c.bf16 %v2265, %v2264
      %v2290 = vpack.c.bf16 %v2267, %v2266
      %v2291 = vpack.c.bf16 %v2269, %v2268
      %v2292 = vpack.c.bf16 %v2271, %v2270
      %v2293 = vpack.c.bf16 %v2273, %v2272
      %v2294 = vpack.c.bf16 %v2275, %v2274
      %v2295 = vpack.c.bf16 %v2277, %v2276
      %v2296 = vpack.c.bf16 %v2279, %v2278
      %v2297 = vpack.c.bf16 %v2281, %v2280
      %v2298 = vld [vmem:[%s3 + $0x180] sm:$0xf]
      %v2299 = vld [vmem:[%s3 + $0x184] sm:$0xf]
      %v2300 = vld [vmem:[%s3 + $0x188] sm:$0xf]
      %v2301 = vld [vmem:[%s3 + $0x18c] sm:$0xf]
      %v2302 = vld [vmem:[%s3 + $0x190] sm:$0xf]
      %v2303 = vld [vmem:[%s3 + $0x194] sm:$0xf]
      %v2304 = vld [vmem:[%s3 + $0x198] sm:$0xf]
      %v2305 = vld [vmem:[%s3 + $0x19c] sm:$0xf]
      %v2306 = vld [vmem:[%s3 + $0x1a0] sm:$0xf]
      %v2307 = vld [vmem:[%s3 + $0x1a4] sm:$0xf]
      %v2308 = vld [vmem:[%s3 + $0x1a8] sm:$0xf]
      %v2309 = vld [vmem:[%s3 + $0x1ac] sm:$0xf]
      %v2310 = vld [vmem:[%s3 + $0x1b0] sm:$0xf]
      %v2311 = vld [vmem:[%s3 + $0x1b4] sm:$0xf]
      %v2312 = vld [vmem:[%s3 + $0x1b8] sm:$0xf]
      %v2313 = vld [vmem:[%s3 + $0x1bc] sm:$0xf]
      %v2330 = vunpack.c.l.b16 %v2298
      %v2331 = vunpack.c.l.b16 %v2299
      %v2332 = vunpack.c.l.b16 %v2300
      %v2333 = vunpack.c.l.b16 %v2301
      %v2334 = vunpack.c.l.b16 %v2302
      %v2335 = vunpack.c.l.b16 %v2303
      %v2336 = vunpack.c.l.b16 %v2304
      %v2337 = vunpack.c.l.b16 %v2305
      %v2338 = vunpack.c.l.b16 %v2306
      %v2339 = vunpack.c.l.b16 %v2307
      %v2340 = vunpack.c.l.b16 %v2308
      %v2341 = vunpack.c.l.b16 %v2309
      %v2342 = vunpack.c.l.b16 %v2310
      %v2343 = vunpack.c.l.b16 %v2311
      %v2344 = vunpack.c.l.b16 %v2312
      %v2345 = vunpack.c.l.b16 %v2313
      %v2346 = vpack.c.b16 %v2331, %v2330
      %v2347 = vpack.c.b16 %v2333, %v2332
      %v2348 = vpack.c.b16 %v2335, %v2334
      %v2349 = vpack.c.b16 %v2337, %v2336
      %v2350 = vpack.c.b16 %v2339, %v2338
      %v2351 = vpack.c.b16 %v2341, %v2340
      %v2352 = vpack.c.b16 %v2343, %v2342
      %v2353 = vpack.c.b16 %v2345, %v2344
      %2362 = vmatprep.subr.bf16.mxu0 0
      %2363 = vmatpush1.bf16.msra.mxu0 %v2346
      %2364 = vmatprep.subr.bf16.mxu0 0
      %2365 = vmatpush1.bf16.msra.mxu0 %v2347
      %2366 = vmatprep.subr.bf16.mxu0 0
      %2367 = vmatpush1.bf16.msra.mxu0 %v2348
      %2368 = vmatprep.subr.bf16.mxu0 0
      %2369 = vmatpush1.bf16.msra.mxu0 %v2349
      %2370 = vmatprep.subr.bf16.mxu0 0
      %2371 = vmatpush1.bf16.msra.mxu0 %v2350
      %2372 = vmatprep.subr.bf16.mxu0 0
      %2373 = vmatpush1.bf16.msra.mxu0 %v2351
      %2374 = vmatprep.subr.bf16.mxu0 0
      %2375 = vmatpush1.bf16.msra.mxu0 %v2352
      %2376 = vmatprep.subr.bf16.mxu0 0
      %2377 = vmatpush1.bf16.msra.mxu0 %v2353
      %2378 = vmatprep.subr.bf16.mxu0 0
      %2379 = vmatpush1.bf16.msra.mxu0 0
      %2380 = vmatprep.subr.bf16.mxu0 0
      %2381 = vmatpush1.bf16.msra.mxu0 0
      %2382 = vmatprep.subr.bf16.mxu0 0
      %2383 = vmatpush1.bf16.msra.mxu0 0
      %2384 = vmatprep.subr.bf16.mxu0 0
      %2385 = vmatpush1.bf16.msra.mxu0 0
      %2386 = vmatprep.subr.bf16.mxu0 0
      %2387 = vmatpush1.bf16.msra.mxu0 0
      %2388 = vmatprep.subr.bf16.mxu0 0
      %2389 = vmatpush1.bf16.msra.mxu0 0
      %2390 = vmatprep.subr.bf16.mxu0 0
      %2391 = vmatpush1.bf16.msra.mxu0 0
      %2392 = vmatprep.subr.bf16.mxu0 0
      %2393 = vmatpush1.bf16.msra.mxu0 0
      %2394 = vmatprep.mubr.bf16.mxu0 0
      %2395 = vmatmul.mubr.bf16.gmra.mrb[0].mxu0 %v2282
      %v2396 = vpop.f32.mrb[0].mxu0
      %v2397 = vadd.f32 0.0, %v2396
      %v2398 = vpop.f32.mrb[0].mxu0
      %v2399 = vpop.f32.mrb[0].mxu0
      %v2400 = vadd.f32 0.0, %v2399
      %v2401 = vpop.f32.mrb[0].mxu0
      %2402 = vmatprep.mubr.bf16.mxu0 0
      %2403 = vmatmul.mubr.bf16.gmra.mrb[0].mxu0 %v2283
      %v2404 = vpop.f32.mrb[0].mxu0
      %v2405 = vadd.f32 0.0, %v2404
      %v2406 = vpop.f32.mrb[0].mxu0
      %v2407 = vpop.f32.mrb[0].mxu0
      %v2408 = vadd.f32 0.0, %v2407
      %v2409 = vpop.f32.mrb[0].mxu0
      %2410 = vmatprep.mubr.bf16.mxu0 0
      %2411 = vmatmul.mubr.bf16.gmra.mrb[0].mxu0 %v2284
      %v2412 = vpop.f32.mrb[0].mxu0
      %v2413 = vadd.f32 0.0, %v2412
      %v2414 = vpop.f32.mrb[0].mxu0
      %v2415 = vpop.f32.mrb[0].mxu0
      %v2416 = vadd.f32 0.0, %v2415
      %v2417 = vpop.f32.mrb[0].mxu0
      %2418 = vmatprep.mubr.bf16.mxu0 0
      %2419 = vmatmul.mubr.bf16.gmra.mrb[0].mxu0 %v2285
      %v2420 = vpop.f32.mrb[0].mxu0
      %v2421 = vadd.f32 0.0, %v2420
      %v2422 = vpop.f32.mrb[0].mxu0
      %v2423 = vpop.f32.mrb[0].mxu0
      %v2424 = vadd.f32 0.0, %v2423
      %v2425 = vpop.f32.mrb[0].mxu0
      %2426 = vmatprep.mubr.bf16.mxu0 0
      %2427 = vmatmul.mubr.bf16.gmra.mrb[0].mxu0 %v2286
      %v2428 = vpop.f32.mrb[0].mxu0
      %v2429 = vadd.f32 0.0, %v2428
      %v2430 = vpop.f32.mrb[0].mxu0
      %v2431 = vpop.f32.mrb[0].mxu0
      %v2432 = vadd.f32 0.0, %v2431
      %v2433 = vpop.f32.mrb[0].mxu0
      %2434 = vmatprep.mubr.bf16.mxu0 0
      %2435 = vmatmul.mubr.bf16.gmra.mrb[0].mxu0 %v2287
      %v2436 = vpop.f32.mrb[0].mxu0
      %v2437 = vadd.f32 0.0, %v2436
      %v2438 = vpop.f32.mrb[0].mxu0
      %v2439 = vpop.f32.mrb[0].mxu0
      %v2440 = vadd.f32 0.0, %v2439
      %v2441 = vpop.f32.mrb[0].mxu0
      %2442 = vmatprep.mubr.bf16.mxu0 0
      %2443 = vmatmul.mubr.bf16.gmra.mrb[0].mxu0 %v2288
      %v2444 = vpop.f32.mrb[0].mxu0
      %v2445 = vadd.f32 0.0, %v2444
      %v2446 = vpop.f32.mrb[0].mxu0
      %v2447 = vpop.f32.mrb[0].mxu0
      %v2448 = vadd.f32 0.0, %v2447
      %v2449 = vpop.f32.mrb[0].mxu0
      %2450 = vmatprep.mubr.bf16.mxu0 0
      %2451 = vmatmul.mubr.bf16.gmra.mrb[0].mxu0 %v2289
      %v2452 = vpop.f32.mrb[0].mxu0
      %v2453 = vadd.f32 0.0, %v2452
      %v2454 = vpop.f32.mrb[0].mxu0
      %v2455 = vpop.f32.mrb[0].mxu0
      %v2456 = vadd.f32 0.0, %v2455
      %v2457 = vpop.f32.mrb[0].mxu0
      %2458 = vmatprep.mubr.bf16.mxu0 0
      %2459 = vmatmul.mubr.bf16.gmra.mrb[0].mxu0 %v2290
      %v2460 = vpop.f32.mrb[0].mxu0
      %v2461 = vadd.f32 0.0, %v2460
      %v2462 = vpop.f32.mrb[0].mxu0
      %v2463 = vpop.f32.mrb[0].mxu0
      %v2464 = vadd.f32 0.0, %v2463
      %v2465 = vpop.f32.mrb[0].mxu0
      %2466 = vmatprep.mubr.bf16.mxu0 0
      %2467 = vmatmul.mubr.bf16.gmra.mrb[0].mxu0 %v2291
      %v2468 = vpop.f32.mrb[0].mxu0
      %v2469 = vadd.f32 0.0, %v2468
      %v2470 = vpop.f32.mrb[0].mxu0
      %v2471 = vpop.f32.mrb[0].mxu0
      %v2472 = vadd.f32 0.0, %v2471
      %v2473 = vpop.f32.mrb[0].mxu0
      %2474 = vmatprep.mubr.bf16.mxu0 0
      %2475 = vmatmul.mubr.bf16.gmra.mrb[0].mxu0 %v2292
      %v2476 = vpop.f32.mrb[0].mxu0
      %v2477 = vadd.f32 0.0, %v2476
      %v2478 = vpop.f32.mrb[0].mxu0
      %v2479 = vpop.f32.mrb[0].mxu0
      %v2480 = vadd.f32 0.0, %v2479
      %v2481 = vpop.f32.mrb[0].mxu0
      %2482 = vmatprep.mubr.bf16.mxu0 0
      %2483 = vmatmul.mubr.bf16.gmra.mrb[0].mxu0 %v2293
      %v2484 = vpop.f32.mrb[0].mxu0
      %v2485 = vadd.f32 0.0, %v2484
      %v2486 = vpop.f32.mrb[0].mxu0
      %v2487 = vpop.f32.mrb[0].mxu0
      %v2488 = vadd.f32 0.0, %v2487
      %v2489 = vpop.f32.mrb[0].mxu0
      %2490 = vmatprep.mubr.bf16.mxu0 0
      %2491 = vmatmul.mubr.bf16.gmra.mrb[0].mxu0 %v2294
      %v2492 = vpop.f32.mrb[0].mxu0
      %v2493 = vadd.f32 0.0, %v2492
      %v2494 = vpop.f32.mrb[0].mxu0
      %v2495 = vpop.f32.mrb[0].mxu0
      %v2496 = vadd.f32 0.0, %v2495
      %v2497 = vpop.f32.mrb[0].mxu0
      %2498 = vmatprep.mubr.bf16.mxu0 0
      %2499 = vmatmul.mubr.bf16.gmra.mrb[0].mxu0 %v2295
      %v2500 = vpop.f32.mrb[0].mxu0
      %v2501 = vadd.f32 0.0, %v2500
      %v2502 = vpop.f32.mrb[0].mxu0
      %v2503 = vpop.f32.mrb[0].mxu0
      %v2504 = vadd.f32 0.0, %v2503
      %v2505 = vpop.f32.mrb[0].mxu0
      %2506 = vmatprep.mubr.bf16.mxu0 0
      %2507 = vmatmul.mubr.bf16.gmra.mrb[0].mxu0 %v2296
      %v2508 = vpop.f32.mrb[0].mxu0
      %v2509 = vadd.f32 0.0, %v2508
      %v2510 = vpop.f32.mrb[0].mxu0
      %v2511 = vpop.f32.mrb[0].mxu0
      %v2512 = vadd.f32 0.0, %v2511
      %v2513 = vpop.f32.mrb[0].mxu0
      %2514 = vmatprep.mubr.bf16.mxu0 0
      %2515 = vmatmul.mubr.bf16.gmra.mrb[0].mxu0 %v2297
      %v2516 = vpop.f32.mrb[0].mxu0
      %v2517 = vadd.f32 0.0, %v2516
      %v2518 = vpop.f32.mrb[0].mxu0
      %v2519 = vpop.f32.mrb[0].mxu0
      %v2520 = vadd.f32 0.0, %v2519
      %v2521 = vpop.f32.mrb[0].mxu0
      %2522 = vdwg.mxu0
      %v2523 = vadd.f32 %v2217, %v2397
      %v2524 = vadd.f32 %v2218, %v2400
      %v2525 = vadd.f32 %v2219, %v2405
      %v2526 = vadd.f32 %v2220, %v2408
      %v2527 = vadd.f32 %v2221, %v2413
      %v2528 = vadd.f32 %v2222, %v2416
      %v2529 = vadd.f32 %v2223, %v2421
      %v2530 = vadd.f32 %v2224, %v2424
      %v2531 = vadd.f32 %v2225, %v2429
      %v2532 = vadd.f32 %v2226, %v2432
      %v2533 = vadd.f32 %v2227, %v2437
      %v2534 = vadd.f32 %v2228, %v2440
      %v2535 = vadd.f32 %v2229, %v2445
      %v2536 = vadd.f32 %v2230, %v2448
      %v2537 = vadd.f32 %v2231, %v2453
      %v2538 = vadd.f32 %v2232, %v2456
      %v2539 = vadd.f32 %v2233, %v2461
      %v2540 = vadd.f32 %v2234, %v2464
      %v2541 = vadd.f32 %v2235, %v2469
      %v2542 = vadd.f32 %v2236, %v2472
      %v2543 = vadd.f32 %v2237, %v2477
      %v2544 = vadd.f32 %v2238, %v2480
      %v2545 = vadd.f32 %v2239, %v2485
      %v2546 = vadd.f32 %v2240, %v2488
      %v2547 = vadd.f32 %v2241, %v2493
      %v2548 = vadd.f32 %v2242, %v2496
      %v2549 = vadd.f32 %v2243, %v2501
      %v2550 = vadd.f32 %v2244, %v2504
      %v2551 = vadd.f32 %v2245, %v2509
      %v2552 = vadd.f32 %v2246, %v2512
      %v2553 = vadd.f32 %v2247, %v2517
      %v2554 = vadd.f32 %v2248, %v2520
      %v2555 = vld [vmem:[%s2249 + $0x1] sm:$0xff]
      %v2556 = vld [vmem:[%s2249 + $0x9] sm:$0xff]
      %v2557 = vld [vmem:[%s2249 + $0x19] sm:$0xff]
      %v2558 = vld [vmem:[%s2249 + $0x21] sm:$0xff]
      %v2559 = vld [vmem:[%s2249 + $0x31] sm:$0xff]
      %v2560 = vld [vmem:[%s2249 + $0x39] sm:$0xff]
      %v2561 = vld [vmem:[%s2249 + $0x49] sm:$0xff]
      %v2562 = vld [vmem:[%s2249 + $0x51] sm:$0xff]
      %v2563 = vld [vmem:[%s2249 + $0x61] sm:$0xff]
      %v2564 = vld [vmem:[%s2249 + $0x69] sm:$0xff]
      %v2565 = vld [vmem:[%s2249 + $0x79] sm:$0xff]
      %v2566 = vld [vmem:[%s2249 + $0x81] sm:$0xff]
      %v2567 = vld [vmem:[%s2249 + $0x91] sm:$0xff]
      %v2568 = vld [vmem:[%s2249 + $0x99] sm:$0xff]
      %v2569 = vld [vmem:[%s2249 + $0xa9] sm:$0xff]
      %v2570 = vld [vmem:[%s2249 + $0xb1] sm:$0xff]
      %v2571 = vld [vmem:[%s2249 + $0xc1] sm:$0xff]
      %v2572 = vld [vmem:[%s2249 + $0xc9] sm:$0xff]
      %v2573 = vld [vmem:[%s2249 + $0xd9] sm:$0xff]
      %v2574 = vld [vmem:[%s2249 + $0xe1] sm:$0xff]
      %v2575 = vld [vmem:[%s2249 + $0xf1] sm:$0xff]
      %v2576 = vld [vmem:[%s2249 + $0xf9] sm:$0xff]
      %v2577 = vld [vmem:[%s2249 + $0x109] sm:$0xff]
      %v2578 = vld [vmem:[%s2249 + $0x111] sm:$0xff]
      %v2579 = vld [vmem:[%s2249 + $0x121] sm:$0xff]
      %v2580 = vld [vmem:[%s2249 + $0x129] sm:$0xff]
      %v2581 = vld [vmem:[%s2249 + $0x139] sm:$0xff]
      %v2582 = vld [vmem:[%s2249 + $0x141] sm:$0xff]
      %v2583 = vld [vmem:[%s2249 + $0x151] sm:$0xff]
      %v2584 = vld [vmem:[%s2249 + $0x159] sm:$0xff]
      %v2585 = vld [vmem:[%s2249 + $0x169] sm:$0xff]
      %v2586 = vld [vmem:[%s2249 + $0x171] sm:$0xff]
      %v2587 = vpack.c.bf16 %v2556, %v2555
      %v2588 = vpack.c.bf16 %v2558, %v2557
      %v2589 = vpack.c.bf16 %v2560, %v2559
      %v2590 = vpack.c.bf16 %v2562, %v2561
      %v2591 = vpack.c.bf16 %v2564, %v2563
      %v2592 = vpack.c.bf16 %v2566, %v2565
      %v2593 = vpack.c.bf16 %v2568, %v2567
      %v2594 = vpack.c.bf16 %v2570, %v2569
      %v2595 = vpack.c.bf16 %v2572, %v2571
      %v2596 = vpack.c.bf16 %v2574, %v2573
      %v2597 = vpack.c.bf16 %v2576, %v2575
      %v2598 = vpack.c.bf16 %v2578, %v2577
      %v2599 = vpack.c.bf16 %v2580, %v2579
      %v2600 = vpack.c.bf16 %v2582, %v2581
      %v2601 = vpack.c.bf16 %v2584, %v2583
      %v2602 = vpack.c.bf16 %v2586, %v2585
      %v2603 = vld [vmem:[%s3 + $0x1c0] sm:$0xf]
      %v2604 = vld [vmem:[%s3 + $0x1c4] sm:$0xf]
      %v2605 = vld [vmem:[%s3 + $0x1c8] sm:$0xf]
      %v2606 = vld [vmem:[%s3 + $0x1cc] sm:$0xf]
      %v2607 = vld [vmem:[%s3 + $0x1d0] sm:$0xf]
      %v2608 = vld [vmem:[%s3 + $0x1d4] sm:$0xf]
      %v2609 = vld [vmem:[%s3 + $0x1d8] sm:$0xf]
      %v2610 = vld [vmem:[%s3 + $0x1dc] sm:$0xf]
      %v2611 = vld [vmem:[%s3 + $0x1e0] sm:$0xf]
      %v2612 = vld [vmem:[%s3 + $0x1e4] sm:$0xf]
      %v2613 = vld [vmem:[%s3 + $0x1e8] sm:$0xf]
      %v2614 = vld [vmem:[%s3 + $0x1ec] sm:$0xf]
      %v2615 = vld [vmem:[%s3 + $0x1f0] sm:$0xf]
      %v2616 = vld [vmem:[%s3 + $0x1f4] sm:$0xf]
      %v2617 = vld [vmem:[%s3 + $0x1f8] sm:$0xf]
      %v2618 = vld [vmem:[%s3 + $0x1fc] sm:$0xf]
      %v2635 = vunpack.c.l.b16 %v2603
      %v2636 = vunpack.c.l.b16 %v2604
      %v2637 = vunpack.c.l.b16 %v2605
      %v2638 = vunpack.c.l.b16 %v2606
      %v2639 = vunpack.c.l.b16 %v2607
      %v2640 = vunpack.c.l.b16 %v2608
      %v2641 = vunpack.c.l.b16 %v2609
      %v2642 = vunpack.c.l.b16 %v2610
      %v2643 = vunpack.c.l.b16 %v2611
      %v2644 = vunpack.c.l.b16 %v2612
      %v2645 = vunpack.c.l.b16 %v2613
      %v2646 = vunpack.c.l.b16 %v2614
      %v2647 = vunpack.c.l.b16 %v2615
      %v2648 = vunpack.c.l.b16 %v2616
      %v2649 = vunpack.c.l.b16 %v2617
      %v2650 = vunpack.c.l.b16 %v2618
      %v2651 = vpack.c.b16 %v2636, %v2635
      %v2652 = vpack.c.b16 %v2638, %v2637
      %v2653 = vpack.c.b16 %v2640, %v2639
      %v2654 = vpack.c.b16 %v2642, %v2641
      %v2655 = vpack.c.b16 %v2644, %v2643
      %v2656 = vpack.c.b16 %v2646, %v2645
      %v2657 = vpack.c.b16 %v2648, %v2647
      %v2658 = vpack.c.b16 %v2650, %v2649
      %2667 = vmatprep.subr.bf16.mxu0 0
      %2668 = vmatpush1.bf16.msra.mxu0 %v2651
      %2669 = vmatprep.subr.bf16.mxu0 0
      %2670 = vmatpush1.bf16.msra.mxu0 %v2652
      %2671 = vmatprep.subr.bf16.mxu0 0
      %2672 = vmatpush1.bf16.msra.mxu0 %v2653
      %2673 = vmatprep.subr.bf16.mxu0 0
      %2674 = vmatpush1.bf16.msra.mxu0 %v2654
      %2675 = vmatprep.subr.bf16.mxu0 0
      %2676 = vmatpush1.bf16.msra.mxu0 %v2655
      %2677 = vmatprep.subr.bf16.mxu0 0
      %2678 = vmatpush1.bf16.msra.mxu0 %v2656
      %2679 = vmatprep.subr.bf16.mxu0 0
      %2680 = vmatpush1.bf16.msra.mxu0 %v2657
      %2681 = vmatprep.subr.bf16.mxu0 0
      %2682 = vmatpush1.bf16.msra.mxu0 %v2658
      %2683 = vmatprep.subr.bf16.mxu0 0
      %2684 = vmatpush1.bf16.msra.mxu0 0
      %2685 = vmatprep.subr.bf16.mxu0 0
      %2686 = vmatpush1.bf16.msra.mxu0 0
      %2687 = vmatprep.subr.bf16.mxu0 0
      %2688 = vmatpush1.bf16.msra.mxu0 0
      %2689 = vmatprep.subr.bf16.mxu0 0
      %2690 = vmatpush1.bf16.msra.mxu0 0
      %2691 = vmatprep.subr.bf16.mxu0 0
      %2692 = vmatpush1.bf16.msra.mxu0 0
      %2693 = vmatprep.subr.bf16.mxu0 0
      %2694 = vmatpush1.bf16.msra.mxu0 0
      %2695 = vmatprep.subr.bf16.mxu0 0
      %2696 = vmatpush1.bf16.msra.mxu0 0
      %2697 = vmatprep.subr.bf16.mxu0 0
      %2698 = vmatpush1.bf16.msra.mxu0 0
      %2699 = vmatprep.mubr.bf16.mxu0 0
      %2700 = vmatmul.mubr.bf16.gmra.mrb[0].mxu0 %v2587
      %v2701 = vpop.f32.mrb[0].mxu0
      %v2702 = vadd.f32 0.0, %v2701
      %v2703 = vpop.f32.mrb[0].mxu0
      %v2704 = vpop.f32.mrb[0].mxu0
      %v2705 = vadd.f32 0.0, %v2704
      %v2706 = vpop.f32.mrb[0].mxu0
      %2707 = vmatprep.mubr.bf16.mxu0 0
      %2708 = vmatmul.mubr.bf16.gmra.mrb[0].mxu0 %v2588
      %v2709 = vpop.f32.mrb[0].mxu0
      %v2710 = vadd.f32 0.0, %v2709
      %v2711 = vpop.f32.mrb[0].mxu0
      %v2712 = vpop.f32.mrb[0].mxu0
      %v2713 = vadd.f32 0.0, %v2712
      %v2714 = vpop.f32.mrb[0].mxu0
      %2715 = vmatprep.mubr.bf16.mxu0 0
      %2716 = vmatmul.mubr.bf16.gmra.mrb[0].mxu0 %v2589
      %v2717 = vpop.f32.mrb[0].mxu0
      %v2718 = vadd.f32 0.0, %v2717
      %v2719 = vpop.f32.mrb[0].mxu0
      %v2720 = vpop.f32.mrb[0].mxu0
      %v2721 = vadd.f32 0.0, %v2720
      %v2722 = vpop.f32.mrb[0].mxu0
      %2723 = vmatprep.mubr.bf16.mxu0 0
      %2724 = vmatmul.mubr.bf16.gmra.mrb[0].mxu0 %v2590
      %v2725 = vpop.f32.mrb[0].mxu0
      %v2726 = vadd.f32 0.0, %v2725
      %v2727 = vpop.f32.mrb[0].mxu0
      %v2728 = vpop.f32.mrb[0].mxu0
      %v2729 = vadd.f32 0.0, %v2728
      %v2730 = vpop.f32.mrb[0].mxu0
      %2731 = vmatprep.mubr.bf16.mxu0 0
      %2732 = vmatmul.mubr.bf16.gmra.mrb[0].mxu0 %v2591
      %v2733 = vpop.f32.mrb[0].mxu0
      %v2734 = vadd.f32 0.0, %v2733
      %v2735 = vpop.f32.mrb[0].mxu0
      %v2736 = vpop.f32.mrb[0].mxu0
      %v2737 = vadd.f32 0.0, %v2736
      %v2738 = vpop.f32.mrb[0].mxu0
      %2739 = vmatprep.mubr.bf16.mxu0 0
      %2740 = vmatmul.mubr.bf16.gmra.mrb[0].mxu0 %v2592
      %v2741 = vpop.f32.mrb[0].mxu0
      %v2742 = vadd.f32 0.0, %v2741
      %v2743 = vpop.f32.mrb[0].mxu0
      %v2744 = vpop.f32.mrb[0].mxu0
      %v2745 = vadd.f32 0.0, %v2744
      %v2746 = vpop.f32.mrb[0].mxu0
      %2747 = vmatprep.mubr.bf16.mxu0 0
      %2748 = vmatmul.mubr.bf16.gmra.mrb[0].mxu0 %v2593
      %v2749 = vpop.f32.mrb[0].mxu0
      %v2750 = vadd.f32 0.0, %v2749
      %v2751 = vpop.f32.mrb[0].mxu0
      %v2752 = vpop.f32.mrb[0].mxu0
      %v2753 = vadd.f32 0.0, %v2752
      %v2754 = vpop.f32.mrb[0].mxu0
      %2755 = vmatprep.mubr.bf16.mxu0 0
      %2756 = vmatmul.mubr.bf16.gmra.mrb[0].mxu0 %v2594
      %v2757 = vpop.f32.mrb[0].mxu0
      %v2758 = vadd.f32 0.0, %v2757
      %v2759 = vpop.f32.mrb[0].mxu0
      %v2760 = vpop.f32.mrb[0].mxu0
      %v2761 = vadd.f32 0.0, %v2760
      %v2762 = vpop.f32.mrb[0].mxu0
      %2763 = vmatprep.mubr.bf16.mxu0 0
      %2764 = vmatmul.mubr.bf16.gmra.mrb[0].mxu0 %v2595
      %v2765 = vpop.f32.mrb[0].mxu0
      %v2766 = vadd.f32 0.0, %v2765
      %v2767 = vpop.f32.mrb[0].mxu0
      %v2768 = vpop.f32.mrb[0].mxu0
      %v2769 = vadd.f32 0.0, %v2768
      %v2770 = vpop.f32.mrb[0].mxu0
      %2771 = vmatprep.mubr.bf16.mxu0 0
      %2772 = vmatmul.mubr.bf16.gmra.mrb[0].mxu0 %v2596
      %v2773 = vpop.f32.mrb[0].mxu0
      %v2774 = vadd.f32 0.0, %v2773
      %v2775 = vpop.f32.mrb[0].mxu0
      %v2776 = vpop.f32.mrb[0].mxu0
      %v2777 = vadd.f32 0.0, %v2776
      %v2778 = vpop.f32.mrb[0].mxu0
      %2779 = vmatprep.mubr.bf16.mxu0 0
      %2780 = vmatmul.mubr.bf16.gmra.mrb[0].mxu0 %v2597
      %v2781 = vpop.f32.mrb[0].mxu0
      %v2782 = vadd.f32 0.0, %v2781
      %v2783 = vpop.f32.mrb[0].mxu0
      %v2784 = vpop.f32.mrb[0].mxu0
      %v2785 = vadd.f32 0.0, %v2784
      %v2786 = vpop.f32.mrb[0].mxu0
      %2787 = vmatprep.mubr.bf16.mxu0 0
      %2788 = vmatmul.mubr.bf16.gmra.mrb[0].mxu0 %v2598
      %v2789 = vpop.f32.mrb[0].mxu0
      %v2790 = vadd.f32 0.0, %v2789
      %v2791 = vpop.f32.mrb[0].mxu0
      %v2792 = vpop.f32.mrb[0].mxu0
      %v2793 = vadd.f32 0.0, %v2792
      %v2794 = vpop.f32.mrb[0].mxu0
      %2795 = vmatprep.mubr.bf16.mxu0 0
      %2796 = vmatmul.mubr.bf16.gmra.mrb[0].mxu0 %v2599
      %v2797 = vpop.f32.mrb[0].mxu0
      %v2798 = vadd.f32 0.0, %v2797
      %v2799 = vpop.f32.mrb[0].mxu0
      %v2800 = vpop.f32.mrb[0].mxu0
      %v2801 = vadd.f32 0.0, %v2800
      %v2802 = vpop.f32.mrb[0].mxu0
      %2803 = vmatprep.mubr.bf16.mxu0 0
      %2804 = vmatmul.mubr.bf16.gmra.mrb[0].mxu0 %v2600
      %v2805 = vpop.f32.mrb[0].mxu0
      %v2806 = vadd.f32 0.0, %v2805
      %v2807 = vpop.f32.mrb[0].mxu0
      %v2808 = vpop.f32.mrb[0].mxu0
      %v2809 = vadd.f32 0.0, %v2808
      %v2810 = vpop.f32.mrb[0].mxu0
      %2811 = vmatprep.mubr.bf16.mxu0 0
      %2812 = vmatmul.mubr.bf16.gmra.mrb[0].mxu0 %v2601
      %v2813 = vpop.f32.mrb[0].mxu0
      %v2814 = vadd.f32 0.0, %v2813
      %v2815 = vpop.f32.mrb[0].mxu0
      %v2816 = vpop.f32.mrb[0].mxu0
      %v2817 = vadd.f32 0.0, %v2816
      %v2818 = vpop.f32.mrb[0].mxu0
      %2819 = vmatprep.mubr.bf16.mxu0 0
      %2820 = vmatmul.mubr.bf16.gmra.mrb[0].mxu0 %v2602
      %v2821 = vpop.f32.mrb[0].mxu0
      %v2822 = vadd.f32 0.0, %v2821
      %v2823 = vpop.f32.mrb[0].mxu0
      %v2824 = vpop.f32.mrb[0].mxu0
      %v2825 = vadd.f32 0.0, %v2824
      %v2826 = vpop.f32.mrb[0].mxu0
      %2827 = vdwg.mxu0
      %v2828 = vadd.f32 %v2523, %v2702
      %v2829 = vadd.f32 %v2524, %v2705
      %v2830 = vadd.f32 %v2525, %v2710
      %v2831 = vadd.f32 %v2526, %v2713
      %v2832 = vadd.f32 %v2527, %v2718
      %v2833 = vadd.f32 %v2528, %v2721
      %v2834 = vadd.f32 %v2529, %v2726
      %v2835 = vadd.f32 %v2530, %v2729
      %v2836 = vadd.f32 %v2531, %v2734
      %v2837 = vadd.f32 %v2532, %v2737
      %v2838 = vadd.f32 %v2533, %v2742
      %v2839 = vadd.f32 %v2534, %v2745
      %v2840 = vadd.f32 %v2535, %v2750
      %v2841 = vadd.f32 %v2536, %v2753
      %v2842 = vadd.f32 %v2537, %v2758
      %v2843 = vadd.f32 %v2538, %v2761
      %v2844 = vadd.f32 %v2539, %v2766
      %v2845 = vadd.f32 %v2540, %v2769
      %v2846 = vadd.f32 %v2541, %v2774
      %v2847 = vadd.f32 %v2542, %v2777
      %v2848 = vadd.f32 %v2543, %v2782
      %v2849 = vadd.f32 %v2544, %v2785
      %v2850 = vadd.f32 %v2545, %v2790
      %v2851 = vadd.f32 %v2546, %v2793
      %v2852 = vadd.f32 %v2547, %v2798
      %v2853 = vadd.f32 %v2548, %v2801
      %v2854 = vadd.f32 %v2549, %v2806
      %v2855 = vadd.f32 %v2550, %v2809
      %v2856 = vadd.f32 %v2551, %v2814
      %v2857 = vadd.f32 %v2552, %v2817
      %v2858 = vadd.f32 %v2553, %v2822
      %v2859 = vadd.f32 %v2554, %v2825
      %v2860 = vld [vmem:[%s2249 + $0x2] sm:$0xff]
      %v2861 = vld [vmem:[%s2249 + $0xa] sm:$0xff]
      %v2862 = vld [vmem:[%s2249 + $0x1a] sm:$0xff]
      %v2863 = vld [vmem:[%s2249 + $0x22] sm:$0xff]
      %v2864 = vld [vmem:[%s2249 + $0x32] sm:$0xff]
      %v2865 = vld [vmem:[%s2249 + $0x3a] sm:$0xff]
      %v2866 = vld [vmem:[%s2249 + $0x4a] sm:$0xff]
      %v2867 = vld [vmem:[%s2249 + $0x52] sm:$0xff]
      %v2868 = vld [vmem:[%s2249 + $0x62] sm:$0xff]
      %v2869 = vld [vmem:[%s2249 + $0x6a] sm:$0xff]
      %v2870 = vld [vmem:[%s2249 + $0x7a] sm:$0xff]
      %v2871 = vld [vmem:[%s2249 + $0x82] sm:$0xff]
      %v2872 = vld [vmem:[%s2249 + $0x92] sm:$0xff]
      %v2873 = vld [vmem:[%s2249 + $0x9a] sm:$0xff]
      %v2874 = vld [vmem:[%s2249 + $0xaa] sm:$0xff]
      %v2875 = vld [vmem:[%s2249 + $0xb2] sm:$0xff]
      %v2876 = vld [vmem:[%s2249 + $0xc2] sm:$0xff]
      %v2877 = vld [vmem:[%s2249 + $0xca] sm:$0xff]
      %v2878 = vld [vmem:[%s2249 + $0xda] sm:$0xff]
      %v2879 = vld [vmem:[%s2249 + $0xe2] sm:$0xff]
      %v2880 = vld [vmem:[%s2249 + $0xf2] sm:$0xff]
      %v2881 = vld [vmem:[%s2249 + $0xfa] sm:$0xff]
      %v2882 = vld [vmem:[%s2249 + $0x10a] sm:$0xff]
      %v2883 = vld [vmem:[%s2249 + $0x112] sm:$0xff]
      %v2884 = vld [vmem:[%s2249 + $0x122] sm:$0xff]
      %v2885 = vld [vmem:[%s2249 + $0x12a] sm:$0xff]
      %v2886 = vld [vmem:[%s2249 + $0x13a] sm:$0xff]
      %v2887 = vld [vmem:[%s2249 + $0x142] sm:$0xff]
      %v2888 = vld [vmem:[%s2249 + $0x152] sm:$0xff]
      %v2889 = vld [vmem:[%s2249 + $0x15a] sm:$0xff]
      %v2890 = vld [vmem:[%s2249 + $0x16a] sm:$0xff]
      %v2891 = vld [vmem:[%s2249 + $0x172] sm:$0xff]
      %v2892 = vpack.c.bf16 %v2861, %v2860
      %v2893 = vpack.c.bf16 %v2863, %v2862
      %v2894 = vpack.c.bf16 %v2865, %v2864
      %v2895 = vpack.c.bf16 %v2867, %v2866
      %v2896 = vpack.c.bf16 %v2869, %v2868
      %v2897 = vpack.c.bf16 %v2871, %v2870
      %v2898 = vpack.c.bf16 %v2873, %v2872
      %v2899 = vpack.c.bf16 %v2875, %v2874
      %v2900 = vpack.c.bf16 %v2877, %v2876
      %v2901 = vpack.c.bf16 %v2879, %v2878
      %v2902 = vpack.c.bf16 %v2881, %v2880
      %v2903 = vpack.c.bf16 %v2883, %v2882
      %v2904 = vpack.c.bf16 %v2885, %v2884
      %v2905 = vpack.c.bf16 %v2887, %v2886
      %v2906 = vpack.c.bf16 %v2889, %v2888
      %v2907 = vpack.c.bf16 %v2891, %v2890
      %v2908 = vld [vmem:[%s3 + $0x200] sm:$0xf]
      %v2909 = vld [vmem:[%s3 + $0x204] sm:$0xf]
      %v2910 = vld [vmem:[%s3 + $0x208] sm:$0xf]
      %v2911 = vld [vmem:[%s3 + $0x20c] sm:$0xf]
      %v2912 = vld [vmem:[%s3 + $0x210] sm:$0xf]
      %v2913 = vld [vmem:[%s3 + $0x214] sm:$0xf]
      %v2914 = vld [vmem:[%s3 + $0x218] sm:$0xf]
      %v2915 = vld [vmem:[%s3 + $0x21c] sm:$0xf]
      %v2916 = vld [vmem:[%s3 + $0x220] sm:$0xf]
      %v2917 = vld [vmem:[%s3 + $0x224] sm:$0xf]
      %v2918 = vld [vmem:[%s3 + $0x228] sm:$0xf]
      %v2919 = vld [vmem:[%s3 + $0x22c] sm:$0xf]
      %v2920 = vld [vmem:[%s3 + $0x230] sm:$0xf]
      %v2921 = vld [vmem:[%s3 + $0x234] sm:$0xf]
      %v2922 = vld [vmem:[%s3 + $0x238] sm:$0xf]
      %v2923 = vld [vmem:[%s3 + $0x23c] sm:$0xf]
      %v2940 = vunpack.c.l.b16 %v2908
      %v2941 = vunpack.c.l.b16 %v2909
      %v2942 = vunpack.c.l.b16 %v2910
      %v2943 = vunpack.c.l.b16 %v2911
      %v2944 = vunpack.c.l.b16 %v2912
      %v2945 = vunpack.c.l.b16 %v2913
      %v2946 = vunpack.c.l.b16 %v2914
      %v2947 = vunpack.c.l.b16 %v2915
      %v2948 = vunpack.c.l.b16 %v2916
      %v2949 = vunpack.c.l.b16 %v2917
      %v2950 = vunpack.c.l.b16 %v2918
      %v2951 = vunpack.c.l.b16 %v2919
      %v2952 = vunpack.c.l.b16 %v2920
      %v2953 = vunpack.c.l.b16 %v2921
      %v2954 = vunpack.c.l.b16 %v2922
      %v2955 = vunpack.c.l.b16 %v2923
      %v2956 = vpack.c.b16 %v2941, %v2940
      %v2957 = vpack.c.b16 %v2943, %v2942
      %v2958 = vpack.c.b16 %v2945, %v2944
      %v2959 = vpack.c.b16 %v2947, %v2946
      %v2960 = vpack.c.b16 %v2949, %v2948
      %v2961 = vpack.c.b16 %v2951, %v2950
      %v2962 = vpack.c.b16 %v2953, %v2952
      %v2963 = vpack.c.b16 %v2955, %v2954
      %2972 = vmatprep.subr.bf16.mxu0 0
      %2973 = vmatpush1.bf16.msra.mxu0 %v2956
      %2974 = vmatprep.subr.bf16.mxu0 0
      %2975 = vmatpush1.bf16.msra.mxu0 %v2957
      %2976 = vmatprep.subr.bf16.mxu0 0
      %2977 = vmatpush1.bf16.msra.mxu0 %v2958
      %2978 = vmatprep.subr.bf16.mxu0 0
      %2979 = vmatpush1.bf16.msra.mxu0 %v2959
      %2980 = vmatprep.subr.bf16.mxu0 0
      %2981 = vmatpush1.bf16.msra.mxu0 %v2960
      %2982 = vmatprep.subr.bf16.mxu0 0
      %2983 = vmatpush1.bf16.msra.mxu0 %v2961
      %2984 = vmatprep.subr.bf16.mxu0 0
      %2985 = vmatpush1.bf16.msra.mxu0 %v2962
      %2986 = vmatprep.subr.bf16.mxu0 0
      %2987 = vmatpush1.bf16.msra.mxu0 %v2963
      %2988 = vmatprep.subr.bf16.mxu0 0
      %2989 = vmatpush1.bf16.msra.mxu0 0
      %2990 = vmatprep.subr.bf16.mxu0 0
      %2991 = vmatpush1.bf16.msra.mxu0 0
      %2992 = vmatprep.subr.bf16.mxu0 0
      %2993 = vmatpush1.bf16.msra.mxu0 0
      %2994 = vmatprep.subr.bf16.mxu0 0
      %2995 = vmatpush1.bf16.msra.mxu0 0
      %2996 = vmatprep.subr.bf16.mxu0 0
      %2997 = vmatpush1.bf16.msra.mxu0 0
      %2998 = vmatprep.subr.bf16.mxu0 0
      %2999 = vmatpush1.bf16.msra.mxu0 0
      %3000 = vmatprep.subr.bf16.mxu0 0
      %3001 = vmatpush1.bf16.msra.mxu0 0
      %3002 = vmatprep.subr.bf16.mxu0 0
      %3003 = vmatpush1.bf16.msra.mxu0 0
      %3004 = vmatprep.mubr.bf16.mxu0 0
      %3005 = vmatmul.mubr.bf16.gmra.mrb[0].mxu0 %v2892
      %v3006 = vpop.f32.mrb[0].mxu0
      %v3007 = vadd.f32 0.0, %v3006
      %v3008 = vpop.f32.mrb[0].mxu0
      %v3009 = vpop.f32.mrb[0].mxu0
      %v3010 = vadd.f32 0.0, %v3009
      %v3011 = vpop.f32.mrb[0].mxu0
      %3012 = vmatprep.mubr.bf16.mxu0 0
      %3013 = vmatmul.mubr.bf16.gmra.mrb[0].mxu0 %v2893
      %v3014 = vpop.f32.mrb[0].mxu0
      %v3015 = vadd.f32 0.0, %v3014
      %v3016 = vpop.f32.mrb[0].mxu0
      %v3017 = vpop.f32.mrb[0].mxu0
      %v3018 = vadd.f32 0.0, %v3017
      %v3019 = vpop.f32.mrb[0].mxu0
      %3020 = vmatprep.mubr.bf16.mxu0 0
      %3021 = vmatmul.mubr.bf16.gmra.mrb[0].mxu0 %v2894
      %v3022 = vpop.f32.mrb[0].mxu0
      %v3023 = vadd.f32 0.0, %v3022
      %v3024 = vpop.f32.mrb[0].mxu0
      %v3025 = vpop.f32.mrb[0].mxu0
      %v3026 = vadd.f32 0.0, %v3025
      %v3027 = vpop.f32.mrb[0].mxu0
      %3028 = vmatprep.mubr.bf16.mxu0 0
      %3029 = vmatmul.mubr.bf16.gmra.mrb[0].mxu0 %v2895
      %v3030 = vpop.f32.mrb[0].mxu0
      %v3031 = vadd.f32 0.0, %v3030
      %v3032 = vpop.f32.mrb[0].mxu0
      %v3033 = vpop.f32.mrb[0].mxu0
      %v3034 = vadd.f32 0.0, %v3033
      %v3035 = vpop.f32.mrb[0].mxu0
      %3036 = vmatprep.mubr.bf16.mxu0 0
      %3037 = vmatmul.mubr.bf16.gmra.mrb[0].mxu0 %v2896
      %v3038 = vpop.f32.mrb[0].mxu0
      %v3039 = vadd.f32 0.0, %v3038
      %v3040 = vpop.f32.mrb[0].mxu0
      %v3041 = vpop.f32.mrb[0].mxu0
      %v3042 = vadd.f32 0.0, %v3041
      %v3043 = vpop.f32.mrb[0].mxu0
      %3044 = vmatprep.mubr.bf16.mxu0 0
      %3045 = vmatmul.mubr.bf16.gmra.mrb[0].mxu0 %v2897
      %v3046 = vpop.f32.mrb[0].mxu0
      %v3047 = vadd.f32 0.0, %v3046
      %v3048 = vpop.f32.mrb[0].mxu0
      %v3049 = vpop.f32.mrb[0].mxu0
      %v3050 = vadd.f32 0.0, %v3049
      %v3051 = vpop.f32.mrb[0].mxu0
      %3052 = vmatprep.mubr.bf16.mxu0 0
      %3053 = vmatmul.mubr.bf16.gmra.mrb[0].mxu0 %v2898
      %v3054 = vpop.f32.mrb[0].mxu0
      %v3055 = vadd.f32 0.0, %v3054
      %v3056 = vpop.f32.mrb[0].mxu0
      %v3057 = vpop.f32.mrb[0].mxu0
      %v3058 = vadd.f32 0.0, %v3057
      %v3059 = vpop.f32.mrb[0].mxu0
      %3060 = vmatprep.mubr.bf16.mxu0 0
      %3061 = vmatmul.mubr.bf16.gmra.mrb[0].mxu0 %v2899
      %v3062 = vpop.f32.mrb[0].mxu0
      %v3063 = vadd.f32 0.0, %v3062
      %v3064 = vpop.f32.mrb[0].mxu0
      %v3065 = vpop.f32.mrb[0].mxu0
      %v3066 = vadd.f32 0.0, %v3065
      %v3067 = vpop.f32.mrb[0].mxu0
      %3068 = vmatprep.mubr.bf16.mxu0 0
      %3069 = vmatmul.mubr.bf16.gmra.mrb[0].mxu0 %v2900
      %v3070 = vpop.f32.mrb[0].mxu0
      %v3071 = vadd.f32 0.0, %v3070
      %v3072 = vpop.f32.mrb[0].mxu0
      %v3073 = vpop.f32.mrb[0].mxu0
      %v3074 = vadd.f32 0.0, %v3073
      %v3075 = vpop.f32.mrb[0].mxu0
      %3076 = vmatprep.mubr.bf16.mxu0 0
      %3077 = vmatmul.mubr.bf16.gmra.mrb[0].mxu0 %v2901
      %v3078 = vpop.f32.mrb[0].mxu0
      %v3079 = vadd.f32 0.0, %v3078
      %v3080 = vpop.f32.mrb[0].mxu0
      %v3081 = vpop.f32.mrb[0].mxu0
      %v3082 = vadd.f32 0.0, %v3081
      %v3083 = vpop.f32.mrb[0].mxu0
      %3084 = vmatprep.mubr.bf16.mxu0 0
      %3085 = vmatmul.mubr.bf16.gmra.mrb[0].mxu0 %v2902
      %v3086 = vpop.f32.mrb[0].mxu0
      %v3087 = vadd.f32 0.0, %v3086
      %v3088 = vpop.f32.mrb[0].mxu0
      %v3089 = vpop.f32.mrb[0].mxu0
      %v3090 = vadd.f32 0.0, %v3089
      %v3091 = vpop.f32.mrb[0].mxu0
      %3092 = vmatprep.mubr.bf16.mxu0 0
      %3093 = vmatmul.mubr.bf16.gmra.mrb[0].mxu0 %v2903
      %v3094 = vpop.f32.mrb[0].mxu0
      %v3095 = vadd.f32 0.0, %v3094
      %v3096 = vpop.f32.mrb[0].mxu0
      %v3097 = vpop.f32.mrb[0].mxu0
      %v3098 = vadd.f32 0.0, %v3097
      %v3099 = vpop.f32.mrb[0].mxu0
      %3100 = vmatprep.mubr.bf16.mxu0 0
      %3101 = vmatmul.mubr.bf16.gmra.mrb[0].mxu0 %v2904
      %v3102 = vpop.f32.mrb[0].mxu0
      %v3103 = vadd.f32 0.0, %v3102
      %v3104 = vpop.f32.mrb[0].mxu0
      %v3105 = vpop.f32.mrb[0].mxu0
      %v3106 = vadd.f32 0.0, %v3105
      %v3107 = vpop.f32.mrb[0].mxu0
      %3108 = vmatprep.mubr.bf16.mxu0 0
      %3109 = vmatmul.mubr.bf16.gmra.mrb[0].mxu0 %v2905
      %v3110 = vpop.f32.mrb[0].mxu0
      %v3111 = vadd.f32 0.0, %v3110
      %v3112 = vpop.f32.mrb[0].mxu0
      %v3113 = vpop.f32.mrb[0].mxu0
      %v3114 = vadd.f32 0.0, %v3113
      %v3115 = vpop.f32.mrb[0].mxu0
      %3116 = vmatprep.mubr.bf16.mxu0 0
      %3117 = vmatmul.mubr.bf16.gmra.mrb[0].mxu0 %v2906
      %v3118 = vpop.f32.mrb[0].mxu0
      %v3119 = vadd.f32 0.0, %v3118
      %v3120 = vpop.f32.mrb[0].mxu0
      %v3121 = vpop.f32.mrb[0].mxu0
      %v3122 = vadd.f32 0.0, %v3121
      %v3123 = vpop.f32.mrb[0].mxu0
      %3124 = vmatprep.mubr.bf16.mxu0 0
      %3125 = vmatmul.mubr.bf16.gmra.mrb[0].mxu0 %v2907
      %v3126 = vpop.f32.mrb[0].mxu0
      %v3127 = vadd.f32 0.0, %v3126
      %v3128 = vpop.f32.mrb[0].mxu0
      %v3129 = vpop.f32.mrb[0].mxu0
      %v3130 = vadd.f32 0.0, %v3129
      %v3131 = vpop.f32.mrb[0].mxu0
      %3132 = vdwg.mxu0
      %v3133 = vadd.f32 %v2828, %v3007
      %v3134 = vadd.f32 %v2829, %v3010
      %v3135 = vadd.f32 %v2830, %v3015
      %v3136 = vadd.f32 %v2831, %v3018
      %v3137 = vadd.f32 %v2832, %v3023
      %v3138 = vadd.f32 %v2833, %v3026
      %v3139 = vadd.f32 %v2834, %v3031
      %v3140 = vadd.f32 %v2835, %v3034
      %v3141 = vadd.f32 %v2836, %v3039
      %v3142 = vadd.f32 %v2837, %v3042
      %v3143 = vadd.f32 %v2838, %v3047
      %v3144 = vadd.f32 %v2839, %v3050
      %v3145 = vadd.f32 %v2840, %v3055
      %v3146 = vadd.f32 %v2841, %v3058
      %v3147 = vadd.f32 %v2842, %v3063
      %v3148 = vadd.f32 %v2843, %v3066
      %v3149 = vadd.f32 %v2844, %v3071
      %v3150 = vadd.f32 %v2845, %v3074
      %v3151 = vadd.f32 %v2846, %v3079
      %v3152 = vadd.f32 %v2847, %v3082
      %v3153 = vadd.f32 %v2848, %v3087
      %v3154 = vadd.f32 %v2849, %v3090
      %v3155 = vadd.f32 %v2850, %v3095
      %v3156 = vadd.f32 %v2851, %v3098
      %v3157 = vadd.f32 %v2852, %v3103
      %v3158 = vadd.f32 %v2853, %v3106
      %v3159 = vadd.f32 %v2854, %v3111
      %v3160 = vadd.f32 %v2855, %v3114
      %v3161 = vadd.f32 %v2856, %v3119
      %v3162 = vadd.f32 %v2857, %v3122
      %v3163 = vadd.f32 %v2858, %v3127
      %v3164 = vadd.f32 %v2859, %v3130
      %3165 = vst [vmem:[%s259] sm:$0xff] %v3133
      %3166 = vst [vmem:[%s259 + $0x8] sm:$0xff] %v3134
      %3167 = vst [vmem:[%s259 + $0x10] sm:$0xff] %v3135
      %3168 = vst [vmem:[%s259 + $0x18] sm:$0xff] %v3136
      %3169 = vst [vmem:[%s259 + $0x20] sm:$0xff] %v3137
      %3170 = vst [vmem:[%s259 + $0x28] sm:$0xff] %v3138
      %3171 = vst [vmem:[%s259 + $0x30] sm:$0xff] %v3139
      %3172 = vst [vmem:[%s259 + $0x38] sm:$0xff] %v3140
      %3173 = vst [vmem:[%s259 + $0x40] sm:$0xff] %v3141
      %3174 = vst [vmem:[%s259 + $0x48] sm:$0xff] %v3142
      %3175 = vst [vmem:[%s259 + $0x50] sm:$0xff] %v3143
      %3176 = vst [vmem:[%s259 + $0x58] sm:$0xff] %v3144
      %3177 = vst [vmem:[%s259 + $0x60] sm:$0xff] %v3145
      %3178 = vst [vmem:[%s259 + $0x68] sm:$0xff] %v3146
      %3179 = vst [vmem:[%s259 + $0x70] sm:$0xff] %v3147
      %3180 = vst [vmem:[%s259 + $0x78] sm:$0xff] %v3148
      %3181 = vst [vmem:[%s259 + $0x80] sm:$0xff] %v3149
      %3182 = vst [vmem:[%s259 + $0x88] sm:$0xff] %v3150
      %3183 = vst [vmem:[%s259 + $0x90] sm:$0xff] %v3151
      %3184 = vst [vmem:[%s259 + $0x98] sm:$0xff] %v3152
      %3185 = vst [vmem:[%s259 + $0xa0] sm:$0xff] %v3153
      %3186 = vst [vmem:[%s259 + $0xa8] sm:$0xff] %v3154
      %3187 = vst [vmem:[%s259 + $0xb0] sm:$0xff] %v3155
      %3188 = vst [vmem:[%s259 + $0xb8] sm:$0xff] %v3156
      %3189 = vst [vmem:[%s259 + $0xc0] sm:$0xff] %v3157
      %3190 = vst [vmem:[%s259 + $0xc8] sm:$0xff] %v3158
      %3191 = vst [vmem:[%s259 + $0xd0] sm:$0xff] %v3159
      %3192 = vst [vmem:[%s259 + $0xd8] sm:$0xff] %v3160
      %3193 = vst [vmem:[%s259 + $0xe0] sm:$0xff] %v3161
      %3194 = vst [vmem:[%s259 + $0xe8] sm:$0xff] %v3162
      %3195 = vst [vmem:[%s259 + $0xf0] sm:$0xff] %v3163
      %3196 = vst [vmem:[%s259 + $0xf8] sm:$0xff] %v3164
      %v3197 = vadd.f32 %v3133, %v3134
      %v3198 = vadd.f32 %v3197, %v3135
      %v3199 = vadd.f32 %v3198, %v3136
      %v3200 = vadd.f32 %v3199, %v3137
      %v3201 = vadd.f32 %v3200, %v3138
      %v3202 = vadd.f32 %v3201, %v3139
      %v3203 = vadd.f32 %v3202, %v3140
      %v3204 = vadd.f32 %v3203, %v3141
      %v3205 = vadd.f32 %v3204, %v3142
      %v3206 = vadd.f32 %v3205, %v3143
      %v3207 = vadd.f32 %v3206, %v3144
      %v3208 = vadd.f32 %v3207, %v3145
      %v3209 = vadd.f32 %v3208, %v3146
      %v3210 = vadd.f32 %v3209, %v3147
      %v3211 = vadd.f32 %v3210, %v3148
      %v3212 = vadd.f32 %v3211, %v3149
      %v3213 = vadd.f32 %v3212, %v3150
      %v3214 = vadd.f32 %v3213, %v3151
      %v3215 = vadd.f32 %v3214, %v3152
      %v3216 = vadd.f32 %v3215, %v3153
      %v3217 = vadd.f32 %v3216, %v3154
      %v3218 = vadd.f32 %v3217, %v3155
      %v3219 = vadd.f32 %v3218, %v3156
      %v3220 = vadd.f32 %v3219, %v3157
      %v3221 = vadd.f32 %v3220, %v3158
      %v3222 = vadd.f32 %v3221, %v3159
      %v3223 = vadd.f32 %v3222, %v3160
      %v3224 = vadd.f32 %v3223, %v3161
      %v3225 = vadd.f32 %v3224, %v3162
      %v3226 = vadd.f32 %v3225, %v3163
      %v3227 = vadd.f32 %v3226, %v3164
      %v3228 = vrot.slane %v3227, 4
      %v3229 = vadd.f32 %v3227, %v3228
      %v3230 = vrot.slane %v3229, 2
      %v3231 = vadd.f32 %v3229, %v3230
      %v3232 = vrot.slane %v3231, 1
      %v3233 = vadd.f32 %v3231, %v3232
      %3234 = vst [vmem:[%s263] sm:$0x1] %v3233
      %v3235 = vmul.f32 %v3133, %v3133
      %v3236 = vmul.f32 %v3134, %v3134
      %v3237 = vmul.f32 %v3135, %v3135
      %v3238 = vmul.f32 %v3136, %v3136
      %v3239 = vmul.f32 %v3137, %v3137
      %v3240 = vmul.f32 %v3138, %v3138
      %v3241 = vmul.f32 %v3139, %v3139
      %v3242 = vmul.f32 %v3140, %v3140
      %v3243 = vmul.f32 %v3141, %v3141
      %v3244 = vmul.f32 %v3142, %v3142
      %v3245 = vmul.f32 %v3143, %v3143
      %v3246 = vmul.f32 %v3144, %v3144
      %v3247 = vmul.f32 %v3145, %v3145
      %v3248 = vmul.f32 %v3146, %v3146
      %v3249 = vmul.f32 %v3147, %v3147
      %v3250 = vmul.f32 %v3148, %v3148
      %v3251 = vmul.f32 %v3149, %v3149
      %v3252 = vmul.f32 %v3150, %v3150
      %v3253 = vmul.f32 %v3151, %v3151
      %v3254 = vmul.f32 %v3152, %v3152
      %v3255 = vmul.f32 %v3153, %v3153
      %v3256 = vmul.f32 %v3154, %v3154
      %v3257 = vmul.f32 %v3155, %v3155
      %v3258 = vmul.f32 %v3156, %v3156
      %v3259 = vmul.f32 %v3157, %v3157
      %v3260 = vmul.f32 %v3158, %v3158
      %v3261 = vmul.f32 %v3159, %v3159
      %v3262 = vmul.f32 %v3160, %v3160
      %v3263 = vmul.f32 %v3161, %v3161
      %v3264 = vmul.f32 %v3162, %v3162
      %v3265 = vmul.f32 %v3163, %v3163
      %v3266 = vmul.f32 %v3164, %v3164
      %v3267 = vadd.f32 %v3235, %v3236
      %v3268 = vadd.f32 %v3267, %v3237
      %v3269 = vadd.f32 %v3268, %v3238
      %v3270 = vadd.f32 %v3269, %v3239
      %v3271 = vadd.f32 %v3270, %v3240
      %v3272 = vadd.f32 %v3271, %v3241
      %v3273 = vadd.f32 %v3272, %v3242
      %v3274 = vadd.f32 %v3273, %v3243
      %v3275 = vadd.f32 %v3274, %v3244
      %v3276 = vadd.f32 %v3275, %v3245
      %v3277 = vadd.f32 %v3276, %v3246
      %v3278 = vadd.f32 %v3277, %v3247
      %v3279 = vadd.f32 %v3278, %v3248
      %v3280 = vadd.f32 %v3279, %v3249
      %v3281 = vadd.f32 %v3280, %v3250
      %v3282 = vadd.f32 %v3281, %v3251
      %v3283 = vadd.f32 %v3282, %v3252
      %v3284 = vadd.f32 %v3283, %v3253
      %v3285 = vadd.f32 %v3284, %v3254
      %v3286 = vadd.f32 %v3285, %v3255
      %v3287 = vadd.f32 %v3286, %v3256
      %v3288 = vadd.f32 %v3287, %v3257
      %v3289 = vadd.f32 %v3288, %v3258
      %v3290 = vadd.f32 %v3289, %v3259
      %v3291 = vadd.f32 %v3290, %v3260
      %v3292 = vadd.f32 %v3291, %v3261
      %v3293 = vadd.f32 %v3292, %v3262
      %v3294 = vadd.f32 %v3293, %v3263
      %v3295 = vadd.f32 %v3294, %v3264
      %v3296 = vadd.f32 %v3295, %v3265
      %v3297 = vadd.f32 %v3296, %v3266
      %v3298 = vrot.slane %v3297, 4
      %v3299 = vadd.f32 %v3297, %v3298
      %v3300 = vrot.slane %v3299, 2
      %v3301 = vadd.f32 %v3299, %v3300
      %v3302 = vrot.slane %v3301, 1
      %v3303 = vadd.f32 %v3301, %v3302
      %3304 = vst [vmem:[%s263 + $0x1] sm:$0x1] %v3303
      %p3305 = scmp.lt.s32.totalorder %s17, 1
      %s3306 = scalar_select %p3305, %s17, 1
      %s3307 = smul.addr %s3306, 32
      %s3308 = smul.addr %s3307, 8
      %s3309 = scalar_lea.vmem %s4, %s3308
      %p3310 = scmp.lt.s32.totalorder %s17, 1
      %s3311 = scalar_select %p3310, %s17, 1
      %s3312 = smul.addr %s3311, 2
      %s3313 = scalar_lea.vmem %s5, %s3312
      // Predicated region
      $region37: #{vgg_block_forward.3} parent=35 // pred_check
        %p3314 = pneg %p134
      $region38: #{vgg_block_forward.3} parent=35 // pred_check_branch
        %3316 = sbr.rel (%p3314) target = $region40
      $region39: #{vgg_block_forward.3} parent=35 // pred_region
        _
      $region40: #{vgg_block_forward.3} parent=35 // pred_fallthru
        _
      // Predicated region
      $region41: #{vgg_block_forward.3} parent=35 // pred_check
        %p3317 = pneg %p160
      $region42: #{vgg_block_forward.3} parent=35 // pred_check_branch
        %3319 = sbr.rel (%p3317) target = $region44
      $region43: #{vgg_block_forward.3} parent=35 // pred_region
        _
      $region44: #{vgg_block_forward.3} parent=35 // pred_fallthru
        _
    $region36: #{vgg_block_forward.3} parent=5 // pred_fallthru
      _
    %p3320 = scmp.le.s32.totalorder 2, %s12
    // Predicated region
    $region45: #{vgg_block_forward.3} parent=5 // pred_check
      %p3321 = pneg %p3320
    $region46: #{vgg_block_forward.3} parent=5 // pred_check_branch
      %3323 = sbr.rel (%p3321) target = $region48
    $region47: #{vgg_block_forward.3} parent=5 // pred_region
      %s3324 = ssub.s32 %s12, 2
      // Predicated region
      $region49: #{vgg_block_forward.3} parent=47 // pred_check
        %p3325 = pneg %p140
      $region50: #{vgg_block_forward.3} parent=47 // pred_check_branch
        %3327 = sbr.rel (%p3325) target = $region52
      $region51: #{vgg_block_forward.3} parent=47 // pred_region
        %p3328 = scmp.lt.s32.totalorder %s18, 1
        %s3329 = scalar_select %p3328, %s18, 1
        %s3330 = smul.addr %s3329, 32
        %s3331 = smul.addr %s3330, 8
        %s3332 = scalar_lea.vmem %s4, %s3331
      $region52: #{vgg_block_forward.3} parent=47 // pred_fallthru
        _
      // Predicated region
      $region53: #{vgg_block_forward.3} parent=47 // pred_check
        %p3333 = pneg %p166
      $region54: #{vgg_block_forward.3} parent=47 // pred_check_branch
        %3335 = sbr.rel (%p3333) target = $region56
      $region55: #{vgg_block_forward.3} parent=47 // pred_region
        %p3336 = scmp.lt.s32.totalorder %s18, 1
        %s3337 = scalar_select %p3336, %s18, 1
        %s3338 = smul.addr %s3337, 2
        %s3339 = scalar_lea.vmem %s5, %s3338
      $region56: #{vgg_block_forward.3} parent=47 // pred_fallthru
        _
    $region48: #{vgg_block_forward.3} parent=5 // pred_fallthru
      _
  $region6: #{vgg_block_forward.3} parent=0 // loop_footer
    %s16 = sadd.s32 1, %s12
  $region7: #{vgg_block_forward.3} parent=0 // loop_footer_branch
    %11 = sbr.rel target = $region3
  $region8: #{vgg_block_forward.3} parent=0 // loop_exit
    _

</llo_original>
